<compile_context>
chip_gen: v6e
topology: v6e:2x2x1
jax: 0.10.0
libtpu: 0.0.40
codegen_flags: <defaults>
</compile_context>

<pallas_src>
import functools
import math

import jax
import jax.numpy as jnp
from jax.experimental import pallas as pl
from jax.experimental.pallas import tpu as pltpu


_NEG = -1e30  # large finite negative; exp() underflows to 0, no NaNs


def _layernorm(x, g, b, eps=1e-5):
    """x: (R, C) f32, g/b: (1, C) f32. Stats kept in f32."""
    mu = jnp.mean(x, axis=-1, keepdims=True)
    var = jnp.mean(jnp.square(x - mu), axis=-1, keepdims=True)
    return (x - mu) * jax.lax.rsqrt(var + eps) * g + b


def _fused_classifier_kernel(
    x_ref,                    # (1, T, C)   f32  tok+pos embeddings, one sequence
    ln1g_ref, ln1b_ref,       # (L, 1, C)   f32
    wqkv_ref, bqkv_ref,       # (L, C, 3C)  bf16 / (L, 1, 3C) f32
    wproj_ref, bproj_ref,     # (L, C, C)   bf16 / (L, 1, C)  f32
    ln2g_ref, ln2b_ref,       # (L, 1, C)   f32
    wfc_ref, bfc_ref,         # (L, C, 4C)  bf16 / (L, 1, 4C) f32
    wout_ref, bout_ref,       # (L, 4C, C)  bf16 / (L, 1, C)  f32
    lnfg_ref, lnfb_ref,       # (1, C)      f32
    w1_ref, b1_ref,           # (C, Hf)     bf16 / (1, Hf) f32
    w2_ref, b2_ref,           # (Hf, OP)    bf16 / (1, OP) f32 (padded bias = -1e30)
    o_ref,                    # (1, 1, OP)  f32  log-probs (padded lanes ~ -1e30)
    *, n_layer, n_head,
):
    x = x_ref[0].astype(jnp.float32)                       # (T, C)
    T, C = x.shape
    Dh = C // n_head
    scale = 1.0 / math.sqrt(Dh)

    # causal mask, shared across layers / heads
    row = jax.lax.broadcasted_iota(jnp.int32, (T, T), 0)
    col = jax.lax.broadcasted_iota(jnp.int32, (T, T), 1)
    causal = col <= row

    for l in range(n_layer):
        # ---- attention sub-block (pre-LN), fused QKV projection ----
        h = _layernorm(x, ln1g_ref[l], ln1b_ref[l])
        qkv = jnp.dot(h.astype(jnp.bfloat16), wqkv_ref[l],
                      preferred_element_type=jnp.float32) + bqkv_ref[l]    # (T, 3C)

        attn_out = jnp.zeros((T, C), jnp.float32)
        for hh in range(n_head):
            q = qkv[:, 0 * C + hh * Dh: 0 * C + (hh + 1) * Dh].astype(jnp.bfloat16)
            k = qkv[:, 1 * C + hh * Dh: 1 * C + (hh + 1) * Dh].astype(jnp.bfloat16)
            v = qkv[:, 2 * C + hh * Dh: 2 * C + (hh + 1) * Dh].astype(jnp.bfloat16)
            # scores: contract head dim of q and k (no explicit transpose)
            s = jax.lax.dot_general(q, k, (((1,), (1,)), ((), ())),
                                    preferred_element_type=jnp.float32) * scale
            s = jnp.where(causal, s, _NEG)
            m = jnp.max(s, axis=-1, keepdims=True)
            p = jnp.exp(s - m)
            denom = jnp.sum(p, axis=-1, keepdims=True)
            p = p * pl.reciprocal(denom, approx=True)        # EUP reciprocal
            o_h = jnp.dot(p.astype(jnp.bfloat16), v,
                          preferred_element_type=jnp.float32)              # (T, Dh)
            # fold the per-head output directly through its slice of Wproj
            # (sublane-aligned row slice; avoids lane-wise concat of heads)
            w_h = wproj_ref[l, hh * Dh:(hh + 1) * Dh, :]                    # (Dh, C)
            attn_out = attn_out + jnp.dot(o_h.astype(jnp.bfloat16), w_h,
                                          preferred_element_type=jnp.float32)
        x = x + attn_out + bproj_ref[l]

        # ---- MLP sub-block (pre-LN) ----
        h2 = _layernorm(x, ln2g_ref[l], ln2b_ref[l])
        mlp = jnp.dot(h2.astype(jnp.bfloat16), wfc_ref[l],
                      preferred_element_type=jnp.float32) + bfc_ref[l]
        mlp = jax.nn.gelu(mlp, approximate=True)             # f32 elementwise (EUP tanh)
        x = x + jnp.dot(mlp.astype(jnp.bfloat16), wout_ref[l],
                        preferred_element_type=jnp.float32) + bout_ref[l]

    # final LN on the last token only
    xl = _layernorm(x[T - 1:T, :], lnfg_ref[...], lnfb_ref[...])           # (1, C)

    # classifier head: Linear -> ReLU -> Linear -> LogSoftmax (lane-padded logits)
    h1 = jnp.dot(xl.astype(jnp.bfloat16), w1_ref[...],
                 preferred_element_type=jnp.float32) + b1_ref[...]
    h1 = jnp.maximum(h1, 0.0)
    z = jnp.dot(h1.astype(jnp.bfloat16), w2_ref[...],
                preferred_element_type=jnp.float32) + b2_ref[...]          # (1, OP)
    # padded lanes already hold ~-1e30 (w2 cols zero, b2 cols = -1e30)
    zmax = jnp.max(z, axis=-1, keepdims=True)
    zs = z - zmax
    lse = jnp.log(jnp.sum(jnp.exp(zs), axis=-1, keepdims=True))
    o_ref[0] = (zs - lse).astype(o_ref.dtype)


# ----------------------------------------------------------------------------
# Wrapper
# ----------------------------------------------------------------------------
def feed_forward_classifier(params, tokens, *, n_head, n_out):
    B, T = tokens.shape
    C = params["tok_emb"].shape[1]
    L = params["wqkv"].shape[0]
    Hf = params["w1"].shape[1]
    OP = 128 * pl.cdiv(n_out, 128)       # lane-dense padded logits width

    # embedding lookup + positional add: plain-JAX glue (integer gather)
    x0 = (params["tok_emb"][tokens] + params["pos_emb"][:T][None, :, :]
          ).astype(jnp.float32)                                     # (B, T, C)

    # pad the classifier output projection so the kernel store is 128-lane dense;
    # padded bias lanes = -1e30 so no in-kernel masking is needed.
    w2p = jnp.zeros((Hf, OP), jnp.bfloat16).at[:, :n_out].set(params["w2"])
    b2p = jnp.full((1, OP), _NEG, jnp.float32).at[:, :n_out].set(params["b2"])

    weights = (params["ln1_g"], params["ln1_b"], params["wqkv"], params["bqkv"],
               params["wproj"], params["bproj"], params["ln2_g"], params["ln2_b"],
               params["wfc"], params["bfc"], params["wout"], params["bout"],
               params["lnf_g"], params["lnf_b"], params["w1"], params["b1"],
               w2p, b2p)

    def full_spec(a):
        nd = a.ndim
        return pl.BlockSpec(a.shape, lambda b, _nd=nd: (0,) * _nd)  # VMEM-resident

    kernel = functools.partial(_fused_classifier_kernel,
                               n_layer=int(L), n_head=n_head)

    out = pl.pallas_call(
        kernel,
        out_shape=jax.ShapeDtypeStruct((B, 1, OP), jnp.float32),
        grid=(B,),
        in_specs=[pl.BlockSpec((1, T, C), lambda b: (b, 0, 0))]
                 + [full_spec(w) for w in weights],
        out_specs=pl.BlockSpec((1, 1, OP), lambda b: (b, 0, 0)),
        compiler_params=pltpu.CompilerParams(
            dimension_semantics=("parallel",)),   # shards batch across TCs on v7x
    )(x0, *weights)

    return out[:, 0, :n_out]                                       # (B, n_out)


# ----------------------------------------------------------------------------
# Parameter init (deterministic, in-script). MXU weights in bf16, LN/bias in f32.
# ----------------------------------------------------------------------------
def init_params(key, vocab_size, n_embd, block_size, n_layer, n_head,
                ff_input, ff_n_hidden, ff_n_output):
    C = n_embd
    keys = jax.random.split(key, 4 + 4 * n_layer)

    def nrm(k, shape, dtype):
        return (0.02 * jax.random.normal(k, shape, dtype=jnp.float32)).astype(dtype)

    wqkv, wproj, wfc, wout = [], [], [], []
    for l in range(n_layer):
        k = keys[4 + 4 * l: 4 + 4 * (l + 1)]
        wqkv.append(nrm(k[0], (C, 3 * C), jnp.bfloat16))
        wproj.append(nrm(k[1], (C, C), jnp.bfloat16))
        wfc.append(nrm(k[2], (C, 4 * C), jnp.bfloat16))
        wout.append(nrm(k[3], (4 * C, C), jnp.bfloat16))

    return {
        "tok_emb": nrm(keys[0], (vocab_size, C), jnp.float32),
        "pos_emb": nrm(keys[1], (block_size, C), jnp.float32),
        "ln1_g": jnp.ones((n_layer, 1, C), jnp.float32),
        "ln1_b": jnp.zeros((n_layer, 1, C), jnp.float32),
        "wqkv": jnp.stack(wqkv),
        "bqkv": jnp.zeros((n_layer, 1, 3 * C), jnp.float32),
        "wproj": jnp.stack(wproj),
        "bproj": jnp.zeros((n_layer, 1, C), jnp.float32),
        "ln2_g": jnp.ones((n_layer, 1, C), jnp.float32),
        "ln2_b": jnp.zeros((n_layer, 1, C), jnp.float32),
        "wfc": jnp.stack(wfc),
        "bfc": jnp.zeros((n_layer, 1, 4 * C), jnp.float32),
        "wout": jnp.stack(wout),
        "bout": jnp.zeros((n_layer, 1, C), jnp.float32),
        "lnf_g": jnp.ones((1, C), jnp.float32),
        "lnf_b": jnp.zeros((1, C), jnp.float32),
        "w1": nrm(keys[2], (ff_input, ff_n_hidden), jnp.bfloat16),
        "b1": jnp.zeros((1, ff_n_hidden), jnp.float32),
        "w2": nrm(keys[3], (ff_n_hidden, ff_n_output), jnp.bfloat16),
        "b2": jnp.zeros((1, ff_n_output), jnp.float32),
    }


# ----------------------------------------------------------------------------
if __name__ == "__main__":
    vocab_size = 32
    n_embd = 32
    block_size = 8
    n_layer = 2
    n_head = 4
    ff_input = n_embd          # encoder returns last-token hidden of size n_embd
    ff_n_hidden = 64
    ff_n_output = 10
    B = 2

    key = jax.random.PRNGKey(0)
    pkey, dkey = jax.random.split(key)
    params = init_params(pkey, vocab_size, n_embd, block_size, n_layer, n_head,
                         ff_input, ff_n_hidden, ff_n_output)
    tokens = jax.random.randint(dkey, (B, block_size), 0, vocab_size, dtype=jnp.int32)

    fwd = jax.jit(functools.partial(feed_forward_classifier,
                                    n_head=n_head, n_out=ff_n_output))
    out = fwd(params, tokens)
    jax.block_until_ready(out)

    assert out.shape == (B, ff_n_output)
    # rows of exp(log_softmax) must sum to 1
    assert bool(jnp.allclose(jnp.exp(out).sum(axis=1), 1.0, atol=1e-3))
    print("KERNEL_OK")
</pallas_src>

<mosaic_0001>
module attributes {stable_mosaic.version = 11 : i64} {
  func.func @_fused_classifier_kernel(%arg0: i32, %arg1: memref<1x8x32xf32, #tpu.memory_space<vmem>>, %arg2: memref<2x1x32xf32, #tpu.memory_space<vmem>>, %arg3: memref<2x1x32xf32, #tpu.memory_space<vmem>>, %arg4: memref<2x32x96xbf16, #tpu.memory_space<vmem>>, %arg5: memref<2x1x96xf32, #tpu.memory_space<vmem>>, %arg6: memref<2x32x32xbf16, #tpu.memory_space<vmem>>, %arg7: memref<2x1x32xf32, #tpu.memory_space<vmem>>, %arg8: memref<2x1x32xf32, #tpu.memory_space<vmem>>, %arg9: memref<2x1x32xf32, #tpu.memory_space<vmem>>, %arg10: memref<2x32x128xbf16, #tpu.memory_space<vmem>>, %arg11: memref<2x1x128xf32, #tpu.memory_space<vmem>>, %arg12: memref<2x128x32xbf16, #tpu.memory_space<vmem>>, %arg13: memref<2x1x32xf32, #tpu.memory_space<vmem>>, %arg14: memref<1x32xf32, #tpu.memory_space<vmem>>, %arg15: memref<1x32xf32, #tpu.memory_space<vmem>>, %arg16: memref<32x64xbf16, #tpu.memory_space<vmem>>, %arg17: memref<1x64xf32, #tpu.memory_space<vmem>>, %arg18: memref<64x128xbf16, #tpu.memory_space<vmem>>, %arg19: memref<1x128xf32, #tpu.memory_space<vmem>>, %arg20: memref<1x1x128xf32, #tpu.memory_space<vmem>>) attributes {dimension_semantics = [#tpu.dimension_semantics<parallel>], iteration_bounds = array<i64: 2>, scalar_prefetch = 0 : i64, scratch_operands = 0 : i64, tpu.core_type = #tpu.core_type<tc>, window_params = [{transform_indices = @transform_0, window_bounds = array<i64: 1, 8, 32>}, {pipeline_mode = #tpu.pipeline_mode<synchronous>, transform_indices = @transform_1, window_bounds = array<i64: 2, 1, 32>}, {pipeline_mode = #tpu.pipeline_mode<synchronous>, transform_indices = @transform_2, window_bounds = array<i64: 2, 1, 32>}, {pipeline_mode = #tpu.pipeline_mode<synchronous>, transform_indices = @transform_3, window_bounds = array<i64: 2, 32, 96>}, {pipeline_mode = #tpu.pipeline_mode<synchronous>, transform_indices = @transform_4, window_bounds = array<i64: 2, 1, 96>}, {pipeline_mode = #tpu.pipeline_mode<synchronous>, transform_indices = @transform_5, window_bounds = array<i64: 2, 32, 32>}, {pipeline_mode = #tpu.pipeline_mode<synchronous>, transform_indices = @transform_6, window_bounds = array<i64: 2, 1, 32>}, {pipeline_mode = #tpu.pipeline_mode<synchronous>, transform_indices = @transform_7, window_bounds = array<i64: 2, 1, 32>}, {pipeline_mode = #tpu.pipeline_mode<synchronous>, transform_indices = @transform_8, window_bounds = array<i64: 2, 1, 32>}, {pipeline_mode = #tpu.pipeline_mode<synchronous>, transform_indices = @transform_9, window_bounds = array<i64: 2, 32, 128>}, {pipeline_mode = #tpu.pipeline_mode<synchronous>, transform_indices = @transform_10, window_bounds = array<i64: 2, 1, 128>}, {pipeline_mode = #tpu.pipeline_mode<synchronous>, transform_indices = @transform_11, window_bounds = array<i64: 2, 128, 32>}, {pipeline_mode = #tpu.pipeline_mode<synchronous>, transform_indices = @transform_12, window_bounds = array<i64: 2, 1, 32>}, {pipeline_mode = #tpu.pipeline_mode<synchronous>, transform_indices = @transform_13, window_bounds = array<i64: 1, 32>}, {pipeline_mode = #tpu.pipeline_mode<synchronous>, transform_indices = @transform_14, window_bounds = array<i64: 1, 32>}, {pipeline_mode = #tpu.pipeline_mode<synchronous>, transform_indices = @transform_15, window_bounds = array<i64: 32, 64>}, {pipeline_mode = #tpu.pipeline_mode<synchronous>, transform_indices = @transform_16, window_bounds = array<i64: 1, 64>}, {pipeline_mode = #tpu.pipeline_mode<synchronous>, transform_indices = @transform_17, window_bounds = array<i64: 64, 128>}, {pipeline_mode = #tpu.pipeline_mode<synchronous>, transform_indices = @transform_18, window_bounds = array<i64: 1, 128>}, {transform_indices = @transform_19, window_bounds = array<i64: 1, 1, 128>}]} {
    %c0 = arith.constant 0 : index
    %c0_0 = arith.constant 0 : index
    %c0_1 = arith.constant 0 : index
    %0 = vector.load %arg1[%c0, %c0_0, %c0_1] : memref<1x8x32xf32, #tpu.memory_space<vmem>>, vector<1x8x32xf32>
    %1 = vector.shape_cast %0 : vector<1x8x32xf32> to vector<8x32xf32>
    %2 = tpu.iota {dimensions = array<i32: 0>} : vector<8x8xi32>
    %3 = tpu.iota {dimensions = array<i32: 1>} : vector<8x8xi32>
    %4 = arith.cmpi sle, %3, %2 : vector<8x8xi32>
    %c0_2 = arith.constant 0 : index
    %c0_3 = arith.constant 0 : index
    %c0_4 = arith.constant 0 : index
    %5 = vector.load %arg2[%c0_2, %c0_3, %c0_4] : memref<2x1x32xf32, #tpu.memory_space<vmem>>, vector<1x1x32xf32>
    %6 = vector.shape_cast %5 : vector<1x1x32xf32> to vector<1x32xf32>
    %c0_5 = arith.constant 0 : index
    %c0_6 = arith.constant 0 : index
    %c0_7 = arith.constant 0 : index
    %7 = vector.load %arg3[%c0_5, %c0_6, %c0_7] : memref<2x1x32xf32, #tpu.memory_space<vmem>>, vector<1x1x32xf32>
    %8 = vector.shape_cast %7 : vector<1x1x32xf32> to vector<1x32xf32>
    %cst = arith.constant dense<0.000000e+00> : vector<8xf32>
    %9 = vector.multi_reduction <add>, %1, %cst [1] : vector<8x32xf32> to vector<8xf32>
    %10 = vector.shape_cast %9 : vector<8xf32> to vector<8x1xf32>
    %cst_8 = arith.constant 3.200000e+01 : f32
    %11 = vector.broadcast %cst_8 : f32 to vector<8x1xf32>
    %12 = arith.divf %10, %11 : vector<8x1xf32>
    %13 = vector.broadcast %12 : vector<8x1xf32> to vector<8x32xf32>
    %14 = arith.subf %1, %13 : vector<8x32xf32>
    %15 = arith.mulf %14, %14 : vector<8x32xf32>
    %cst_9 = arith.constant dense<0.000000e+00> : vector<8xf32>
    %16 = vector.multi_reduction <add>, %15, %cst_9 [1] : vector<8x32xf32> to vector<8xf32>
    %17 = vector.shape_cast %16 : vector<8xf32> to vector<8x1xf32>
    %cst_10 = arith.constant 3.200000e+01 : f32
    %18 = vector.broadcast %cst_10 : f32 to vector<8x1xf32>
    %19 = arith.divf %17, %18 : vector<8x1xf32>
    %20 = vector.broadcast %12 : vector<8x1xf32> to vector<8x32xf32>
    %21 = arith.subf %1, %20 : vector<8x32xf32>
    %cst_11 = arith.constant 9.99999974E-6 : f32
    %22 = vector.broadcast %cst_11 : f32 to vector<8x1xf32>
    %23 = arith.addf %19, %22 : vector<8x1xf32>
    %24 = math.rsqrt %23 : vector<8x1xf32>
    %25 = vector.broadcast %24 : vector<8x1xf32> to vector<8x32xf32>
    %26 = arith.mulf %21, %25 : vector<8x32xf32>
    %27 = vector.broadcast %6 : vector<1x32xf32> to vector<8x32xf32>
    %28 = arith.mulf %26, %27 : vector<8x32xf32>
    %29 = vector.broadcast %8 : vector<1x32xf32> to vector<8x32xf32>
    %30 = arith.addf %28, %29 : vector<8x32xf32>
    %31 = arith.truncf %30 : vector<8x32xf32> to vector<8x32xbf16>
    %c0_12 = arith.constant 0 : index
    %c0_13 = arith.constant 0 : index
    %c0_14 = arith.constant 0 : index
    %32 = vector.load %arg4[%c0_12, %c0_13, %c0_14] : memref<2x32x96xbf16, #tpu.memory_space<vmem>>, vector<1x32x96xbf16>
    %33 = vector.shape_cast %32 : vector<1x32x96xbf16> to vector<32x96xbf16>
    %cst_15 = arith.constant dense<0.000000e+00> : vector<8x96xf32>
    %34 = tpu.matmul %31, %33, %cst_15 {dimension_numbers = #tpu.dot_dimension_numbers<[1], [0], [0], [1], [0, 0, 1, 1], [], []>} : vector<8x32xbf16>, vector<32x96xbf16>, vector<8x96xf32> -> vector<8x96xf32>
    %c0_16 = arith.constant 0 : index
    %c0_17 = arith.constant 0 : index
    %c0_18 = arith.constant 0 : index
    %35 = vector.load %arg5[%c0_16, %c0_17, %c0_18] : memref<2x1x96xf32, #tpu.memory_space<vmem>>, vector<1x1x96xf32>
    %36 = vector.shape_cast %35 : vector<1x1x96xf32> to vector<1x96xf32>
    %37 = vector.broadcast %36 : vector<1x96xf32> to vector<8x96xf32>
    %38 = arith.addf %34, %37 : vector<8x96xf32>
    %cst_19 = arith.constant 0.000000e+00 : f32
    %39 = vector.broadcast %cst_19 : f32 to vector<8x32xf32>
    %40 = vector.extract_strided_slice %38 {offsets = [0, 0], sizes = [8, 8], strides = [1, 1]} : vector<8x96xf32> to vector<8x8xf32>
    %41 = arith.truncf %40 : vector<8x8xf32> to vector<8x8xbf16>
    %42 = vector.extract_strided_slice %38 {offsets = [0, 32], sizes = [8, 8], strides = [1, 1]} : vector<8x96xf32> to vector<8x8xf32>
    %43 = arith.truncf %42 : vector<8x8xf32> to vector<8x8xbf16>
    %44 = vector.extract_strided_slice %38 {offsets = [0, 64], sizes = [8, 8], strides = [1, 1]} : vector<8x96xf32> to vector<8x8xf32>
    %45 = arith.truncf %44 : vector<8x8xf32> to vector<8x8xbf16>
    %cst_20 = arith.constant dense<0.000000e+00> : vector<8x8xf32>
    %46 = tpu.matmul %41, %43, %cst_20 {dimension_numbers = #tpu.dot_dimension_numbers<[1], [1], [0], [0], [0, 0, 1, 0], [], []>} : vector<8x8xbf16>, vector<8x8xbf16>, vector<8x8xf32> -> vector<8x8xf32>
    %cst_21 = arith.constant 0.353553385 : f32
    %47 = vector.broadcast %cst_21 : f32 to vector<8x8xf32>
    %48 = arith.mulf %46, %47 : vector<8x8xf32>
    %cst_22 = arith.constant -1.000000e+30 : f32
    %49 = vector.broadcast %cst_22 : f32 to vector<8x8xf32>
    %50 = arith.select %4, %48, %49 : vector<8x8xi1>, vector<8x8xf32>
    %cst_23 = arith.constant dense<0xFF800000> : vector<8xf32>
    %51 = vector.multi_reduction <maximumf>, %50, %cst_23 [1] : vector<8x8xf32> to vector<8xf32>
    %52 = vector.shape_cast %51 : vector<8xf32> to vector<8x1xf32>
    %53 = vector.broadcast %52 : vector<8x1xf32> to vector<8x8xf32>
    %54 = arith.subf %50, %53 : vector<8x8xf32>
    %55 = math.exp %54 : vector<8x8xf32>
    %cst_24 = arith.constant dense<0.000000e+00> : vector<8xf32>
    %56 = vector.multi_reduction <add>, %55, %cst_24 [1] : vector<8x8xf32> to vector<8xf32>
    %57 = vector.shape_cast %56 : vector<8xf32> to vector<8x1xf32>
    %58 = tpu.reciprocal %57 {approx = true} : vector<8x1xf32> -> vector<8x1xf32>
    %59 = vector.broadcast %58 : vector<8x1xf32> to vector<8x8xf32>
    %60 = arith.mulf %55, %59 : vector<8x8xf32>
    %61 = arith.truncf %60 : vector<8x8xf32> to vector<8x8xbf16>
    %cst_25 = arith.constant dense<0.000000e+00> : vector<8x8xf32>
    %62 = tpu.matmul %61, %45, %cst_25 {dimension_numbers = #tpu.dot_dimension_numbers<[1], [0], [0], [1], [0, 0, 1, 1], [], []>} : vector<8x8xbf16>, vector<8x8xbf16>, vector<8x8xf32> -> vector<8x8xf32>
    %c0_26 = arith.constant 0 : index
    %c0_27 = arith.constant 0 : index
    %c0_28 = arith.constant 0 : index
    %63 = vector.load %arg6[%c0_26, %c0_27, %c0_28] : memref<2x32x32xbf16, #tpu.memory_space<vmem>>, vector<1x8x32xbf16>
    %64 = vector.shape_cast %63 : vector<1x8x32xbf16> to vector<8x32xbf16>
    %65 = arith.truncf %62 : vector<8x8xf32> to vector<8x8xbf16>
    %cst_29 = arith.constant dense<0.000000e+00> : vector<8x32xf32>
    %66 = tpu.matmul %65, %64, %cst_29 {dimension_numbers = #tpu.dot_dimension_numbers<[1], [0], [0], [1], [0, 0, 1, 1], [], []>} : vector<8x8xbf16>, vector<8x32xbf16>, vector<8x32xf32> -> vector<8x32xf32>
    %67 = arith.addf %39, %66 : vector<8x32xf32>
    %68 = vector.extract_strided_slice %38 {offsets = [0, 8], sizes = [8, 8], strides = [1, 1]} : vector<8x96xf32> to vector<8x8xf32>
    %69 = arith.truncf %68 : vector<8x8xf32> to vector<8x8xbf16>
    %70 = vector.extract_strided_slice %38 {offsets = [0, 40], sizes = [8, 8], strides = [1, 1]} : vector<8x96xf32> to vector<8x8xf32>
    %71 = arith.truncf %70 : vector<8x8xf32> to vector<8x8xbf16>
    %72 = vector.extract_strided_slice %38 {offsets = [0, 72], sizes = [8, 8], strides = [1, 1]} : vector<8x96xf32> to vector<8x8xf32>
    %73 = arith.truncf %72 : vector<8x8xf32> to vector<8x8xbf16>
    %cst_30 = arith.constant dense<0.000000e+00> : vector<8x8xf32>
    %74 = tpu.matmul %69, %71, %cst_30 {dimension_numbers = #tpu.dot_dimension_numbers<[1], [1], [0], [0], [0, 0, 1, 0], [], []>} : vector<8x8xbf16>, vector<8x8xbf16>, vector<8x8xf32> -> vector<8x8xf32>
    %cst_31 = arith.constant 0.353553385 : f32
    %75 = vector.broadcast %cst_31 : f32 to vector<8x8xf32>
    %76 = arith.mulf %74, %75 : vector<8x8xf32>
    %cst_32 = arith.constant -1.000000e+30 : f32
    %77 = vector.broadcast %cst_32 : f32 to vector<8x8xf32>
    %78 = arith.select %4, %76, %77 : vector<8x8xi1>, vector<8x8xf32>
    %cst_33 = arith.constant dense<0xFF800000> : vector<8xf32>
    %79 = vector.multi_reduction <maximumf>, %78, %cst_33 [1] : vector<8x8xf32> to vector<8xf32>
    %80 = vector.shape_cast %79 : vector<8xf32> to vector<8x1xf32>
    %81 = vector.broadcast %80 : vector<8x1xf32> to vector<8x8xf32>
    %82 = arith.subf %78, %81 : vector<8x8xf32>
    %83 = math.exp %82 : vector<8x8xf32>
    %cst_34 = arith.constant dense<0.000000e+00> : vector<8xf32>
    %84 = vector.multi_reduction <add>, %83, %cst_34 [1] : vector<8x8xf32> to vector<8xf32>
    %85 = vector.shape_cast %84 : vector<8xf32> to vector<8x1xf32>
    %86 = tpu.reciprocal %85 {approx = true} : vector<8x1xf32> -> vector<8x1xf32>
    %87 = vector.broadcast %86 : vector<8x1xf32> to vector<8x8xf32>
    %88 = arith.mulf %83, %87 : vector<8x8xf32>
    %89 = arith.truncf %88 : vector<8x8xf32> to vector<8x8xbf16>
    %cst_35 = arith.constant dense<0.000000e+00> : vector<8x8xf32>
    %90 = tpu.matmul %89, %73, %cst_35 {dimension_numbers = #tpu.dot_dimension_numbers<[1], [0], [0], [1], [0, 0, 1, 1], [], []>} : vector<8x8xbf16>, vector<8x8xbf16>, vector<8x8xf32> -> vector<8x8xf32>
    %c0_36 = arith.constant 0 : index
    %c8 = arith.constant 8 : index
    %c0_37 = arith.constant 0 : index
    %91 = vector.load %arg6[%c0_36, %c8, %c0_37] : memref<2x32x32xbf16, #tpu.memory_space<vmem>>, vector<1x8x32xbf16>
    %92 = vector.shape_cast %91 : vector<1x8x32xbf16> to vector<8x32xbf16>
    %93 = arith.truncf %90 : vector<8x8xf32> to vector<8x8xbf16>
    %cst_38 = arith.constant dense<0.000000e+00> : vector<8x32xf32>
    %94 = tpu.matmul %93, %92, %cst_38 {dimension_numbers = #tpu.dot_dimension_numbers<[1], [0], [0], [1], [0, 0, 1, 1], [], []>} : vector<8x8xbf16>, vector<8x32xbf16>, vector<8x32xf32> -> vector<8x32xf32>
    %95 = arith.addf %67, %94 : vector<8x32xf32>
    %96 = vector.extract_strided_slice %38 {offsets = [0, 16], sizes = [8, 8], strides = [1, 1]} : vector<8x96xf32> to vector<8x8xf32>
    %97 = arith.truncf %96 : vector<8x8xf32> to vector<8x8xbf16>
    %98 = vector.extract_strided_slice %38 {offsets = [0, 48], sizes = [8, 8], strides = [1, 1]} : vector<8x96xf32> to vector<8x8xf32>
    %99 = arith.truncf %98 : vector<8x8xf32> to vector<8x8xbf16>
    %100 = vector.extract_strided_slice %38 {offsets = [0, 80], sizes = [8, 8], strides = [1, 1]} : vector<8x96xf32> to vector<8x8xf32>
    %101 = arith.truncf %100 : vector<8x8xf32> to vector<8x8xbf16>
    %cst_39 = arith.constant dense<0.000000e+00> : vector<8x8xf32>
    %102 = tpu.matmul %97, %99, %cst_39 {dimension_numbers = #tpu.dot_dimension_numbers<[1], [1], [0], [0], [0, 0, 1, 0], [], []>} : vector<8x8xbf16>, vector<8x8xbf16>, vector<8x8xf32> -> vector<8x8xf32>
    %cst_40 = arith.constant 0.353553385 : f32
    %103 = vector.broadcast %cst_40 : f32 to vector<8x8xf32>
    %104 = arith.mulf %102, %103 : vector<8x8xf32>
    %cst_41 = arith.constant -1.000000e+30 : f32
    %105 = vector.broadcast %cst_41 : f32 to vector<8x8xf32>
    %106 = arith.select %4, %104, %105 : vector<8x8xi1>, vector<8x8xf32>
    %cst_42 = arith.constant dense<0xFF800000> : vector<8xf32>
    %107 = vector.multi_reduction <maximumf>, %106, %cst_42 [1] : vector<8x8xf32> to vector<8xf32>
    %108 = vector.shape_cast %107 : vector<8xf32> to vector<8x1xf32>
    %109 = vector.broadcast %108 : vector<8x1xf32> to vector<8x8xf32>
    %110 = arith.subf %106, %109 : vector<8x8xf32>
    %111 = math.exp %110 : vector<8x8xf32>
    %cst_43 = arith.constant dense<0.000000e+00> : vector<8xf32>
    %112 = vector.multi_reduction <add>, %111, %cst_43 [1] : vector<8x8xf32> to vector<8xf32>
    %113 = vector.shape_cast %112 : vector<8xf32> to vector<8x1xf32>
    %114 = tpu.reciprocal %113 {approx = true} : vector<8x1xf32> -> vector<8x1xf32>
    %115 = vector.broadcast %114 : vector<8x1xf32> to vector<8x8xf32>
    %116 = arith.mulf %111, %115 : vector<8x8xf32>
    %117 = arith.truncf %116 : vector<8x8xf32> to vector<8x8xbf16>
    %cst_44 = arith.constant dense<0.000000e+00> : vector<8x8xf32>
    %118 = tpu.matmul %117, %101, %cst_44 {dimension_numbers = #tpu.dot_dimension_numbers<[1], [0], [0], [1], [0, 0, 1, 1], [], []>} : vector<8x8xbf16>, vector<8x8xbf16>, vector<8x8xf32> -> vector<8x8xf32>
    %c0_45 = arith.constant 0 : index
    %c16 = arith.constant 16 : index
    %c0_46 = arith.constant 0 : index
    %119 = vector.load %arg6[%c0_45, %c16, %c0_46] : memref<2x32x32xbf16, #tpu.memory_space<vmem>>, vector<1x8x32xbf16>
    %120 = vector.shape_cast %119 : vector<1x8x32xbf16> to vector<8x32xbf16>
    %121 = arith.truncf %118 : vector<8x8xf32> to vector<8x8xbf16>
    %cst_47 = arith.constant dense<0.000000e+00> : vector<8x32xf32>
    %122 = tpu.matmul %121, %120, %cst_47 {dimension_numbers = #tpu.dot_dimension_numbers<[1], [0], [0], [1], [0, 0, 1, 1], [], []>} : vector<8x8xbf16>, vector<8x32xbf16>, vector<8x32xf32> -> vector<8x32xf32>
    %123 = arith.addf %95, %122 : vector<8x32xf32>
    %124 = vector.extract_strided_slice %38 {offsets = [0, 24], sizes = [8, 8], strides = [1, 1]} : vector<8x96xf32> to vector<8x8xf32>
    %125 = arith.truncf %124 : vector<8x8xf32> to vector<8x8xbf16>
    %126 = vector.extract_strided_slice %38 {offsets = [0, 56], sizes = [8, 8], strides = [1, 1]} : vector<8x96xf32> to vector<8x8xf32>
    %127 = arith.truncf %126 : vector<8x8xf32> to vector<8x8xbf16>
    %128 = vector.extract_strided_slice %38 {offsets = [0, 88], sizes = [8, 8], strides = [1, 1]} : vector<8x96xf32> to vector<8x8xf32>
    %129 = arith.truncf %128 : vector<8x8xf32> to vector<8x8xbf16>
    %cst_48 = arith.constant dense<0.000000e+00> : vector<8x8xf32>
    %130 = tpu.matmul %125, %127, %cst_48 {dimension_numbers = #tpu.dot_dimension_numbers<[1], [1], [0], [0], [0, 0, 1, 0], [], []>} : vector<8x8xbf16>, vector<8x8xbf16>, vector<8x8xf32> -> vector<8x8xf32>
    %cst_49 = arith.constant 0.353553385 : f32
    %131 = vector.broadcast %cst_49 : f32 to vector<8x8xf32>
    %132 = arith.mulf %130, %131 : vector<8x8xf32>
    %cst_50 = arith.constant -1.000000e+30 : f32
    %133 = vector.broadcast %cst_50 : f32 to vector<8x8xf32>
    %134 = arith.select %4, %132, %133 : vector<8x8xi1>, vector<8x8xf32>
    %cst_51 = arith.constant dense<0xFF800000> : vector<8xf32>
    %135 = vector.multi_reduction <maximumf>, %134, %cst_51 [1] : vector<8x8xf32> to vector<8xf32>
    %136 = vector.shape_cast %135 : vector<8xf32> to vector<8x1xf32>
    %137 = vector.broadcast %136 : vector<8x1xf32> to vector<8x8xf32>
    %138 = arith.subf %134, %137 : vector<8x8xf32>
    %139 = math.exp %138 : vector<8x8xf32>
    %cst_52 = arith.constant dense<0.000000e+00> : vector<8xf32>
    %140 = vector.multi_reduction <add>, %139, %cst_52 [1] : vector<8x8xf32> to vector<8xf32>
    %141 = vector.shape_cast %140 : vector<8xf32> to vector<8x1xf32>
    %142 = tpu.reciprocal %141 {approx = true} : vector<8x1xf32> -> vector<8x1xf32>
    %143 = vector.broadcast %142 : vector<8x1xf32> to vector<8x8xf32>
    %144 = arith.mulf %139, %143 : vector<8x8xf32>
    %145 = arith.truncf %144 : vector<8x8xf32> to vector<8x8xbf16>
    %cst_53 = arith.constant dense<0.000000e+00> : vector<8x8xf32>
    %146 = tpu.matmul %145, %129, %cst_53 {dimension_numbers = #tpu.dot_dimension_numbers<[1], [0], [0], [1], [0, 0, 1, 1], [], []>} : vector<8x8xbf16>, vector<8x8xbf16>, vector<8x8xf32> -> vector<8x8xf32>
    %c0_54 = arith.constant 0 : index
    %c24 = arith.constant 24 : index
    %c0_55 = arith.constant 0 : index
    %147 = vector.load %arg6[%c0_54, %c24, %c0_55] : memref<2x32x32xbf16, #tpu.memory_space<vmem>>, vector<1x8x32xbf16>
    %148 = vector.shape_cast %147 : vector<1x8x32xbf16> to vector<8x32xbf16>
    %149 = arith.truncf %146 : vector<8x8xf32> to vector<8x8xbf16>
    %cst_56 = arith.constant dense<0.000000e+00> : vector<8x32xf32>
    %150 = tpu.matmul %149, %148, %cst_56 {dimension_numbers = #tpu.dot_dimension_numbers<[1], [0], [0], [1], [0, 0, 1, 1], [], []>} : vector<8x8xbf16>, vector<8x32xbf16>, vector<8x32xf32> -> vector<8x32xf32>
    %151 = arith.addf %123, %150 : vector<8x32xf32>
    %152 = arith.addf %1, %151 : vector<8x32xf32>
    %c0_57 = arith.constant 0 : index
    %c0_58 = arith.constant 0 : index
    %c0_59 = arith.constant 0 : index
    %153 = vector.load %arg7[%c0_57, %c0_58, %c0_59] : memref<2x1x32xf32, #tpu.memory_space<vmem>>, vector<1x1x32xf32>
    %154 = vector.shape_cast %153 : vector<1x1x32xf32> to vector<1x32xf32>
    %155 = vector.broadcast %154 : vector<1x32xf32> to vector<8x32xf32>
    %156 = arith.addf %152, %155 : vector<8x32xf32>
    %c0_60 = arith.constant 0 : index
    %c0_61 = arith.constant 0 : index
    %c0_62 = arith.constant 0 : index
    %157 = vector.load %arg8[%c0_60, %c0_61, %c0_62] : memref<2x1x32xf32, #tpu.memory_space<vmem>>, vector<1x1x32xf32>
    %158 = vector.shape_cast %157 : vector<1x1x32xf32> to vector<1x32xf32>
    %c0_63 = arith.constant 0 : index
    %c0_64 = arith.constant 0 : index
    %c0_65 = arith.constant 0 : index
    %159 = vector.load %arg9[%c0_63, %c0_64, %c0_65] : memref<2x1x32xf32, #tpu.memory_space<vmem>>, vector<1x1x32xf32>
    %160 = vector.shape_cast %159 : vector<1x1x32xf32> to vector<1x32xf32>
    %cst_66 = arith.constant dense<0.000000e+00> : vector<8xf32>
    %161 = vector.multi_reduction <add>, %156, %cst_66 [1] : vector<8x32xf32> to vector<8xf32>
    %162 = vector.shape_cast %161 : vector<8xf32> to vector<8x1xf32>
    %cst_67 = arith.constant 3.200000e+01 : f32
    %163 = vector.broadcast %cst_67 : f32 to vector<8x1xf32>
    %164 = arith.divf %162, %163 : vector<8x1xf32>
    %165 = vector.broadcast %164 : vector<8x1xf32> to vector<8x32xf32>
    %166 = arith.subf %156, %165 : vector<8x32xf32>
    %167 = arith.mulf %166, %166 : vector<8x32xf32>
    %cst_68 = arith.constant dense<0.000000e+00> : vector<8xf32>
    %168 = vector.multi_reduction <add>, %167, %cst_68 [1] : vector<8x32xf32> to vector<8xf32>
    %169 = vector.shape_cast %168 : vector<8xf32> to vector<8x1xf32>
    %cst_69 = arith.constant 3.200000e+01 : f32
    %170 = vector.broadcast %cst_69 : f32 to vector<8x1xf32>
    %171 = arith.divf %169, %170 : vector<8x1xf32>
    %172 = vector.broadcast %164 : vector<8x1xf32> to vector<8x32xf32>
    %173 = arith.subf %156, %172 : vector<8x32xf32>
    %cst_70 = arith.constant 9.99999974E-6 : f32
    %174 = vector.broadcast %cst_70 : f32 to vector<8x1xf32>
    %175 = arith.addf %171, %174 : vector<8x1xf32>
    %176 = math.rsqrt %175 : vector<8x1xf32>
    %177 = vector.broadcast %176 : vector<8x1xf32> to vector<8x32xf32>
    %178 = arith.mulf %173, %177 : vector<8x32xf32>
    %179 = vector.broadcast %158 : vector<1x32xf32> to vector<8x32xf32>
    %180 = arith.mulf %178, %179 : vector<8x32xf32>
    %181 = vector.broadcast %160 : vector<1x32xf32> to vector<8x32xf32>
    %182 = arith.addf %180, %181 : vector<8x32xf32>
    %183 = arith.truncf %182 : vector<8x32xf32> to vector<8x32xbf16>
    %c0_71 = arith.constant 0 : index
    %c0_72 = arith.constant 0 : index
    %c0_73 = arith.constant 0 : index
    %184 = vector.load %arg10[%c0_71, %c0_72, %c0_73] : memref<2x32x128xbf16, #tpu.memory_space<vmem>>, vector<1x32x128xbf16>
    %185 = vector.shape_cast %184 : vector<1x32x128xbf16> to vector<32x128xbf16>
    %cst_74 = arith.constant dense<0.000000e+00> : vector<8x128xf32>
    %186 = tpu.matmul %183, %185, %cst_74 {dimension_numbers = #tpu.dot_dimension_numbers<[1], [0], [0], [1], [0, 0, 1, 1], [], []>} : vector<8x32xbf16>, vector<32x128xbf16>, vector<8x128xf32> -> vector<8x128xf32>
    %c0_75 = arith.constant 0 : index
    %c0_76 = arith.constant 0 : index
    %c0_77 = arith.constant 0 : index
    %187 = vector.load %arg11[%c0_75, %c0_76, %c0_77] : memref<2x1x128xf32, #tpu.memory_space<vmem>>, vector<1x1x128xf32>
    %188 = vector.shape_cast %187 : vector<1x1x128xf32> to vector<1x128xf32>
    %189 = vector.broadcast %188 : vector<1x128xf32> to vector<8x128xf32>
    %190 = arith.addf %186, %189 : vector<8x128xf32>
    %191 = arith.mulf %190, %190 : vector<8x128xf32>
    %192 = arith.mulf %190, %191 : vector<8x128xf32>
    %cst_78 = arith.constant 4.471500e-02 : f32
    %193 = vector.broadcast %cst_78 : f32 to vector<8x128xf32>
    %194 = arith.mulf %193, %192 : vector<8x128xf32>
    %195 = arith.addf %190, %194 : vector<8x128xf32>
    %cst_79 = arith.constant 0.797884583 : f32
    %196 = vector.broadcast %cst_79 : f32 to vector<8x128xf32>
    %197 = arith.mulf %196, %195 : vector<8x128xf32>
    %198 = math.tanh %197 : vector<8x128xf32>
    %cst_80 = arith.constant 1.000000e+00 : f32
    %199 = vector.broadcast %cst_80 : f32 to vector<8x128xf32>
    %200 = arith.addf %199, %198 : vector<8x128xf32>
    %cst_81 = arith.constant 5.000000e-01 : f32
    %201 = vector.broadcast %cst_81 : f32 to vector<8x128xf32>
    %202 = arith.mulf %201, %200 : vector<8x128xf32>
    %203 = arith.mulf %190, %202 : vector<8x128xf32>
    %204 = arith.truncf %203 : vector<8x128xf32> to vector<8x128xbf16>
    %c0_82 = arith.constant 0 : index
    %c0_83 = arith.constant 0 : index
    %c0_84 = arith.constant 0 : index
    %205 = vector.load %arg12[%c0_82, %c0_83, %c0_84] : memref<2x128x32xbf16, #tpu.memory_space<vmem>>, vector<1x128x32xbf16>
    %206 = vector.shape_cast %205 : vector<1x128x32xbf16> to vector<128x32xbf16>
    %cst_85 = arith.constant dense<0.000000e+00> : vector<8x32xf32>
    %207 = tpu.matmul %204, %206, %cst_85 {dimension_numbers = #tpu.dot_dimension_numbers<[1], [0], [0], [1], [0, 0, 1, 1], [], []>} : vector<8x128xbf16>, vector<128x32xbf16>, vector<8x32xf32> -> vector<8x32xf32>
    %208 = arith.addf %156, %207 : vector<8x32xf32>
    %c0_86 = arith.constant 0 : index
    %c0_87 = arith.constant 0 : index
    %c0_88 = arith.constant 0 : index
    %209 = vector.load %arg13[%c0_86, %c0_87, %c0_88] : memref<2x1x32xf32, #tpu.memory_space<vmem>>, vector<1x1x32xf32>
    %210 = vector.shape_cast %209 : vector<1x1x32xf32> to vector<1x32xf32>
    %211 = vector.broadcast %210 : vector<1x32xf32> to vector<8x32xf32>
    %212 = arith.addf %208, %211 : vector<8x32xf32>
    %c1 = arith.constant 1 : index
    %c0_89 = arith.constant 0 : index
    %c0_90 = arith.constant 0 : index
    %213 = vector.load %arg2[%c1, %c0_89, %c0_90] : memref<2x1x32xf32, #tpu.memory_space<vmem>>, vector<1x1x32xf32>
    %214 = vector.shape_cast %213 : vector<1x1x32xf32> to vector<1x32xf32>
    %c1_91 = arith.constant 1 : index
    %c0_92 = arith.constant 0 : index
    %c0_93 = arith.constant 0 : index
    %215 = vector.load %arg3[%c1_91, %c0_92, %c0_93] : memref<2x1x32xf32, #tpu.memory_space<vmem>>, vector<1x1x32xf32>
    %216 = vector.shape_cast %215 : vector<1x1x32xf32> to vector<1x32xf32>
    %cst_94 = arith.constant dense<0.000000e+00> : vector<8xf32>
    %217 = vector.multi_reduction <add>, %212, %cst_94 [1] : vector<8x32xf32> to vector<8xf32>
    %218 = vector.shape_cast %217 : vector<8xf32> to vector<8x1xf32>
    %cst_95 = arith.constant 3.200000e+01 : f32
    %219 = vector.broadcast %cst_95 : f32 to vector<8x1xf32>
    %220 = arith.divf %218, %219 : vector<8x1xf32>
    %221 = vector.broadcast %220 : vector<8x1xf32> to vector<8x32xf32>
    %222 = arith.subf %212, %221 : vector<8x32xf32>
    %223 = arith.mulf %222, %222 : vector<8x32xf32>
    %cst_96 = arith.constant dense<0.000000e+00> : vector<8xf32>
    %224 = vector.multi_reduction <add>, %223, %cst_96 [1] : vector<8x32xf32> to vector<8xf32>
    %225 = vector.shape_cast %224 : vector<8xf32> to vector<8x1xf32>
    %cst_97 = arith.constant 3.200000e+01 : f32
    %226 = vector.broadcast %cst_97 : f32 to vector<8x1xf32>
    %227 = arith.divf %225, %226 : vector<8x1xf32>
    %228 = vector.broadcast %220 : vector<8x1xf32> to vector<8x32xf32>
    %229 = arith.subf %212, %228 : vector<8x32xf32>
    %cst_98 = arith.constant 9.99999974E-6 : f32
    %230 = vector.broadcast %cst_98 : f32 to vector<8x1xf32>
    %231 = arith.addf %227, %230 : vector<8x1xf32>
    %232 = math.rsqrt %231 : vector<8x1xf32>
    %233 = vector.broadcast %232 : vector<8x1xf32> to vector<8x32xf32>
    %234 = arith.mulf %229, %233 : vector<8x32xf32>
    %235 = vector.broadcast %214 : vector<1x32xf32> to vector<8x32xf32>
    %236 = arith.mulf %234, %235 : vector<8x32xf32>
    %237 = vector.broadcast %216 : vector<1x32xf32> to vector<8x32xf32>
    %238 = arith.addf %236, %237 : vector<8x32xf32>
    %239 = arith.truncf %238 : vector<8x32xf32> to vector<8x32xbf16>
    %c1_99 = arith.constant 1 : index
    %c0_100 = arith.constant 0 : index
    %c0_101 = arith.constant 0 : index
    %240 = vector.load %arg4[%c1_99, %c0_100, %c0_101] : memref<2x32x96xbf16, #tpu.memory_space<vmem>>, vector<1x32x96xbf16>
    %241 = vector.shape_cast %240 : vector<1x32x96xbf16> to vector<32x96xbf16>
    %cst_102 = arith.constant dense<0.000000e+00> : vector<8x96xf32>
    %242 = tpu.matmul %239, %241, %cst_102 {dimension_numbers = #tpu.dot_dimension_numbers<[1], [0], [0], [1], [0, 0, 1, 1], [], []>} : vector<8x32xbf16>, vector<32x96xbf16>, vector<8x96xf32> -> vector<8x96xf32>
    %c1_103 = arith.constant 1 : index
    %c0_104 = arith.constant 0 : index
    %c0_105 = arith.constant 0 : index
    %243 = vector.load %arg5[%c1_103, %c0_104, %c0_105] : memref<2x1x96xf32, #tpu.memory_space<vmem>>, vector<1x1x96xf32>
    %244 = vector.shape_cast %243 : vector<1x1x96xf32> to vector<1x96xf32>
    %245 = vector.broadcast %244 : vector<1x96xf32> to vector<8x96xf32>
    %246 = arith.addf %242, %245 : vector<8x96xf32>
    %cst_106 = arith.constant 0.000000e+00 : f32
    %247 = vector.broadcast %cst_106 : f32 to vector<8x32xf32>
    %248 = vector.extract_strided_slice %246 {offsets = [0, 0], sizes = [8, 8], strides = [1, 1]} : vector<8x96xf32> to vector<8x8xf32>
    %249 = arith.truncf %248 : vector<8x8xf32> to vector<8x8xbf16>
    %250 = vector.extract_strided_slice %246 {offsets = [0, 32], sizes = [8, 8], strides = [1, 1]} : vector<8x96xf32> to vector<8x8xf32>
    %251 = arith.truncf %250 : vector<8x8xf32> to vector<8x8xbf16>
    %252 = vector.extract_strided_slice %246 {offsets = [0, 64], sizes = [8, 8], strides = [1, 1]} : vector<8x96xf32> to vector<8x8xf32>
    %253 = arith.truncf %252 : vector<8x8xf32> to vector<8x8xbf16>
    %cst_107 = arith.constant dense<0.000000e+00> : vector<8x8xf32>
    %254 = tpu.matmul %249, %251, %cst_107 {dimension_numbers = #tpu.dot_dimension_numbers<[1], [1], [0], [0], [0, 0, 1, 0], [], []>} : vector<8x8xbf16>, vector<8x8xbf16>, vector<8x8xf32> -> vector<8x8xf32>
    %cst_108 = arith.constant 0.353553385 : f32
    %255 = vector.broadcast %cst_108 : f32 to vector<8x8xf32>
    %256 = arith.mulf %254, %255 : vector<8x8xf32>
    %cst_109 = arith.constant -1.000000e+30 : f32
    %257 = vector.broadcast %cst_109 : f32 to vector<8x8xf32>
    %258 = arith.select %4, %256, %257 : vector<8x8xi1>, vector<8x8xf32>
    %cst_110 = arith.constant dense<0xFF800000> : vector<8xf32>
    %259 = vector.multi_reduction <maximumf>, %258, %cst_110 [1] : vector<8x8xf32> to vector<8xf32>
    %260 = vector.shape_cast %259 : vector<8xf32> to vector<8x1xf32>
    %261 = vector.broadcast %260 : vector<8x1xf32> to vector<8x8xf32>
    %262 = arith.subf %258, %261 : vector<8x8xf32>
    %263 = math.exp %262 : vector<8x8xf32>
    %cst_111 = arith.constant dense<0.000000e+00> : vector<8xf32>
    %264 = vector.multi_reduction <add>, %263, %cst_111 [1] : vector<8x8xf32> to vector<8xf32>
    %265 = vector.shape_cast %264 : vector<8xf32> to vector<8x1xf32>
    %266 = tpu.reciprocal %265 {approx = true} : vector<8x1xf32> -> vector<8x1xf32>
    %267 = vector.broadcast %266 : vector<8x1xf32> to vector<8x8xf32>
    %268 = arith.mulf %263, %267 : vector<8x8xf32>
    %269 = arith.truncf %268 : vector<8x8xf32> to vector<8x8xbf16>
    %cst_112 = arith.constant dense<0.000000e+00> : vector<8x8xf32>
    %270 = tpu.matmul %269, %253, %cst_112 {dimension_numbers = #tpu.dot_dimension_numbers<[1], [0], [0], [1], [0, 0, 1, 1], [], []>} : vector<8x8xbf16>, vector<8x8xbf16>, vector<8x8xf32> -> vector<8x8xf32>
    %c1_113 = arith.constant 1 : index
    %c0_114 = arith.constant 0 : index
    %c0_115 = arith.constant 0 : index
    %271 = vector.load %arg6[%c1_113, %c0_114, %c0_115] : memref<2x32x32xbf16, #tpu.memory_space<vmem>>, vector<1x8x32xbf16>
    %272 = vector.shape_cast %271 : vector<1x8x32xbf16> to vector<8x32xbf16>
    %273 = arith.truncf %270 : vector<8x8xf32> to vector<8x8xbf16>
    %cst_116 = arith.constant dense<0.000000e+00> : vector<8x32xf32>
    %274 = tpu.matmul %273, %272, %cst_116 {dimension_numbers = #tpu.dot_dimension_numbers<[1], [0], [0], [1], [0, 0, 1, 1], [], []>} : vector<8x8xbf16>, vector<8x32xbf16>, vector<8x32xf32> -> vector<8x32xf32>
    %275 = arith.addf %247, %274 : vector<8x32xf32>
    %276 = vector.extract_strided_slice %246 {offsets = [0, 8], sizes = [8, 8], strides = [1, 1]} : vector<8x96xf32> to vector<8x8xf32>
    %277 = arith.truncf %276 : vector<8x8xf32> to vector<8x8xbf16>
    %278 = vector.extract_strided_slice %246 {offsets = [0, 40], sizes = [8, 8], strides = [1, 1]} : vector<8x96xf32> to vector<8x8xf32>
    %279 = arith.truncf %278 : vector<8x8xf32> to vector<8x8xbf16>
    %280 = vector.extract_strided_slice %246 {offsets = [0, 72], sizes = [8, 8], strides = [1, 1]} : vector<8x96xf32> to vector<8x8xf32>
    %281 = arith.truncf %280 : vector<8x8xf32> to vector<8x8xbf16>
    %cst_117 = arith.constant dense<0.000000e+00> : vector<8x8xf32>
    %282 = tpu.matmul %277, %279, %cst_117 {dimension_numbers = #tpu.dot_dimension_numbers<[1], [1], [0], [0], [0, 0, 1, 0], [], []>} : vector<8x8xbf16>, vector<8x8xbf16>, vector<8x8xf32> -> vector<8x8xf32>
    %cst_118 = arith.constant 0.353553385 : f32
    %283 = vector.broadcast %cst_118 : f32 to vector<8x8xf32>
    %284 = arith.mulf %282, %283 : vector<8x8xf32>
    %cst_119 = arith.constant -1.000000e+30 : f32
    %285 = vector.broadcast %cst_119 : f32 to vector<8x8xf32>
    %286 = arith.select %4, %284, %285 : vector<8x8xi1>, vector<8x8xf32>
    %cst_120 = arith.constant dense<0xFF800000> : vector<8xf32>
    %287 = vector.multi_reduction <maximumf>, %286, %cst_120 [1] : vector<8x8xf32> to vector<8xf32>
    %288 = vector.shape_cast %287 : vector<8xf32> to vector<8x1xf32>
    %289 = vector.broadcast %288 : vector<8x1xf32> to vector<8x8xf32>
    %290 = arith.subf %286, %289 : vector<8x8xf32>
    %291 = math.exp %290 : vector<8x8xf32>
    %cst_121 = arith.constant dense<0.000000e+00> : vector<8xf32>
    %292 = vector.multi_reduction <add>, %291, %cst_121 [1] : vector<8x8xf32> to vector<8xf32>
    %293 = vector.shape_cast %292 : vector<8xf32> to vector<8x1xf32>
    %294 = tpu.reciprocal %293 {approx = true} : vector<8x1xf32> -> vector<8x1xf32>
    %295 = vector.broadcast %294 : vector<8x1xf32> to vector<8x8xf32>
    %296 = arith.mulf %291, %295 : vector<8x8xf32>
    %297 = arith.truncf %296 : vector<8x8xf32> to vector<8x8xbf16>
    %cst_122 = arith.constant dense<0.000000e+00> : vector<8x8xf32>
    %298 = tpu.matmul %297, %281, %cst_122 {dimension_numbers = #tpu.dot_dimension_numbers<[1], [0], [0], [1], [0, 0, 1, 1], [], []>} : vector<8x8xbf16>, vector<8x8xbf16>, vector<8x8xf32> -> vector<8x8xf32>
    %c1_123 = arith.constant 1 : index
    %c8_124 = arith.constant 8 : index
    %c0_125 = arith.constant 0 : index
    %299 = vector.load %arg6[%c1_123, %c8_124, %c0_125] : memref<2x32x32xbf16, #tpu.memory_space<vmem>>, vector<1x8x32xbf16>
    %300 = vector.shape_cast %299 : vector<1x8x32xbf16> to vector<8x32xbf16>
    %301 = arith.truncf %298 : vector<8x8xf32> to vector<8x8xbf16>
    %cst_126 = arith.constant dense<0.000000e+00> : vector<8x32xf32>
    %302 = tpu.matmul %301, %300, %cst_126 {dimension_numbers = #tpu.dot_dimension_numbers<[1], [0], [0], [1], [0, 0, 1, 1], [], []>} : vector<8x8xbf16>, vector<8x32xbf16>, vector<8x32xf32> -> vector<8x32xf32>
    %303 = arith.addf %275, %302 : vector<8x32xf32>
    %304 = vector.extract_strided_slice %246 {offsets = [0, 16], sizes = [8, 8], strides = [1, 1]} : vector<8x96xf32> to vector<8x8xf32>
    %305 = arith.truncf %304 : vector<8x8xf32> to vector<8x8xbf16>
    %306 = vector.extract_strided_slice %246 {offsets = [0, 48], sizes = [8, 8], strides = [1, 1]} : vector<8x96xf32> to vector<8x8xf32>
    %307 = arith.truncf %306 : vector<8x8xf32> to vector<8x8xbf16>
    %308 = vector.extract_strided_slice %246 {offsets = [0, 80], sizes = [8, 8], strides = [1, 1]} : vector<8x96xf32> to vector<8x8xf32>
    %309 = arith.truncf %308 : vector<8x8xf32> to vector<8x8xbf16>
    %cst_127 = arith.constant dense<0.000000e+00> : vector<8x8xf32>
    %310 = tpu.matmul %305, %307, %cst_127 {dimension_numbers = #tpu.dot_dimension_numbers<[1], [1], [0], [0], [0, 0, 1, 0], [], []>} : vector<8x8xbf16>, vector<8x8xbf16>, vector<8x8xf32> -> vector<8x8xf32>
    %cst_128 = arith.constant 0.353553385 : f32
    %311 = vector.broadcast %cst_128 : f32 to vector<8x8xf32>
    %312 = arith.mulf %310, %311 : vector<8x8xf32>
    %cst_129 = arith.constant -1.000000e+30 : f32
    %313 = vector.broadcast %cst_129 : f32 to vector<8x8xf32>
    %314 = arith.select %4, %312, %313 : vector<8x8xi1>, vector<8x8xf32>
    %cst_130 = arith.constant dense<0xFF800000> : vector<8xf32>
    %315 = vector.multi_reduction <maximumf>, %314, %cst_130 [1] : vector<8x8xf32> to vector<8xf32>
    %316 = vector.shape_cast %315 : vector<8xf32> to vector<8x1xf32>
    %317 = vector.broadcast %316 : vector<8x1xf32> to vector<8x8xf32>
    %318 = arith.subf %314, %317 : vector<8x8xf32>
    %319 = math.exp %318 : vector<8x8xf32>
    %cst_131 = arith.constant dense<0.000000e+00> : vector<8xf32>
    %320 = vector.multi_reduction <add>, %319, %cst_131 [1] : vector<8x8xf32> to vector<8xf32>
    %321 = vector.shape_cast %320 : vector<8xf32> to vector<8x1xf32>
    %322 = tpu.reciprocal %321 {approx = true} : vector<8x1xf32> -> vector<8x1xf32>
    %323 = vector.broadcast %322 : vector<8x1xf32> to vector<8x8xf32>
    %324 = arith.mulf %319, %323 : vector<8x8xf32>
    %325 = arith.truncf %324 : vector<8x8xf32> to vector<8x8xbf16>
    %cst_132 = arith.constant dense<0.000000e+00> : vector<8x8xf32>
    %326 = tpu.matmul %325, %309, %cst_132 {dimension_numbers = #tpu.dot_dimension_numbers<[1], [0], [0], [1], [0, 0, 1, 1], [], []>} : vector<8x8xbf16>, vector<8x8xbf16>, vector<8x8xf32> -> vector<8x8xf32>
    %c1_133 = arith.constant 1 : index
    %c16_134 = arith.constant 16 : index
    %c0_135 = arith.constant 0 : index
    %327 = vector.load %arg6[%c1_133, %c16_134, %c0_135] : memref<2x32x32xbf16, #tpu.memory_space<vmem>>, vector<1x8x32xbf16>
    %328 = vector.shape_cast %327 : vector<1x8x32xbf16> to vector<8x32xbf16>
    %329 = arith.truncf %326 : vector<8x8xf32> to vector<8x8xbf16>
    %cst_136 = arith.constant dense<0.000000e+00> : vector<8x32xf32>
    %330 = tpu.matmul %329, %328, %cst_136 {dimension_numbers = #tpu.dot_dimension_numbers<[1], [0], [0], [1], [0, 0, 1, 1], [], []>} : vector<8x8xbf16>, vector<8x32xbf16>, vector<8x32xf32> -> vector<8x32xf32>
    %331 = arith.addf %303, %330 : vector<8x32xf32>
    %332 = vector.extract_strided_slice %246 {offsets = [0, 24], sizes = [8, 8], strides = [1, 1]} : vector<8x96xf32> to vector<8x8xf32>
    %333 = arith.truncf %332 : vector<8x8xf32> to vector<8x8xbf16>
    %334 = vector.extract_strided_slice %246 {offsets = [0, 56], sizes = [8, 8], strides = [1, 1]} : vector<8x96xf32> to vector<8x8xf32>
    %335 = arith.truncf %334 : vector<8x8xf32> to vector<8x8xbf16>
    %336 = vector.extract_strided_slice %246 {offsets = [0, 88], sizes = [8, 8], strides = [1, 1]} : vector<8x96xf32> to vector<8x8xf32>
    %337 = arith.truncf %336 : vector<8x8xf32> to vector<8x8xbf16>
    %cst_137 = arith.constant dense<0.000000e+00> : vector<8x8xf32>
    %338 = tpu.matmul %333, %335, %cst_137 {dimension_numbers = #tpu.dot_dimension_numbers<[1], [1], [0], [0], [0, 0, 1, 0], [], []>} : vector<8x8xbf16>, vector<8x8xbf16>, vector<8x8xf32> -> vector<8x8xf32>
    %cst_138 = arith.constant 0.353553385 : f32
    %339 = vector.broadcast %cst_138 : f32 to vector<8x8xf32>
    %340 = arith.mulf %338, %339 : vector<8x8xf32>
    %cst_139 = arith.constant -1.000000e+30 : f32
    %341 = vector.broadcast %cst_139 : f32 to vector<8x8xf32>
    %342 = arith.select %4, %340, %341 : vector<8x8xi1>, vector<8x8xf32>
    %cst_140 = arith.constant dense<0xFF800000> : vector<8xf32>
    %343 = vector.multi_reduction <maximumf>, %342, %cst_140 [1] : vector<8x8xf32> to vector<8xf32>
    %344 = vector.shape_cast %343 : vector<8xf32> to vector<8x1xf32>
    %345 = vector.broadcast %344 : vector<8x1xf32> to vector<8x8xf32>
    %346 = arith.subf %342, %345 : vector<8x8xf32>
    %347 = math.exp %346 : vector<8x8xf32>
    %cst_141 = arith.constant dense<0.000000e+00> : vector<8xf32>
    %348 = vector.multi_reduction <add>, %347, %cst_141 [1] : vector<8x8xf32> to vector<8xf32>
    %349 = vector.shape_cast %348 : vector<8xf32> to vector<8x1xf32>
    %350 = tpu.reciprocal %349 {approx = true} : vector<8x1xf32> -> vector<8x1xf32>
    %351 = vector.broadcast %350 : vector<8x1xf32> to vector<8x8xf32>
    %352 = arith.mulf %347, %351 : vector<8x8xf32>
    %353 = arith.truncf %352 : vector<8x8xf32> to vector<8x8xbf16>
    %cst_142 = arith.constant dense<0.000000e+00> : vector<8x8xf32>
    %354 = tpu.matmul %353, %337, %cst_142 {dimension_numbers = #tpu.dot_dimension_numbers<[1], [0], [0], [1], [0, 0, 1, 1], [], []>} : vector<8x8xbf16>, vector<8x8xbf16>, vector<8x8xf32> -> vector<8x8xf32>
    %c1_143 = arith.constant 1 : index
    %c24_144 = arith.constant 24 : index
    %c0_145 = arith.constant 0 : index
    %355 = vector.load %arg6[%c1_143, %c24_144, %c0_145] : memref<2x32x32xbf16, #tpu.memory_space<vmem>>, vector<1x8x32xbf16>
    %356 = vector.shape_cast %355 : vector<1x8x32xbf16> to vector<8x32xbf16>
    %357 = arith.truncf %354 : vector<8x8xf32> to vector<8x8xbf16>
    %cst_146 = arith.constant dense<0.000000e+00> : vector<8x32xf32>
    %358 = tpu.matmul %357, %356, %cst_146 {dimension_numbers = #tpu.dot_dimension_numbers<[1], [0], [0], [1], [0, 0, 1, 1], [], []>} : vector<8x8xbf16>, vector<8x32xbf16>, vector<8x32xf32> -> vector<8x32xf32>
    %359 = arith.addf %331, %358 : vector<8x32xf32>
    %360 = arith.addf %212, %359 : vector<8x32xf32>
    %c1_147 = arith.constant 1 : index
    %c0_148 = arith.constant 0 : index
    %c0_149 = arith.constant 0 : index
    %361 = vector.load %arg7[%c1_147, %c0_148, %c0_149] : memref<2x1x32xf32, #tpu.memory_space<vmem>>, vector<1x1x32xf32>
    %362 = vector.shape_cast %361 : vector<1x1x32xf32> to vector<1x32xf32>
    %363 = vector.broadcast %362 : vector<1x32xf32> to vector<8x32xf32>
    %364 = arith.addf %360, %363 : vector<8x32xf32>
    %c1_150 = arith.constant 1 : index
    %c0_151 = arith.constant 0 : index
    %c0_152 = arith.constant 0 : index
    %365 = vector.load %arg8[%c1_150, %c0_151, %c0_152] : memref<2x1x32xf32, #tpu.memory_space<vmem>>, vector<1x1x32xf32>
    %366 = vector.shape_cast %365 : vector<1x1x32xf32> to vector<1x32xf32>
    %c1_153 = arith.constant 1 : index
    %c0_154 = arith.constant 0 : index
    %c0_155 = arith.constant 0 : index
    %367 = vector.load %arg9[%c1_153, %c0_154, %c0_155] : memref<2x1x32xf32, #tpu.memory_space<vmem>>, vector<1x1x32xf32>
    %368 = vector.shape_cast %367 : vector<1x1x32xf32> to vector<1x32xf32>
    %cst_156 = arith.constant dense<0.000000e+00> : vector<8xf32>
    %369 = vector.multi_reduction <add>, %364, %cst_156 [1] : vector<8x32xf32> to vector<8xf32>
    %370 = vector.shape_cast %369 : vector<8xf32> to vector<8x1xf32>
    %cst_157 = arith.constant 3.200000e+01 : f32
    %371 = vector.broadcast %cst_157 : f32 to vector<8x1xf32>
    %372 = arith.divf %370, %371 : vector<8x1xf32>
    %373 = vector.broadcast %372 : vector<8x1xf32> to vector<8x32xf32>
    %374 = arith.subf %364, %373 : vector<8x32xf32>
    %375 = arith.mulf %374, %374 : vector<8x32xf32>
    %cst_158 = arith.constant dense<0.000000e+00> : vector<8xf32>
    %376 = vector.multi_reduction <add>, %375, %cst_158 [1] : vector<8x32xf32> to vector<8xf32>
    %377 = vector.shape_cast %376 : vector<8xf32> to vector<8x1xf32>
    %cst_159 = arith.constant 3.200000e+01 : f32
    %378 = vector.broadcast %cst_159 : f32 to vector<8x1xf32>
    %379 = arith.divf %377, %378 : vector<8x1xf32>
    %380 = vector.broadcast %372 : vector<8x1xf32> to vector<8x32xf32>
    %381 = arith.subf %364, %380 : vector<8x32xf32>
    %cst_160 = arith.constant 9.99999974E-6 : f32
    %382 = vector.broadcast %cst_160 : f32 to vector<8x1xf32>
    %383 = arith.addf %379, %382 : vector<8x1xf32>
    %384 = math.rsqrt %383 : vector<8x1xf32>
    %385 = vector.broadcast %384 : vector<8x1xf32> to vector<8x32xf32>
    %386 = arith.mulf %381, %385 : vector<8x32xf32>
    %387 = vector.broadcast %366 : vector<1x32xf32> to vector<8x32xf32>
    %388 = arith.mulf %386, %387 : vector<8x32xf32>
    %389 = vector.broadcast %368 : vector<1x32xf32> to vector<8x32xf32>
    %390 = arith.addf %388, %389 : vector<8x32xf32>
    %391 = arith.truncf %390 : vector<8x32xf32> to vector<8x32xbf16>
    %c1_161 = arith.constant 1 : index
    %c0_162 = arith.constant 0 : index
    %c0_163 = arith.constant 0 : index
    %392 = vector.load %arg10[%c1_161, %c0_162, %c0_163] : memref<2x32x128xbf16, #tpu.memory_space<vmem>>, vector<1x32x128xbf16>
    %393 = vector.shape_cast %392 : vector<1x32x128xbf16> to vector<32x128xbf16>
    %cst_164 = arith.constant dense<0.000000e+00> : vector<8x128xf32>
    %394 = tpu.matmul %391, %393, %cst_164 {dimension_numbers = #tpu.dot_dimension_numbers<[1], [0], [0], [1], [0, 0, 1, 1], [], []>} : vector<8x32xbf16>, vector<32x128xbf16>, vector<8x128xf32> -> vector<8x128xf32>
    %c1_165 = arith.constant 1 : index
    %c0_166 = arith.constant 0 : index
    %c0_167 = arith.constant 0 : index
    %395 = vector.load %arg11[%c1_165, %c0_166, %c0_167] : memref<2x1x128xf32, #tpu.memory_space<vmem>>, vector<1x1x128xf32>
    %396 = vector.shape_cast %395 : vector<1x1x128xf32> to vector<1x128xf32>
    %397 = vector.broadcast %396 : vector<1x128xf32> to vector<8x128xf32>
    %398 = arith.addf %394, %397 : vector<8x128xf32>
    %399 = arith.mulf %398, %398 : vector<8x128xf32>
    %400 = arith.mulf %398, %399 : vector<8x128xf32>
    %cst_168 = arith.constant 4.471500e-02 : f32
    %401 = vector.broadcast %cst_168 : f32 to vector<8x128xf32>
    %402 = arith.mulf %401, %400 : vector<8x128xf32>
    %403 = arith.addf %398, %402 : vector<8x128xf32>
    %cst_169 = arith.constant 0.797884583 : f32
    %404 = vector.broadcast %cst_169 : f32 to vector<8x128xf32>
    %405 = arith.mulf %404, %403 : vector<8x128xf32>
    %406 = math.tanh %405 : vector<8x128xf32>
    %cst_170 = arith.constant 1.000000e+00 : f32
    %407 = vector.broadcast %cst_170 : f32 to vector<8x128xf32>
    %408 = arith.addf %407, %406 : vector<8x128xf32>
    %cst_171 = arith.constant 5.000000e-01 : f32
    %409 = vector.broadcast %cst_171 : f32 to vector<8x128xf32>
    %410 = arith.mulf %409, %408 : vector<8x128xf32>
    %411 = arith.mulf %398, %410 : vector<8x128xf32>
    %412 = arith.truncf %411 : vector<8x128xf32> to vector<8x128xbf16>
    %c1_172 = arith.constant 1 : index
    %c0_173 = arith.constant 0 : index
    %c0_174 = arith.constant 0 : index
    %413 = vector.load %arg12[%c1_172, %c0_173, %c0_174] : memref<2x128x32xbf16, #tpu.memory_space<vmem>>, vector<1x128x32xbf16>
    %414 = vector.shape_cast %413 : vector<1x128x32xbf16> to vector<128x32xbf16>
    %cst_175 = arith.constant dense<0.000000e+00> : vector<8x32xf32>
    %415 = tpu.matmul %412, %414, %cst_175 {dimension_numbers = #tpu.dot_dimension_numbers<[1], [0], [0], [1], [0, 0, 1, 1], [], []>} : vector<8x128xbf16>, vector<128x32xbf16>, vector<8x32xf32> -> vector<8x32xf32>
    %416 = arith.addf %364, %415 : vector<8x32xf32>
    %c1_176 = arith.constant 1 : index
    %c0_177 = arith.constant 0 : index
    %c0_178 = arith.constant 0 : index
    %417 = vector.load %arg13[%c1_176, %c0_177, %c0_178] : memref<2x1x32xf32, #tpu.memory_space<vmem>>, vector<1x1x32xf32>
    %418 = vector.shape_cast %417 : vector<1x1x32xf32> to vector<1x32xf32>
    %419 = vector.broadcast %418 : vector<1x32xf32> to vector<8x32xf32>
    %420 = arith.addf %416, %419 : vector<8x32xf32>
    %421 = vector.extract_strided_slice %420 {offsets = [7, 0], sizes = [1, 32], strides = [1, 1]} : vector<8x32xf32> to vector<1x32xf32>
    %c0_179 = arith.constant 0 : index
    %c0_180 = arith.constant 0 : index
    %422 = vector.load %arg14[%c0_179, %c0_180] : memref<1x32xf32, #tpu.memory_space<vmem>>, vector<1x32xf32>
    %c0_181 = arith.constant 0 : index
    %c0_182 = arith.constant 0 : index
    %423 = vector.load %arg15[%c0_181, %c0_182] : memref<1x32xf32, #tpu.memory_space<vmem>>, vector<1x32xf32>
    %cst_183 = arith.constant dense<0.000000e+00> : vector<1xf32>
    %424 = vector.multi_reduction <add>, %421, %cst_183 [1] : vector<1x32xf32> to vector<1xf32>
    %425 = vector.shape_cast %424 : vector<1xf32> to vector<1x1xf32>
    %cst_184 = arith.constant 3.200000e+01 : f32
    %426 = vector.broadcast %cst_184 : f32 to vector<1x1xf32>
    %427 = arith.divf %425, %426 : vector<1x1xf32>
    %428 = vector.broadcast %427 : vector<1x1xf32> to vector<1x32xf32>
    %429 = arith.subf %421, %428 : vector<1x32xf32>
    %430 = arith.mulf %429, %429 : vector<1x32xf32>
    %cst_185 = arith.constant dense<0.000000e+00> : vector<1xf32>
    %431 = vector.multi_reduction <add>, %430, %cst_185 [1] : vector<1x32xf32> to vector<1xf32>
    %432 = vector.shape_cast %431 : vector<1xf32> to vector<1x1xf32>
    %cst_186 = arith.constant 3.200000e+01 : f32
    %433 = vector.broadcast %cst_186 : f32 to vector<1x1xf32>
    %434 = arith.divf %432, %433 : vector<1x1xf32>
    %435 = vector.broadcast %427 : vector<1x1xf32> to vector<1x32xf32>
    %436 = arith.subf %421, %435 : vector<1x32xf32>
    %cst_187 = arith.constant 9.99999974E-6 : f32
    %437 = vector.broadcast %cst_187 : f32 to vector<1x1xf32>
    %438 = arith.addf %434, %437 : vector<1x1xf32>
    %439 = math.rsqrt %438 : vector<1x1xf32>
    %440 = vector.broadcast %439 : vector<1x1xf32> to vector<1x32xf32>
    %441 = arith.mulf %436, %440 : vector<1x32xf32>
    %442 = arith.mulf %441, %422 : vector<1x32xf32>
    %443 = arith.addf %442, %423 : vector<1x32xf32>
    %444 = arith.truncf %443 : vector<1x32xf32> to vector<1x32xbf16>
    %c0_188 = arith.constant 0 : index
    %c0_189 = arith.constant 0 : index
    %445 = vector.load %arg16[%c0_188, %c0_189] : memref<32x64xbf16, #tpu.memory_space<vmem>>, vector<32x64xbf16>
    %cst_190 = arith.constant dense<0.000000e+00> : vector<1x64xf32>
    %446 = tpu.matmul %444, %445, %cst_190 {dimension_numbers = #tpu.dot_dimension_numbers<[1], [0], [0], [1], [0, 0, 1, 1], [], []>} : vector<1x32xbf16>, vector<32x64xbf16>, vector<1x64xf32> -> vector<1x64xf32>
    %c0_191 = arith.constant 0 : index
    %c0_192 = arith.constant 0 : index
    %447 = vector.load %arg17[%c0_191, %c0_192] : memref<1x64xf32, #tpu.memory_space<vmem>>, vector<1x64xf32>
    %448 = arith.addf %446, %447 : vector<1x64xf32>
    %cst_193 = arith.constant 0.000000e+00 : f32
    %449 = vector.broadcast %cst_193 : f32 to vector<1x64xf32>
    %450 = arith.maximumf %448, %449 : vector<1x64xf32>
    %451 = arith.truncf %450 : vector<1x64xf32> to vector<1x64xbf16>
    %c0_194 = arith.constant 0 : index
    %c0_195 = arith.constant 0 : index
    %452 = vector.load %arg18[%c0_194, %c0_195] : memref<64x128xbf16, #tpu.memory_space<vmem>>, vector<64x128xbf16>
    %cst_196 = arith.constant dense<0.000000e+00> : vector<1x128xf32>
    %453 = tpu.matmul %451, %452, %cst_196 {dimension_numbers = #tpu.dot_dimension_numbers<[1], [0], [0], [1], [0, 0, 1, 1], [], []>} : vector<1x64xbf16>, vector<64x128xbf16>, vector<1x128xf32> -> vector<1x128xf32>
    %c0_197 = arith.constant 0 : index
    %c0_198 = arith.constant 0 : index
    %454 = vector.load %arg19[%c0_197, %c0_198] : memref<1x128xf32, #tpu.memory_space<vmem>>, vector<1x128xf32>
    %455 = arith.addf %453, %454 : vector<1x128xf32>
    %cst_199 = arith.constant dense<0xFF800000> : vector<1xf32>
    %456 = vector.multi_reduction <maximumf>, %455, %cst_199 [1] : vector<1x128xf32> to vector<1xf32>
    %457 = vector.shape_cast %456 : vector<1xf32> to vector<1x1xf32>
    %458 = vector.broadcast %457 : vector<1x1xf32> to vector<1x128xf32>
    %459 = arith.subf %455, %458 : vector<1x128xf32>
    %460 = math.exp %459 : vector<1x128xf32>
    %cst_200 = arith.constant dense<0.000000e+00> : vector<1xf32>
    %461 = vector.multi_reduction <add>, %460, %cst_200 [1] : vector<1x128xf32> to vector<1xf32>
    %462 = vector.shape_cast %461 : vector<1xf32> to vector<1x1xf32>
    %463 = math.log %462 : vector<1x1xf32>
    %464 = vector.broadcast %463 : vector<1x1xf32> to vector<1x128xf32>
    %465 = arith.subf %459, %464 : vector<1x128xf32>
    %c0_201 = arith.constant 0 : index
    %c0_202 = arith.constant 0 : index
    %c0_203 = arith.constant 0 : index
    %466 = vector.load %arg20[%c0_201, %c0_202, %c0_203] : memref<1x1x128xf32, #tpu.memory_space<vmem>>, vector<1x1x128xf32>
    %467 = vector.shape_cast %466 : vector<1x1x128xf32> to vector<1x128xf32>
    %468 = vector.shape_cast %465 : vector<1x128xf32> to vector<1x1x128xf32>
    tpu.vector_store %arg20[%c0_201, %c0_202, %c0_203], %468 {strides = array<i32>} : memref<1x1x128xf32, #tpu.memory_space<vmem>>, vector<1x1x128xf32>,
    return
  }
  func.func @transform_0(%arg0: i32) -> (i32, i32, i32) {
    %c0_i32 = arith.constant 0 : i32
    %c0_i32_0 = arith.constant 0 : i32
    %c0_i32_1 = arith.constant 0 : i32
    return %arg0, %c0_i32, %c0_i32_0 : i32, i32, i32
  }
  func.func @transform_1(%arg0: i32) -> (i32, i32, i32) {
    %c0_i32 = arith.constant 0 : i32
    %c0_i32_0 = arith.constant 0 : i32
    %c0_i32_1 = arith.constant 0 : i32
    %c0_i32_2 = arith.constant 0 : i32
    return %c0_i32, %c0_i32_0, %c0_i32_1 : i32, i32, i32
  }
  func.func @transform_2(%arg0: i32) -> (i32, i32, i32) {
    %c0_i32 = arith.constant 0 : i32
    %c0_i32_0 = arith.constant 0 : i32
    %c0_i32_1 = arith.constant 0 : i32
    %c0_i32_2 = arith.constant 0 : i32
    return %c0_i32, %c0_i32_0, %c0_i32_1 : i32, i32, i32
  }
  func.func @transform_3(%arg0: i32) -> (i32, i32, i32) {
    %c0_i32 = arith.constant 0 : i32
    %c0_i32_0 = arith.constant 0 : i32
    %c0_i32_1 = arith.constant 0 : i32
    %c0_i32_2 = arith.constant 0 : i32
    return %c0_i32, %c0_i32_0, %c0_i32_1 : i32, i32, i32
  }
  func.func @transform_4(%arg0: i32) -> (i32, i32, i32) {
    %c0_i32 = arith.constant 0 : i32
    %c0_i32_0 = arith.constant 0 : i32
    %c0_i32_1 = arith.constant 0 : i32
    %c0_i32_2 = arith.constant 0 : i32
    return %c0_i32, %c0_i32_0, %c0_i32_1 : i32, i32, i32
  }
  func.func @transform_5(%arg0: i32) -> (i32, i32, i32) {
    %c0_i32 = arith.constant 0 : i32
    %c0_i32_0 = arith.constant 0 : i32
    %c0_i32_1 = arith.constant 0 : i32
    %c0_i32_2 = arith.constant 0 : i32
    return %c0_i32, %c0_i32_0, %c0_i32_1 : i32, i32, i32
  }
  func.func @transform_6(%arg0: i32) -> (i32, i32, i32) {
    %c0_i32 = arith.constant 0 : i32
    %c0_i32_0 = arith.constant 0 : i32
    %c0_i32_1 = arith.constant 0 : i32
    %c0_i32_2 = arith.constant 0 : i32
    return %c0_i32, %c0_i32_0, %c0_i32_1 : i32, i32, i32
  }
  func.func @transform_7(%arg0: i32) -> (i32, i32, i32) {
    %c0_i32 = arith.constant 0 : i32
    %c0_i32_0 = arith.constant 0 : i32
    %c0_i32_1 = arith.constant 0 : i32
    %c0_i32_2 = arith.constant 0 : i32
    return %c0_i32, %c0_i32_0, %c0_i32_1 : i32, i32, i32
  }
  func.func @transform_8(%arg0: i32) -> (i32, i32, i32) {
    %c0_i32 = arith.constant 0 : i32
    %c0_i32_0 = arith.constant 0 : i32
    %c0_i32_1 = arith.constant 0 : i32
    %c0_i32_2 = arith.constant 0 : i32
    return %c0_i32, %c0_i32_0, %c0_i32_1 : i32, i32, i32
  }
  func.func @transform_9(%arg0: i32) -> (i32, i32, i32) {
    %c0_i32 = arith.constant 0 : i32
    %c0_i32_0 = arith.constant 0 : i32
    %c0_i32_1 = arith.constant 0 : i32
    %c0_i32_2 = arith.constant 0 : i32
    return %c0_i32, %c0_i32_0, %c0_i32_1 : i32, i32, i32
  }
  func.func @transform_10(%arg0: i32) -> (i32, i32, i32) {
    %c0_i32 = arith.constant 0 : i32
    %c0_i32_0 = arith.constant 0 : i32
    %c0_i32_1 = arith.constant 0 : i32
    %c0_i32_2 = arith.constant 0 : i32
    return %c0_i32, %c0_i32_0, %c0_i32_1 : i32, i32, i32
  }
  func.func @transform_11(%arg0: i32) -> (i32, i32, i32) {
    %c0_i32 = arith.constant 0 : i32
    %c0_i32_0 = arith.constant 0 : i32
    %c0_i32_1 = arith.constant 0 : i32
    %c0_i32_2 = arith.constant 0 : i32
    return %c0_i32, %c0_i32_0, %c0_i32_1 : i32, i32, i32
  }
  func.func @transform_12(%arg0: i32) -> (i32, i32, i32) {
    %c0_i32 = arith.constant 0 : i32
    %c0_i32_0 = arith.constant 0 : i32
    %c0_i32_1 = arith.constant 0 : i32
    %c0_i32_2 = arith.constant 0 : i32
    return %c0_i32, %c0_i32_0, %c0_i32_1 : i32, i32, i32
  }
  func.func @transform_13(%arg0: i32) -> (i32, i32) {
    %c0_i32 = arith.constant 0 : i32
    %c0_i32_0 = arith.constant 0 : i32
    %c0_i32_1 = arith.constant 0 : i32
    return %c0_i32, %c0_i32_0 : i32, i32
  }
  func.func @transform_14(%arg0: i32) -> (i32, i32) {
    %c0_i32 = arith.constant 0 : i32
    %c0_i32_0 = arith.constant 0 : i32
    %c0_i32_1 = arith.constant 0 : i32
    return %c0_i32, %c0_i32_0 : i32, i32
  }
  func.func @transform_15(%arg0: i32) -> (i32, i32) {
    %c0_i32 = arith.constant 0 : i32
    %c0_i32_0 = arith.constant 0 : i32
    %c0_i32_1 = arith.constant 0 : i32
    return %c0_i32, %c0_i32_0 : i32, i32
  }
  func.func @transform_16(%arg0: i32) -> (i32, i32) {
    %c0_i32 = arith.constant 0 : i32
    %c0_i32_0 = arith.constant 0 : i32
    %c0_i32_1 = arith.constant 0 : i32
    return %c0_i32, %c0_i32_0 : i32, i32
  }
  func.func @transform_17(%arg0: i32) -> (i32, i32) {
    %c0_i32 = arith.constant 0 : i32
    %c0_i32_0 = arith.constant 0 : i32
    %c0_i32_1 = arith.constant 0 : i32
    return %c0_i32, %c0_i32_0 : i32, i32
  }
  func.func @transform_18(%arg0: i32) -> (i32, i32) {
    %c0_i32 = arith.constant 0 : i32
    %c0_i32_0 = arith.constant 0 : i32
    %c0_i32_1 = arith.constant 0 : i32
    return %c0_i32, %c0_i32_0 : i32, i32
  }
  func.func @transform_19(%arg0: i32) -> (i32, i32, i32) {
    %c0_i32 = arith.constant 0 : i32
    %c0_i32_0 = arith.constant 0 : i32
    %c0_i32_1 = arith.constant 0 : i32
    return %arg0, %c0_i32, %c0_i32_0 : i32, i32, i32
  }
}

</mosaic_0001>

<llo_original>
// kernel: feed_forward_classifier.1
$region0: #{feed_forward_classifier.1}
  #allocation0 [shape = 'u32[]', space=smem, size = 0x4, offset = 0x4, fixed_abs, tag = 'smem constant byte address 0x4 - core index']
  #allocation1 [shape = 'u32[144,128]{1,0:T(1,128)}', space=vmem, size = 0x12000, scoped, tag = 'internal scratch']
  %s0 = inlined_call_operand.vmem [shape: f32[2,8,32], index: 0, kind: input, shape index: {}]
  %s1 = inlined_call_operand.vmem [shape: f32[2,1,32], index: 1, kind: input, shape index: {}]
  %s2 = inlined_call_operand.vmem [shape: f32[2,1,32], index: 2, kind: input, shape index: {}]
  %s3 = inlined_call_operand.vmem [shape: bf16[2,32,96], index: 3, kind: input, shape index: {}]
  %s4 = inlined_call_operand.vmem [shape: f32[2,1,96], index: 4, kind: input, shape index: {}]
  %s5 = inlined_call_operand.vmem [shape: bf16[2,32,32], index: 5, kind: input, shape index: {}]
  %s6 = inlined_call_operand.vmem [shape: f32[2,1,32], index: 6, kind: input, shape index: {}]
  %s7 = inlined_call_operand.vmem [shape: f32[2,1,32], index: 7, kind: input, shape index: {}]
  %s8 = inlined_call_operand.vmem [shape: f32[2,1,32], index: 8, kind: input, shape index: {}]
  %s9 = inlined_call_operand.vmem [shape: bf16[2,32,128], index: 9, kind: input, shape index: {}]
  %s10 = inlined_call_operand.vmem [shape: f32[2,1,128], index: 10, kind: input, shape index: {}]
  %s11 = inlined_call_operand.vmem [shape: bf16[2,128,32], index: 11, kind: input, shape index: {}]
  %s12 = inlined_call_operand.vmem [shape: f32[2,1,32], index: 12, kind: input, shape index: {}]
  %s13 = inlined_call_operand.vmem [shape: f32[1,32], index: 13, kind: input, shape index: {}]
  %s14 = inlined_call_operand.vmem [shape: f32[1,32], index: 14, kind: input, shape index: {}]
  %s15 = inlined_call_operand.vmem [shape: bf16[32,64], index: 15, kind: input, shape index: {}]
  %s16 = inlined_call_operand.vmem [shape: f32[1,64], index: 16, kind: input, shape index: {}]
  %s17 = inlined_call_operand.vmem [shape: bf16[64,128], index: 17, kind: input, shape index: {}]
  %s18 = inlined_call_operand.vmem [shape: f32[1,128], index: 18, kind: input, shape index: {}]
  %s19 = inlined_call_operand.hbm [shape: f32[2,1,128], index: 19, kind: output, shape index: {}]
  %s20 = sld [smem:[#allocation0]]
  $region109: #{feed_forward_classifier.1} parent=0
    _
  %s22 = ssub.s32 1, %s20
  %s23 = scalar_select 0, %s22, %s20
  $region1: #{feed_forward_classifier.1} parent=0
    #allocation2 [shape = 'u8[1024]{0}', space=vmem, size = 0x400, scoped, tag = 'output window, operand 0']
    #allocation3 [shape = 's32[2]{0}', space=sflag, size = 0x8, scoped, tag = 'scoped memory for feed_forward_classifier.1']
    %24 = vsyncpa [#allocation3], 0
    %s25 = scalar_lea.sflag [#allocation3], 1
    %26 = vsyncpa %s25, 0
    loop: start=0, step=1, limit=4
    $region2: #{feed_forward_classifier.1} parent=1 // loop_pre_header
      _
    $region3: #{feed_forward_classifier.1} parent=1 // loop_header
      %s28 = sphi 0, %s32
      %p29 = scmp.ge.s32.totalorder %s28, 4
      %s38 = sphi 0, %s40
      %s41 = sphi 0, %s38
      %s42 = sphi 0, %s41
      %s58 = sphi 0, %s42
      %s62 = sphi 0, %s62
      %s64 = sphi 0, %s62
      %s65 = sphi 0, %s64
      %s79 = sphi 0, %s65
      %s83 = sphi 0, %s83
      %s85 = sphi 0, %s83
      %s86 = sphi 0, %s85
      %s100 = sphi 0, %s86
      %s104 = sphi 0, %s104
      %s106 = sphi 0, %s104
      %s107 = sphi 0, %s106
      %s121 = sphi 0, %s107
      %s125 = sphi 0, %s125
      %s127 = sphi 0, %s125
      %s128 = sphi 0, %s127
      %s142 = sphi 0, %s128
      %s146 = sphi 0, %s146
      %s148 = sphi 0, %s146
      %s149 = sphi 0, %s148
      %s163 = sphi 0, %s149
      %s167 = sphi 0, %s167
      %s169 = sphi 0, %s167
      %s170 = sphi 0, %s169
      %s184 = sphi 0, %s170
      %s188 = sphi 0, %s188
      %s190 = sphi 0, %s188
      %s191 = sphi 0, %s190
      %s205 = sphi 0, %s191
      %s209 = sphi 0, %s209
      %s211 = sphi 0, %s209
      %s212 = sphi 0, %s211
      %s226 = sphi 0, %s212
      %s230 = sphi 0, %s230
      %s232 = sphi 0, %s230
      %s233 = sphi 0, %s232
      %s247 = sphi 0, %s233
      %s251 = sphi 0, %s251
      %s253 = sphi 0, %s251
      %s254 = sphi 0, %s253
      %s268 = sphi 0, %s254
      %s272 = sphi 0, %s272
      %s274 = sphi 0, %s272
      %s275 = sphi 0, %s274
      %s289 = sphi 0, %s275
      %s293 = sphi 0, %s293
      %s295 = sphi 0, %s293
      %s296 = sphi 0, %s295
      %s310 = sphi 0, %s296
      %s314 = sphi 0, %s314
      %s316 = sphi 0, %s314
      %s317 = sphi 0, %s316
      %s331 = sphi 0, %s317
      %s335 = sphi 0, %s335
      %s337 = sphi 0, %s335
      %s338 = sphi 0, %s337
      %s352 = sphi 0, %s338
      %s356 = sphi 0, %s356
      %s358 = sphi 0, %s356
      %s359 = sphi 0, %s358
      %s373 = sphi 0, %s359
      %s377 = sphi 0, %s377
      %s379 = sphi 0, %s377
      %s380 = sphi 0, %s379
      %s394 = sphi 0, %s380
      %s398 = sphi 0, %s398
      %s400 = sphi 0, %s398
      %s401 = sphi 0, %s400
      %s415 = sphi 0, %s401
      %s419 = sphi 0, %s419
      %s421 = sphi 0, %s419
      %s422 = sphi 0, %s421
      %s436 = sphi 0, %s422
      %s442 = sphi 0, %s444
      %s445 = sphi 0, %s442
      %s446 = sphi 0, %s445
      %s462 = sphi 0, %s446
    $region4: #{feed_forward_classifier.1} parent=1 // loop_header_branch
      %31 = sbr.rel (%p29) target = $region8
    $region5: #{feed_forward_classifier.1} parent=1 // loop_body
      %s33 = ssub.s32 %s28, 1
      %s34 = ssub.s32 %s28, 2
      %s35 = sadd.s32 %s28, 1
      %s36 = ssub.s32 %s28, %s35
      %p37 = scmp.eq.s32.totalorder %s36, 0
      %s39 = sadd.s32 %s38, 1
      %s40 = scalar_select %p37, %s38, %s39
      %p43 = pneg %p37
      %p44 = scmp.eq.s32.totalorder %s28, 1
      %p45 = por %p43, %p44
      %p46 = scmp.ne.s32.totalorder %s38, %s41
      %p47 = scmp.eq.s32.totalorder %s28, 0
      %p48 = por %p46, %p47
      %p49 = scmp.ne.s32.totalorder %s38, %s41
      %p50 = scmp.eq.s32.totalorder %s33, 1
      %p51 = por %p49, %p50
      %p52 = scmp.ne.s32.totalorder %s41, %s42
      %p53 = scmp.eq.s32.totalorder %s33, 0
      %p54 = por %p52, %p53
      %p55 = scmp.ne.s32.totalorder %s41, %s42
      %p56 = scmp.eq.s32.totalorder %s34, 1
      %p57 = por %p55, %p56
      %p59 = scmp.ne.s32.totalorder %s42, %s58
      %p60 = scmp.eq.s32.totalorder %s34, 0
      %p61 = por %p59, %p60
      %s63 = sadd.s32 %s62, 1
      %p66 = scmp.eq.s32.totalorder %s28, 1
      %p67 = scmp.ne.s32.totalorder %s62, %s64
      %p68 = scmp.eq.s32.totalorder %s28, 0
      %p69 = por %p67, %p68
      %p70 = scmp.ne.s32.totalorder %s62, %s64
      %p71 = scmp.eq.s32.totalorder %s33, 1
      %p72 = por %p70, %p71
      %p73 = scmp.ne.s32.totalorder %s64, %s65
      %p74 = scmp.eq.s32.totalorder %s33, 0
      %p75 = por %p73, %p74
      %p76 = scmp.ne.s32.totalorder %s64, %s65
      %p77 = scmp.eq.s32.totalorder %s34, 1
      %p78 = por %p76, %p77
      %p80 = scmp.ne.s32.totalorder %s65, %s79
      %p81 = scmp.eq.s32.totalorder %s34, 0
      %p82 = por %p80, %p81
      %s84 = sadd.s32 %s83, 1
      %p87 = scmp.eq.s32.totalorder %s28, 1
      %p88 = scmp.ne.s32.totalorder %s83, %s85
      %p89 = scmp.eq.s32.totalorder %s28, 0
      %p90 = por %p88, %p89
      %p91 = scmp.ne.s32.totalorder %s83, %s85
      %p92 = scmp.eq.s32.totalorder %s33, 1
      %p93 = por %p91, %p92
      %p94 = scmp.ne.s32.totalorder %s85, %s86
      %p95 = scmp.eq.s32.totalorder %s33, 0
      %p96 = por %p94, %p95
      %p97 = scmp.ne.s32.totalorder %s85, %s86
      %p98 = scmp.eq.s32.totalorder %s34, 1
      %p99 = por %p97, %p98
      %p101 = scmp.ne.s32.totalorder %s86, %s100
      %p102 = scmp.eq.s32.totalorder %s34, 0
      %p103 = por %p101, %p102
      %s105 = sadd.s32 %s104, 1
      %p108 = scmp.eq.s32.totalorder %s28, 1
      %p109 = scmp.ne.s32.totalorder %s104, %s106
      %p110 = scmp.eq.s32.totalorder %s28, 0
      %p111 = por %p109, %p110
      %p112 = scmp.ne.s32.totalorder %s104, %s106
      %p113 = scmp.eq.s32.totalorder %s33, 1
      %p114 = por %p112, %p113
      %p115 = scmp.ne.s32.totalorder %s106, %s107
      %p116 = scmp.eq.s32.totalorder %s33, 0
      %p117 = por %p115, %p116
      %p118 = scmp.ne.s32.totalorder %s106, %s107
      %p119 = scmp.eq.s32.totalorder %s34, 1
      %p120 = por %p118, %p119
      %p122 = scmp.ne.s32.totalorder %s107, %s121
      %p123 = scmp.eq.s32.totalorder %s34, 0
      %p124 = por %p122, %p123
      %s126 = sadd.s32 %s125, 1
      %p129 = scmp.eq.s32.totalorder %s28, 1
      %p130 = scmp.ne.s32.totalorder %s125, %s127
      %p131 = scmp.eq.s32.totalorder %s28, 0
      %p132 = por %p130, %p131
      %p133 = scmp.ne.s32.totalorder %s125, %s127
      %p134 = scmp.eq.s32.totalorder %s33, 1
      %p135 = por %p133, %p134
      %p136 = scmp.ne.s32.totalorder %s127, %s128
      %p137 = scmp.eq.s32.totalorder %s33, 0
      %p138 = por %p136, %p137
      %p139 = scmp.ne.s32.totalorder %s127, %s128
      %p140 = scmp.eq.s32.totalorder %s34, 1
      %p141 = por %p139, %p140
      %p143 = scmp.ne.s32.totalorder %s128, %s142
      %p144 = scmp.eq.s32.totalorder %s34, 0
      %p145 = por %p143, %p144
      %s147 = sadd.s32 %s146, 1
      %p150 = scmp.eq.s32.totalorder %s28, 1
      %p151 = scmp.ne.s32.totalorder %s146, %s148
      %p152 = scmp.eq.s32.totalorder %s28, 0
      %p153 = por %p151, %p152
      %p154 = scmp.ne.s32.totalorder %s146, %s148
      %p155 = scmp.eq.s32.totalorder %s33, 1
      %p156 = por %p154, %p155
      %p157 = scmp.ne.s32.totalorder %s148, %s149
      %p158 = scmp.eq.s32.totalorder %s33, 0
      %p159 = por %p157, %p158
      %p160 = scmp.ne.s32.totalorder %s148, %s149
      %p161 = scmp.eq.s32.totalorder %s34, 1
      %p162 = por %p160, %p161
      %p164 = scmp.ne.s32.totalorder %s149, %s163
      %p165 = scmp.eq.s32.totalorder %s34, 0
      %p166 = por %p164, %p165
      %s168 = sadd.s32 %s167, 1
      %p171 = scmp.eq.s32.totalorder %s28, 1
      %p172 = scmp.ne.s32.totalorder %s167, %s169
      %p173 = scmp.eq.s32.totalorder %s28, 0
      %p174 = por %p172, %p173
      %p175 = scmp.ne.s32.totalorder %s167, %s169
      %p176 = scmp.eq.s32.totalorder %s33, 1
      %p177 = por %p175, %p176
      %p178 = scmp.ne.s32.totalorder %s169, %s170
      %p179 = scmp.eq.s32.totalorder %s33, 0
      %p180 = por %p178, %p179
      %p181 = scmp.ne.s32.totalorder %s169, %s170
      %p182 = scmp.eq.s32.totalorder %s34, 1
      %p183 = por %p181, %p182
      %p185 = scmp.ne.s32.totalorder %s170, %s184
      %p186 = scmp.eq.s32.totalorder %s34, 0
      %p187 = por %p185, %p186
      %s189 = sadd.s32 %s188, 1
      %p192 = scmp.eq.s32.totalorder %s28, 1
      %p193 = scmp.ne.s32.totalorder %s188, %s190
      %p194 = scmp.eq.s32.totalorder %s28, 0
      %p195 = por %p193, %p194
      %p196 = scmp.ne.s32.totalorder %s188, %s190
      %p197 = scmp.eq.s32.totalorder %s33, 1
      %p198 = por %p196, %p197
      %p199 = scmp.ne.s32.totalorder %s190, %s191
      %p200 = scmp.eq.s32.totalorder %s33, 0
      %p201 = por %p199, %p200
      %p202 = scmp.ne.s32.totalorder %s190, %s191
      %p203 = scmp.eq.s32.totalorder %s34, 1
      %p204 = por %p202, %p203
      %p206 = scmp.ne.s32.totalorder %s191, %s205
      %p207 = scmp.eq.s32.totalorder %s34, 0
      %p208 = por %p206, %p207
      %s210 = sadd.s32 %s209, 1
      %p213 = scmp.eq.s32.totalorder %s28, 1
      %p214 = scmp.ne.s32.totalorder %s209, %s211
      %p215 = scmp.eq.s32.totalorder %s28, 0
      %p216 = por %p214, %p215
      %p217 = scmp.ne.s32.totalorder %s209, %s211
      %p218 = scmp.eq.s32.totalorder %s33, 1
      %p219 = por %p217, %p218
      %p220 = scmp.ne.s32.totalorder %s211, %s212
      %p221 = scmp.eq.s32.totalorder %s33, 0
      %p222 = por %p220, %p221
      %p223 = scmp.ne.s32.totalorder %s211, %s212
      %p224 = scmp.eq.s32.totalorder %s34, 1
      %p225 = por %p223, %p224
      %p227 = scmp.ne.s32.totalorder %s212, %s226
      %p228 = scmp.eq.s32.totalorder %s34, 0
      %p229 = por %p227, %p228
      %s231 = sadd.s32 %s230, 1
      %p234 = scmp.eq.s32.totalorder %s28, 1
      %p235 = scmp.ne.s32.totalorder %s230, %s232
      %p236 = scmp.eq.s32.totalorder %s28, 0
      %p237 = por %p235, %p236
      %p238 = scmp.ne.s32.totalorder %s230, %s232
      %p239 = scmp.eq.s32.totalorder %s33, 1
      %p240 = por %p238, %p239
      %p241 = scmp.ne.s32.totalorder %s232, %s233
      %p242 = scmp.eq.s32.totalorder %s33, 0
      %p243 = por %p241, %p242
      %p244 = scmp.ne.s32.totalorder %s232, %s233
      %p245 = scmp.eq.s32.totalorder %s34, 1
      %p246 = por %p244, %p245
      %p248 = scmp.ne.s32.totalorder %s233, %s247
      %p249 = scmp.eq.s32.totalorder %s34, 0
      %p250 = por %p248, %p249
      %s252 = sadd.s32 %s251, 1
      %p255 = scmp.eq.s32.totalorder %s28, 1
      %p256 = scmp.ne.s32.totalorder %s251, %s253
      %p257 = scmp.eq.s32.totalorder %s28, 0
      %p258 = por %p256, %p257
      %p259 = scmp.ne.s32.totalorder %s251, %s253
      %p260 = scmp.eq.s32.totalorder %s33, 1
      %p261 = por %p259, %p260
      %p262 = scmp.ne.s32.totalorder %s253, %s254
      %p263 = scmp.eq.s32.totalorder %s33, 0
      %p264 = por %p262, %p263
      %p265 = scmp.ne.s32.totalorder %s253, %s254
      %p266 = scmp.eq.s32.totalorder %s34, 1
      %p267 = por %p265, %p266
      %p269 = scmp.ne.s32.totalorder %s254, %s268
      %p270 = scmp.eq.s32.totalorder %s34, 0
      %p271 = por %p269, %p270
      %s273 = sadd.s32 %s272, 1
      %p276 = scmp.eq.s32.totalorder %s28, 1
      %p277 = scmp.ne.s32.totalorder %s272, %s274
      %p278 = scmp.eq.s32.totalorder %s28, 0
      %p279 = por %p277, %p278
      %p280 = scmp.ne.s32.totalorder %s272, %s274
      %p281 = scmp.eq.s32.totalorder %s33, 1
      %p282 = por %p280, %p281
      %p283 = scmp.ne.s32.totalorder %s274, %s275
      %p284 = scmp.eq.s32.totalorder %s33, 0
      %p285 = por %p283, %p284
      %p286 = scmp.ne.s32.totalorder %s274, %s275
      %p287 = scmp.eq.s32.totalorder %s34, 1
      %p288 = por %p286, %p287
      %p290 = scmp.ne.s32.totalorder %s275, %s289
      %p291 = scmp.eq.s32.totalorder %s34, 0
      %p292 = por %p290, %p291
      %s294 = sadd.s32 %s293, 1
      %p297 = scmp.eq.s32.totalorder %s28, 1
      %p298 = scmp.ne.s32.totalorder %s293, %s295
      %p299 = scmp.eq.s32.totalorder %s28, 0
      %p300 = por %p298, %p299
      %p301 = scmp.ne.s32.totalorder %s293, %s295
      %p302 = scmp.eq.s32.totalorder %s33, 1
      %p303 = por %p301, %p302
      %p304 = scmp.ne.s32.totalorder %s295, %s296
      %p305 = scmp.eq.s32.totalorder %s33, 0
      %p306 = por %p304, %p305
      %p307 = scmp.ne.s32.totalorder %s295, %s296
      %p308 = scmp.eq.s32.totalorder %s34, 1
      %p309 = por %p307, %p308
      %p311 = scmp.ne.s32.totalorder %s296, %s310
      %p312 = scmp.eq.s32.totalorder %s34, 0
      %p313 = por %p311, %p312
      %s315 = sadd.s32 %s314, 1
      %p318 = scmp.eq.s32.totalorder %s28, 1
      %p319 = scmp.ne.s32.totalorder %s314, %s316
      %p320 = scmp.eq.s32.totalorder %s28, 0
      %p321 = por %p319, %p320
      %p322 = scmp.ne.s32.totalorder %s314, %s316
      %p323 = scmp.eq.s32.totalorder %s33, 1
      %p324 = por %p322, %p323
      %p325 = scmp.ne.s32.totalorder %s316, %s317
      %p326 = scmp.eq.s32.totalorder %s33, 0
      %p327 = por %p325, %p326
      %p328 = scmp.ne.s32.totalorder %s316, %s317
      %p329 = scmp.eq.s32.totalorder %s34, 1
      %p330 = por %p328, %p329
      %p332 = scmp.ne.s32.totalorder %s317, %s331
      %p333 = scmp.eq.s32.totalorder %s34, 0
      %p334 = por %p332, %p333
      %s336 = sadd.s32 %s335, 1
      %p339 = scmp.eq.s32.totalorder %s28, 1
      %p340 = scmp.ne.s32.totalorder %s335, %s337
      %p341 = scmp.eq.s32.totalorder %s28, 0
      %p342 = por %p340, %p341
      %p343 = scmp.ne.s32.totalorder %s335, %s337
      %p344 = scmp.eq.s32.totalorder %s33, 1
      %p345 = por %p343, %p344
      %p346 = scmp.ne.s32.totalorder %s337, %s338
      %p347 = scmp.eq.s32.totalorder %s33, 0
      %p348 = por %p346, %p347
      %p349 = scmp.ne.s32.totalorder %s337, %s338
      %p350 = scmp.eq.s32.totalorder %s34, 1
      %p351 = por %p349, %p350
      %p353 = scmp.ne.s32.totalorder %s338, %s352
      %p354 = scmp.eq.s32.totalorder %s34, 0
      %p355 = por %p353, %p354
      %s357 = sadd.s32 %s356, 1
      %p360 = scmp.eq.s32.totalorder %s28, 1
      %p361 = scmp.ne.s32.totalorder %s356, %s358
      %p362 = scmp.eq.s32.totalorder %s28, 0
      %p363 = por %p361, %p362
      %p364 = scmp.ne.s32.totalorder %s356, %s358
      %p365 = scmp.eq.s32.totalorder %s33, 1
      %p366 = por %p364, %p365
      %p367 = scmp.ne.s32.totalorder %s358, %s359
      %p368 = scmp.eq.s32.totalorder %s33, 0
      %p369 = por %p367, %p368
      %p370 = scmp.ne.s32.totalorder %s358, %s359
      %p371 = scmp.eq.s32.totalorder %s34, 1
      %p372 = por %p370, %p371
      %p374 = scmp.ne.s32.totalorder %s359, %s373
      %p375 = scmp.eq.s32.totalorder %s34, 0
      %p376 = por %p374, %p375
      %s378 = sadd.s32 %s377, 1
      %p381 = scmp.eq.s32.totalorder %s28, 1
      %p382 = scmp.ne.s32.totalorder %s377, %s379
      %p383 = scmp.eq.s32.totalorder %s28, 0
      %p384 = por %p382, %p383
      %p385 = scmp.ne.s32.totalorder %s377, %s379
      %p386 = scmp.eq.s32.totalorder %s33, 1
      %p387 = por %p385, %p386
      %p388 = scmp.ne.s32.totalorder %s379, %s380
      %p389 = scmp.eq.s32.totalorder %s33, 0
      %p390 = por %p388, %p389
      %p391 = scmp.ne.s32.totalorder %s379, %s380
      %p392 = scmp.eq.s32.totalorder %s34, 1
      %p393 = por %p391, %p392
      %p395 = scmp.ne.s32.totalorder %s380, %s394
      %p396 = scmp.eq.s32.totalorder %s34, 0
      %p397 = por %p395, %p396
      %s399 = sadd.s32 %s398, 1
      %p402 = scmp.eq.s32.totalorder %s28, 1
      %p403 = scmp.ne.s32.totalorder %s398, %s400
      %p404 = scmp.eq.s32.totalorder %s28, 0
      %p405 = por %p403, %p404
      %p406 = scmp.ne.s32.totalorder %s398, %s400
      %p407 = scmp.eq.s32.totalorder %s33, 1
      %p408 = por %p406, %p407
      %p409 = scmp.ne.s32.totalorder %s400, %s401
      %p410 = scmp.eq.s32.totalorder %s33, 0
      %p411 = por %p409, %p410
      %p412 = scmp.ne.s32.totalorder %s400, %s401
      %p413 = scmp.eq.s32.totalorder %s34, 1
      %p414 = por %p412, %p413
      %p416 = scmp.ne.s32.totalorder %s401, %s415
      %p417 = scmp.eq.s32.totalorder %s34, 0
      %p418 = por %p416, %p417
      %s420 = sadd.s32 %s419, 1
      %p423 = scmp.eq.s32.totalorder %s28, 1
      %p424 = scmp.ne.s32.totalorder %s419, %s421
      %p425 = scmp.eq.s32.totalorder %s28, 0
      %p426 = por %p424, %p425
      %p427 = scmp.ne.s32.totalorder %s419, %s421
      %p428 = scmp.eq.s32.totalorder %s33, 1
      %p429 = por %p427, %p428
      %p430 = scmp.ne.s32.totalorder %s421, %s422
      %p431 = scmp.eq.s32.totalorder %s33, 0
      %p432 = por %p430, %p431
      %p433 = scmp.ne.s32.totalorder %s421, %s422
      %p434 = scmp.eq.s32.totalorder %s34, 1
      %p435 = por %p433, %p434
      %p437 = scmp.ne.s32.totalorder %s422, %s436
      %p438 = scmp.eq.s32.totalorder %s34, 0
      %p439 = por %p437, %p438
      %s440 = ssub.s32 %s28, %s35
      %p441 = scmp.eq.s32.totalorder %s440, 0
      %s443 = sadd.s32 %s442, 1
      %s444 = scalar_select %p441, %s442, %s443
      %p447 = pneg %p441
      %p448 = scmp.eq.s32.totalorder %s28, 1
      %p449 = por %p447, %p448
      %p450 = scmp.ne.s32.totalorder %s442, %s445
      %p451 = scmp.eq.s32.totalorder %s28, 0
      %p452 = por %p450, %p451
      %p453 = scmp.ne.s32.totalorder %s442, %s445
      %p454 = scmp.eq.s32.totalorder %s33, 1
      %p455 = por %p453, %p454
      %p456 = scmp.ne.s32.totalorder %s445, %s446
      %p457 = scmp.eq.s32.totalorder %s33, 0
      %p458 = por %p456, %p457
      %p459 = scmp.ne.s32.totalorder %s445, %s446
      %p460 = scmp.eq.s32.totalorder %s34, 1
      %p461 = por %p459, %p460
      %p463 = scmp.ne.s32.totalorder %s446, %s462
      %p464 = scmp.eq.s32.totalorder %s34, 0
      %p465 = por %p463, %p464
      %p466 = scmp.le.s32.totalorder 1, %s28
      %p467 = scmp.lt.s32.totalorder %s28, 3
      %p468 = pnand %p466, %p467
      %p469 = pneg %p468
      // Predicated region
      $region9: #{feed_forward_classifier.1} parent=5 // pred_check
        _
      $region10: #{feed_forward_classifier.1} parent=5 // pred_check_branch
        %471 = sbr.rel (%p468) target = $region12
      $region11: #{feed_forward_classifier.1} parent=5 // pred_region
        %s472 = ssub.s32 %s28, 1
        // Predicated region
        $region13: #{feed_forward_classifier.1} parent=11 // pred_check
          %p473 = pneg %p75
        $region14: #{feed_forward_classifier.1} parent=11 // pred_check_branch
          %475 = sbr.rel (%p473) target = $region16
        $region15: #{feed_forward_classifier.1} parent=11 // pred_region
          _
        $region16: #{feed_forward_classifier.1} parent=11 // pred_fallthru
          _
        // Predicated region
        $region17: #{feed_forward_classifier.1} parent=11 // pred_check
          %p476 = pneg %p96
        $region18: #{feed_forward_classifier.1} parent=11 // pred_check_branch
          %478 = sbr.rel (%p476) target = $region20
        $region19: #{feed_forward_classifier.1} parent=11 // pred_region
          _
        $region20: #{feed_forward_classifier.1} parent=11 // pred_fallthru
          _
        // Predicated region
        $region21: #{feed_forward_classifier.1} parent=11 // pred_check
          %p479 = pneg %p117
        $region22: #{feed_forward_classifier.1} parent=11 // pred_check_branch
          %481 = sbr.rel (%p479) target = $region24
        $region23: #{feed_forward_classifier.1} parent=11 // pred_region
          _
        $region24: #{feed_forward_classifier.1} parent=11 // pred_fallthru
          _
        // Predicated region
        $region25: #{feed_forward_classifier.1} parent=11 // pred_check
          %p482 = pneg %p138
        $region26: #{feed_forward_classifier.1} parent=11 // pred_check_branch
          %484 = sbr.rel (%p482) target = $region28
        $region27: #{feed_forward_classifier.1} parent=11 // pred_region
          _
        $region28: #{feed_forward_classifier.1} parent=11 // pred_fallthru
          _
        // Predicated region
        $region29: #{feed_forward_classifier.1} parent=11 // pred_check
          %p485 = pneg %p159
        $region30: #{feed_forward_classifier.1} parent=11 // pred_check_branch
          %487 = sbr.rel (%p485) target = $region32
        $region31: #{feed_forward_classifier.1} parent=11 // pred_region
          _
        $region32: #{feed_forward_classifier.1} parent=11 // pred_fallthru
          _
        // Predicated region
        $region33: #{feed_forward_classifier.1} parent=11 // pred_check
          %p488 = pneg %p180
        $region34: #{feed_forward_classifier.1} parent=11 // pred_check_branch
          %490 = sbr.rel (%p488) target = $region36
        $region35: #{feed_forward_classifier.1} parent=11 // pred_region
          _
        $region36: #{feed_forward_classifier.1} parent=11 // pred_fallthru
          _
        // Predicated region
        $region37: #{feed_forward_classifier.1} parent=11 // pred_check
          %p491 = pneg %p201
        $region38: #{feed_forward_classifier.1} parent=11 // pred_check_branch
          %493 = sbr.rel (%p491) target = $region40
        $region39: #{feed_forward_classifier.1} parent=11 // pred_region
          _
        $region40: #{feed_forward_classifier.1} parent=11 // pred_fallthru
          _
        // Predicated region
        $region41: #{feed_forward_classifier.1} parent=11 // pred_check
          %p494 = pneg %p222
        $region42: #{feed_forward_classifier.1} parent=11 // pred_check_branch
          %496 = sbr.rel (%p494) target = $region44
        $region43: #{feed_forward_classifier.1} parent=11 // pred_region
          _
        $region44: #{feed_forward_classifier.1} parent=11 // pred_fallthru
          _
        // Predicated region
        $region45: #{feed_forward_classifier.1} parent=11 // pred_check
          %p497 = pneg %p243
        $region46: #{feed_forward_classifier.1} parent=11 // pred_check_branch
          %499 = sbr.rel (%p497) target = $region48
        $region47: #{feed_forward_classifier.1} parent=11 // pred_region
          _
        $region48: #{feed_forward_classifier.1} parent=11 // pred_fallthru
          _
        // Predicated region
        $region49: #{feed_forward_classifier.1} parent=11 // pred_check
          %p500 = pneg %p264
        $region50: #{feed_forward_classifier.1} parent=11 // pred_check_branch
          %502 = sbr.rel (%p500) target = $region52
        $region51: #{feed_forward_classifier.1} parent=11 // pred_region
          _
        $region52: #{feed_forward_classifier.1} parent=11 // pred_fallthru
          _
        // Predicated region
        $region53: #{feed_forward_classifier.1} parent=11 // pred_check
          %p503 = pneg %p285
        $region54: #{feed_forward_classifier.1} parent=11 // pred_check_branch
          %505 = sbr.rel (%p503) target = $region56
        $region55: #{feed_forward_classifier.1} parent=11 // pred_region
          _
        $region56: #{feed_forward_classifier.1} parent=11 // pred_fallthru
          _
        // Predicated region
        $region57: #{feed_forward_classifier.1} parent=11 // pred_check
          %p506 = pneg %p306
        $region58: #{feed_forward_classifier.1} parent=11 // pred_check_branch
          %508 = sbr.rel (%p506) target = $region60
        $region59: #{feed_forward_classifier.1} parent=11 // pred_region
          _
        $region60: #{feed_forward_classifier.1} parent=11 // pred_fallthru
          _
        // Predicated region
        $region61: #{feed_forward_classifier.1} parent=11 // pred_check
          %p509 = pneg %p327
        $region62: #{feed_forward_classifier.1} parent=11 // pred_check_branch
          %511 = sbr.rel (%p509) target = $region64
        $region63: #{feed_forward_classifier.1} parent=11 // pred_region
          _
        $region64: #{feed_forward_classifier.1} parent=11 // pred_fallthru
          _
        // Predicated region
        $region65: #{feed_forward_classifier.1} parent=11 // pred_check
          %p512 = pneg %p348
        $region66: #{feed_forward_classifier.1} parent=11 // pred_check_branch
          %514 = sbr.rel (%p512) target = $region68
        $region67: #{feed_forward_classifier.1} parent=11 // pred_region
          _
        $region68: #{feed_forward_classifier.1} parent=11 // pred_fallthru
          _
        // Predicated region
        $region69: #{feed_forward_classifier.1} parent=11 // pred_check
          %p515 = pneg %p369
        $region70: #{feed_forward_classifier.1} parent=11 // pred_check_branch
          %517 = sbr.rel (%p515) target = $region72
        $region71: #{feed_forward_classifier.1} parent=11 // pred_region
          _
        $region72: #{feed_forward_classifier.1} parent=11 // pred_fallthru
          _
        // Predicated region
        $region73: #{feed_forward_classifier.1} parent=11 // pred_check
          %p518 = pneg %p390
        $region74: #{feed_forward_classifier.1} parent=11 // pred_check_branch
          %520 = sbr.rel (%p518) target = $region76
        $region75: #{feed_forward_classifier.1} parent=11 // pred_region
          _
        $region76: #{feed_forward_classifier.1} parent=11 // pred_fallthru
          _
        // Predicated region
        $region77: #{feed_forward_classifier.1} parent=11 // pred_check
          %p521 = pneg %p411
        $region78: #{feed_forward_classifier.1} parent=11 // pred_check_branch
          %523 = sbr.rel (%p521) target = $region80
        $region79: #{feed_forward_classifier.1} parent=11 // pred_region
          _
        $region80: #{feed_forward_classifier.1} parent=11 // pred_fallthru
          _
        // Predicated region
        $region81: #{feed_forward_classifier.1} parent=11 // pred_check
          %p524 = pneg %p432
        $region82: #{feed_forward_classifier.1} parent=11 // pred_check_branch
          %526 = sbr.rel (%p524) target = $region84
        $region83: #{feed_forward_classifier.1} parent=11 // pred_region
          _
        $region84: #{feed_forward_classifier.1} parent=11 // pred_fallthru
          _
      $region12: #{feed_forward_classifier.1} parent=5 // pred_fallthru
        _
      %p527 = scmp.lt.s32.totalorder %s28, 2
      // Predicated region
      $region85: #{feed_forward_classifier.1} parent=5 // pred_check
        %p528 = pneg %p527
      $region86: #{feed_forward_classifier.1} parent=5 // pred_check_branch
        %530 = sbr.rel (%p528) target = $region88
      $region87: #{feed_forward_classifier.1} parent=5 // pred_region
        // Predicated region
        $region89: #{feed_forward_classifier.1} parent=87 // pred_check
          %p531 = pneg %p48
        $region90: #{feed_forward_classifier.1} parent=87 // pred_check_branch
          %533 = sbr.rel (%p531) target = $region92
        $region91: #{feed_forward_classifier.1} parent=87 // pred_region
          %p534 = scmp.lt.s32.totalorder %s28, 1
          %s535 = scalar_select %p534, %s28, 1
          %s536 = smul.addr %s535, 8
          %s537 = scalar_lea.vmem %s0, %s536
        $region92: #{feed_forward_classifier.1} parent=87 // pred_fallthru
          _
      $region88: #{feed_forward_classifier.1} parent=5 // pred_fallthru
        _
      %p538 = scmp.le.s32.totalorder 1, %s28
      %p539 = scmp.lt.s32.totalorder %s28, 3
      %p540 = pnand %p538, %p539
      %p541 = pneg %p540
      // Predicated region
      $region93: #{feed_forward_classifier.1} parent=5 // pred_check
        _
      $region94: #{feed_forward_classifier.1} parent=5 // pred_check_branch
        %543 = sbr.rel (%p540) target = $region96
      $region95: #{feed_forward_classifier.1} parent=5 // pred_region
        %s544 = ssub.s32 %s28, 1
        %p545 = scmp.lt.s32.totalorder %s33, 1
        %s546 = scalar_select %p545, %s33, 1
        %s547 = smul.addr %s546, 8
        %s548 = scalar_lea.vmem %s0, %s547
        %p549 = pneg %p54
        %p550 = pneg %p51
        %p551 = pneg %p75
        %p552 = pneg %p72
        %p553 = pneg %p96
        %p554 = pneg %p93
        %p555 = pneg %p117
        %p556 = pneg %p114
        %p557 = pneg %p138
        %p558 = pneg %p135
        %p559 = pneg %p159
        %p560 = pneg %p156
        %p561 = pneg %p180
        %p562 = pneg %p177
        %p563 = pneg %p201
        %p564 = pneg %p198
        %p565 = pneg %p222
        %p566 = pneg %p219
        %p567 = pneg %p243
        %p568 = pneg %p240
        %p569 = pneg %p264
        %p570 = pneg %p261
        %p571 = pneg %p285
        %p572 = pneg %p282
        %p573 = pneg %p306
        %p574 = pneg %p303
        %p575 = pneg %p327
        %p576 = pneg %p324
        %p577 = pneg %p348
        %p578 = pneg %p345
        %p579 = pneg %p369
        %p580 = pneg %p366
        %p581 = pneg %p390
        %p582 = pneg %p387
        %p583 = pneg %p411
        %p584 = pneg %p408
        %p585 = pneg %p432
        %p586 = pneg %p429
        %p587 = pneg %p458
        %p588 = pneg %p455
        %s589 = sand.u32 %s445, 1
        %s590 = scalar_lea.sflag [#allocation3], %s589
        %s591 = sand.u32 %s445, 1
        %s592 = scalar_lea.vmem [#allocation2], %s591
        %p593 = scmp.lt.s32.totalorder %s33, 1
        %s594 = scalar_select %p593, %s33, 1
        %s595 = smul.addr %s594, 8
        %s596 = scalar_lea.vmem %s0, %s595
        %v598 = vld [vmem:[%s596] sm:$0xff]
        %v599 = vlaneseq
        %v600 = vshrl.u32 %v599, 7
        %v601 = vlaneseq
        %v602 = vand.u32 %v601, 127
        %vm603 = vcmp.le.s32.totalorder %v602, %v600
        %v604 = vld [vmem:[%s1] sm:$0x1]
        %v605 = vld [vmem:[%s2] sm:$0x1]
        %vm606 = vcmask 261120
        %v607 = vsel %vm606, %v598, 0.0
        %608 = vadd.xlane.f32.xlu0 %v607
        %v609 = vpop.xlane.xlu0 %608
        %v610 = vrcp.pop 32.0
        %v611 = vmul.f32 %v609, %v610
        %v612 = vsub.f32 %v598, %v611
        %v613 = vmul.f32 %v612, %v612
        %v614 = vsel %vm606, %v613, 0.0
        %615 = vadd.xlane.f32.xlu0 %v614
        %v616 = vpop.xlane.xlu0 %615
        %v617 = vmul.f32 %v616, %v610
        %v618 = vadd.f32 %v617, 1e-05
        %v619 = vrsqrt.pop %v618
        %v620 = vmul.f32 %v612, %v619
        %v622 = vlaneseq
        %v623 = vshrl.u32 %v622, 7
        %v624 = vsub.s32 0, %v623
        %v625 = vrot.slane %v604, %v624
        %v627 = vmul.f32 %v620, %v625
        %v629 = vlaneseq
        %v630 = vshrl.u32 %v629, 7
        %v631 = vsub.s32 0, %v630
        %v632 = vrot.slane %v605, %v631
        %v634 = vadd.f32 %v627, %v632
        %v635 = vpack.c.bf16 %v634, %v634
        %v636 = vld [vmem:[%s3] sm:$0xf]
        %v637 = vld [vmem:[%s3 + $0x4] sm:$0xf]
        %v638 = vld [vmem:[%s3 + $0x8] sm:$0xf]
        %v639 = vld [vmem:[%s3 + $0xc] sm:$0xf]
        %v640 = vld [vmem:[%s4] sm:$0x1]
        %v642 = vlaneseq
        %v643 = vshrl.u32 %v642, 7
        %v644 = vsub.s32 0, %v643
        %v645 = vrot.slane %v640, %v644
        %v651 = vunpack.c.l.b16 %v636
        %v652 = vunpack.c.l.b16 %v637
        %v653 = vunpack.c.l.b16 %v638
        %v654 = vunpack.c.l.b16 %v639
        %v655 = vpack.c.b16 %v652, %v651
        %v656 = vpack.c.b16 %v654, %v653
        %v660 = vsel %vm606, %v635, 0
        %662 = vmatprep.subr.bf16.mxu0 0
        %663 = vmatpush1.bf16.msra.mxu0 0
        %664 = vmatprep.subr.bf16.mxu0 0
        %665 = vmatpush1.bf16.msra.mxu0 0
        %666 = vmatprep.subr.bf16.mxu0 0
        %667 = vmatpush1.bf16.msra.mxu0 0
        %668 = vmatprep.subr.bf16.mxu0 0
        %669 = vmatpush1.bf16.msra.mxu0 0
        %670 = vmatprep.subr.bf16.mxu0 0
        %671 = vmatpush1.bf16.msra.mxu0 0
        %672 = vmatprep.subr.bf16.mxu0 0
        %673 = vmatpush1.bf16.msra.mxu0 0
        %674 = vmatprep.subr.bf16.mxu0 0
        %675 = vmatpush1.bf16.msra.mxu0 %v656
        %676 = vmatprep.subr.bf16.mxu0 0
        %677 = vmatpush1.bf16.msra.mxu0 %v655
        %678 = vmatprep.subr.bf16.mxu0 0
        %679 = vmatpush2.bf16.msra.mxu0 0
        %680 = vmatprep.subr.bf16.mxu0 0
        %681 = vmatpush2.bf16.msra.mxu0 0
        %682 = vmatprep.subr.bf16.mxu0 0
        %683 = vmatpush2.bf16.msra.mxu0 0
        %684 = vmatprep.subr.bf16.mxu0 0
        %685 = vmatpush2.bf16.msra.mxu0 0
        %686 = vmatprep.subr.bf16.mxu0 0
        %687 = vmatpush2.bf16.msra.mxu0 0
        %688 = vmatprep.subr.bf16.mxu0 0
        %689 = vmatpush2.bf16.msra.mxu0 0
        %690 = vmatprep.subr.bf16.mxu0 0
        %691 = vmatpush2.bf16.msra.mxu0 0
        %692 = vmatprep.subr.bf16.mxu0 0
        %693 = vmatpush2.bf16.msra.mxu0 0
        %694 = vmatprep.mubr.bf16.mxu0 0
        %695 = vmatmul.mubr.bf16.gmra.mxu0 %v660
        %v696 = vpop.f32.mrf.mxu0
        %v697 = vadd.f32 %v645, %v696
        %v698 = vpop.f32.mrf.mxu0
        %v699 = vpop.f32.mrf.mxu0
        %v700 = vpop.f32.mrf.mxu0
        %701 = vdwg.mxu0
        %v702 = vpack.c.bf16 %v697, %v697
        %704 = vrot.lane.b32.xlu0 %v702, 96
        %v705 = vpop.permute.xlu0 %704
        %vm706 = vcmask 64512
        %v708 = vsel %vm706, %v702, 0
        %v711 = vsel %vm706, %v705, 0
        %713 = vmatprep.subr.bf16.mxu0 0
        %714 = vmatpush1.bf16.xpose.msra.mxu0 0
        %715 = vmatprep.subr.bf16.mxu0 0
        %716 = vmatpush1.bf16.xpose.msra.mxu0 0
        %717 = vmatprep.subr.bf16.mxu0 0
        %718 = vmatpush1.bf16.xpose.msra.mxu0 0
        %719 = vmatprep.subr.bf16.mxu0 0
        %720 = vmatpush1.bf16.xpose.msra.mxu0 0
        %721 = vmatprep.subr.bf16.mxu0 0
        %722 = vmatpush1.bf16.xpose.msra.mxu0 0
        %723 = vmatprep.subr.bf16.mxu0 0
        %724 = vmatpush1.bf16.xpose.msra.mxu0 0
        %725 = vmatprep.subr.bf16.mxu0 0
        %726 = vmatpush1.bf16.xpose.msra.mxu0 0
        %727 = vmatprep.subr.bf16.mxu0 0
        %728 = vmatpush1.bf16.xpose.msra.mxu0 %v711
        %729 = vmatprep.subr.bf16.mxu0 0
        %730 = vmatpush2.bf16.xpose.msra.mxu0 0
        %731 = vmatprep.subr.bf16.mxu0 0
        %732 = vmatpush2.bf16.xpose.msra.mxu0 0
        %733 = vmatprep.subr.bf16.mxu0 0
        %734 = vmatpush2.bf16.xpose.msra.mxu0 0
        %735 = vmatprep.subr.bf16.mxu0 0
        %736 = vmatpush2.bf16.xpose.msra.mxu0 0
        %737 = vmatprep.subr.bf16.mxu0 0
        %738 = vmatpush2.bf16.xpose.msra.mxu0 0
        %739 = vmatprep.subr.bf16.mxu0 0
        %740 = vmatpush2.bf16.xpose.msra.mxu0 0
        %741 = vmatprep.subr.bf16.mxu0 0
        %742 = vmatpush2.bf16.xpose.msra.mxu0 0
        %743 = vmatprep.subr.bf16.mxu0 0
        %744 = vmatpush2.bf16.xpose.msra.mxu0 0
        %745 = vmatprep.mubr.bf16.mxu0 0
        %746 = vmatmul.mubr.bf16.gmra.mxu0 %v708
        %v747 = vpop.f32.mrf.mxu0
        %v748 = vadd.f32 0.0, %v747
        %v749 = vpop.f32.mrf.mxu0
        %v750 = vpop.f32.mrf.mxu0
        %v751 = vpop.f32.mrf.mxu0
        %752 = vdwg.mxu0
        %v753 = vmul.f32 %v748, 0.35355338
        %v754 = vsel %vm603, %v753, -1e+30
        %v755 = vsel %vm706, %v754, -inf
        %756 = vmax.xlane.f32.xlu0 %v755
        %v757 = vpop.xlane.xlu0 %756
        %v758 = vsub.f32 %v754, %v757
        %v759 = vmul.f32 %v758, 1.442695
        %v760 = vpow.pop %v759
        %v761 = vsel %vm706, %v760, 0.0
        %762 = vadd.xlane.f32.xlu0 %v761
        %v763 = vpop.xlane.xlu0 %762
        %v764 = vrcp.pop %v763
        %v765 = vmul.f32 %v760, %v764
        %v766 = vpack.c.bf16 %v765, %v765
        %767 = vrot.lane.b32.xlu0 %v702, 64
        %v768 = vpop.permute.xlu0 %767
        %v770 = vsel %vm706, %v766, 0
        %vm772 = vcmask 1043456
        %v774 = vsel %vm772, %v768, 0
        %776 = vmatprep.subr.bf16.mxu0 0
        %777 = vmatpush1.bf16.msra.mxu0 0
        %778 = vmatprep.subr.bf16.mxu0 0
        %779 = vmatpush1.bf16.msra.mxu0 0
        %780 = vmatprep.subr.bf16.mxu0 0
        %781 = vmatpush1.bf16.msra.mxu0 0
        %782 = vmatprep.subr.bf16.mxu0 0
        %783 = vmatpush1.bf16.msra.mxu0 0
        %784 = vmatprep.subr.bf16.mxu0 0
        %785 = vmatpush1.bf16.msra.mxu0 0
        %786 = vmatprep.subr.bf16.mxu0 0
        %787 = vmatpush1.bf16.msra.mxu0 0
        %788 = vmatprep.subr.bf16.mxu0 0
        %789 = vmatpush1.bf16.msra.mxu0 0
        %790 = vmatprep.subr.bf16.mxu0 0
        %791 = vmatpush1.bf16.msra.mxu0 %v774
        %792 = vmatprep.subr.bf16.mxu0 0
        %793 = vmatpush2.bf16.msra.mxu0 0
        %794 = vmatprep.subr.bf16.mxu0 0
        %795 = vmatpush2.bf16.msra.mxu0 0
        %796 = vmatprep.subr.bf16.mxu0 0
        %797 = vmatpush2.bf16.msra.mxu0 0
        %798 = vmatprep.subr.bf16.mxu0 0
        %799 = vmatpush2.bf16.msra.mxu0 0
        %800 = vmatprep.subr.bf16.mxu0 0
        %801 = vmatpush2.bf16.msra.mxu0 0
        %802 = vmatprep.subr.bf16.mxu0 0
        %803 = vmatpush2.bf16.msra.mxu0 0
        %804 = vmatprep.subr.bf16.mxu0 0
        %805 = vmatpush2.bf16.msra.mxu0 0
        %806 = vmatprep.subr.bf16.mxu0 0
        %807 = vmatpush2.bf16.msra.mxu0 0
        %808 = vmatprep.mubr.bf16.mxu0 0
        %809 = vmatmul.mubr.bf16.gmra.mxu0 %v770
        %v810 = vpop.f32.mrf.mxu0
        %v811 = vadd.f32 0.0, %v810
        %v812 = vpop.f32.mrf.mxu0
        %v813 = vpop.f32.mrf.mxu0
        %v814 = vpop.f32.mrf.mxu0
        %815 = vdwg.mxu0
        %v816 = vld [vmem:[%s5] sm:$0xf]
        %v817 = vpack.c.bf16 %v811, %v811
        %818 = vrot.lane.b32.xlu0 %v702, 120
        %v819 = vpop.permute.xlu0 %818
        %820 = vrot.lane.b32.xlu0 %v702, 88
        %v821 = vpop.permute.xlu0 %820
        %v823 = vsel %vm706, %v819, 0
        %v826 = vsel %vm706, %v821, 0
        %828 = vmatprep.subr.bf16.mxu0 0
        %829 = vmatpush1.bf16.xpose.msra.mxu0 0
        %830 = vmatprep.subr.bf16.mxu0 0
        %831 = vmatpush1.bf16.xpose.msra.mxu0 0
        %832 = vmatprep.subr.bf16.mxu0 0
        %833 = vmatpush1.bf16.xpose.msra.mxu0 0
        %834 = vmatprep.subr.bf16.mxu0 0
        %835 = vmatpush1.bf16.xpose.msra.mxu0 0
        %836 = vmatprep.subr.bf16.mxu0 0
        %837 = vmatpush1.bf16.xpose.msra.mxu0 0
        %838 = vmatprep.subr.bf16.mxu0 0
        %839 = vmatpush1.bf16.xpose.msra.mxu0 0
        %840 = vmatprep.subr.bf16.mxu0 0
        %841 = vmatpush1.bf16.xpose.msra.mxu0 0
        %842 = vmatprep.subr.bf16.mxu0 0
        %843 = vmatpush1.bf16.xpose.msra.mxu0 %v826
        %844 = vmatprep.subr.bf16.mxu0 0
        %845 = vmatpush2.bf16.xpose.msra.mxu0 0
        %846 = vmatprep.subr.bf16.mxu0 0
        %847 = vmatpush2.bf16.xpose.msra.mxu0 0
        %848 = vmatprep.subr.bf16.mxu0 0
        %849 = vmatpush2.bf16.xpose.msra.mxu0 0
        %850 = vmatprep.subr.bf16.mxu0 0
        %851 = vmatpush2.bf16.xpose.msra.mxu0 0
        %852 = vmatprep.subr.bf16.mxu0 0
        %853 = vmatpush2.bf16.xpose.msra.mxu0 0
        %854 = vmatprep.subr.bf16.mxu0 0
        %855 = vmatpush2.bf16.xpose.msra.mxu0 0
        %856 = vmatprep.subr.bf16.mxu0 0
        %857 = vmatpush2.bf16.xpose.msra.mxu0 0
        %858 = vmatprep.subr.bf16.mxu0 0
        %859 = vmatpush2.bf16.xpose.msra.mxu0 0
        %860 = vmatprep.mubr.bf16.mxu0 0
        %861 = vmatmul.mubr.bf16.gmra.mxu0 %v823
        %v862 = vpop.f32.mrf.mxu0
        %v863 = vadd.f32 0.0, %v862
        %v864 = vpop.f32.mrf.mxu0
        %v865 = vpop.f32.mrf.mxu0
        %v866 = vpop.f32.mrf.mxu0
        %867 = vdwg.mxu0
        %v868 = vmul.f32 %v863, 0.35355338
        %v869 = vsel %vm603, %v868, -1e+30
        %v870 = vsel %vm706, %v869, -inf
        %871 = vmax.xlane.f32.xlu0 %v870
        %v872 = vpop.xlane.xlu0 %871
        %v873 = vsub.f32 %v869, %v872
        %v874 = vmul.f32 %v873, 1.442695
        %v875 = vpow.pop %v874
        %v876 = vsel %vm706, %v875, 0.0
        %877 = vadd.xlane.f32.xlu0 %v876
        %v878 = vpop.xlane.xlu0 %877
        %v879 = vrcp.pop %v878
        %v880 = vmul.f32 %v875, %v879
        %v881 = vpack.c.bf16 %v880, %v880
        %882 = vrot.lane.b32.xlu0 %v702, 56
        %v883 = vpop.permute.xlu0 %882
        %v885 = vsel %vm706, %v881, 0
        %v888 = vsel %vm772, %v883, 0
        %890 = vmatprep.subr.bf16.mxu0 0
        %891 = vmatpush1.bf16.msra.mxu0 0
        %892 = vmatprep.subr.bf16.mxu0 0
        %893 = vmatpush1.bf16.msra.mxu0 0
        %894 = vmatprep.subr.bf16.mxu0 0
        %895 = vmatpush1.bf16.msra.mxu0 0
        %896 = vmatprep.subr.bf16.mxu0 0
        %897 = vmatpush1.bf16.msra.mxu0 0
        %898 = vmatprep.subr.bf16.mxu0 0
        %899 = vmatpush1.bf16.msra.mxu0 0
        %900 = vmatprep.subr.bf16.mxu0 0
        %901 = vmatpush1.bf16.msra.mxu0 0
        %902 = vmatprep.subr.bf16.mxu0 0
        %903 = vmatpush1.bf16.msra.mxu0 0
        %904 = vmatprep.subr.bf16.mxu0 0
        %905 = vmatpush1.bf16.msra.mxu0 %v888
        %906 = vmatprep.subr.bf16.mxu0 0
        %907 = vmatpush2.bf16.msra.mxu0 0
        %908 = vmatprep.subr.bf16.mxu0 0
        %909 = vmatpush2.bf16.msra.mxu0 0
        %910 = vmatprep.subr.bf16.mxu0 0
        %911 = vmatpush2.bf16.msra.mxu0 0
        %912 = vmatprep.subr.bf16.mxu0 0
        %913 = vmatpush2.bf16.msra.mxu0 0
        %914 = vmatprep.subr.bf16.mxu0 0
        %915 = vmatpush2.bf16.msra.mxu0 0
        %916 = vmatprep.subr.bf16.mxu0 0
        %917 = vmatpush2.bf16.msra.mxu0 0
        %918 = vmatprep.subr.bf16.mxu0 0
        %919 = vmatpush2.bf16.msra.mxu0 0
        %920 = vmatprep.subr.bf16.mxu0 0
        %921 = vmatpush2.bf16.msra.mxu0 0
        %922 = vmatprep.mubr.bf16.mxu0 0
        %923 = vmatmul.mubr.bf16.gmra.mxu0 %v885
        %v924 = vpop.f32.mrf.mxu0
        %v925 = vadd.f32 0.0, %v924
        %v926 = vpop.f32.mrf.mxu0
        %v927 = vpop.f32.mrf.mxu0
        %v928 = vpop.f32.mrf.mxu0
        %929 = vdwg.mxu0
        %v930 = vld [vmem:[%s5 + $0x4] sm:$0xf]
        %v931 = vpack.c.bf16 %v925, %v925
        %v933 = vsel %vm706, %v931, 0
        %v936 = vsel %vm772, %v930, 0
        %938 = vmatprep.subr.bf16.mxu0 0
        %939 = vmatpush1.bf16.msra.mxu0 0
        %940 = vmatprep.subr.bf16.mxu0 0
        %941 = vmatpush1.bf16.msra.mxu0 0
        %942 = vmatprep.subr.bf16.mxu0 0
        %943 = vmatpush1.bf16.msra.mxu0 0
        %944 = vmatprep.subr.bf16.mxu0 0
        %945 = vmatpush1.bf16.msra.mxu0 0
        %946 = vmatprep.subr.bf16.mxu0 0
        %947 = vmatpush1.bf16.msra.mxu0 0
        %948 = vmatprep.subr.bf16.mxu0 0
        %949 = vmatpush1.bf16.msra.mxu0 0
        %950 = vmatprep.subr.bf16.mxu0 0
        %951 = vmatpush1.bf16.msra.mxu0 0
        %952 = vmatprep.subr.bf16.mxu0 0
        %953 = vmatpush1.bf16.msra.mxu0 %v936
        %954 = vmatprep.subr.bf16.mxu0 0
        %955 = vmatpush2.bf16.msra.mxu0 0
        %956 = vmatprep.subr.bf16.mxu0 0
        %957 = vmatpush2.bf16.msra.mxu0 0
        %958 = vmatprep.subr.bf16.mxu0 0
        %959 = vmatpush2.bf16.msra.mxu0 0
        %960 = vmatprep.subr.bf16.mxu0 0
        %961 = vmatpush2.bf16.msra.mxu0 0
        %962 = vmatprep.subr.bf16.mxu0 0
        %963 = vmatpush2.bf16.msra.mxu0 0
        %964 = vmatprep.subr.bf16.mxu0 0
        %965 = vmatpush2.bf16.msra.mxu0 0
        %966 = vmatprep.subr.bf16.mxu0 0
        %967 = vmatpush2.bf16.msra.mxu0 0
        %968 = vmatprep.subr.bf16.mxu0 0
        %969 = vmatpush2.bf16.msra.mxu0 0
        %970 = vmatprep.mubr.bf16.mxu0 0
        %971 = vmatmul.mubr.bf16.gmra.mxu0 %v933
        %v972 = vpop.f32.mrf.mxu0
        %v973 = vadd.f32 0.0, %v972
        %v974 = vpop.f32.mrf.mxu0
        %v975 = vpop.f32.mrf.mxu0
        %v976 = vpop.f32.mrf.mxu0
        %977 = vdwg.mxu0
        %v979 = vsel %vm706, %v817, 0
        %v982 = vsel %vm772, %v816, 0
        %984 = vmatprep.subr.bf16.mxu0 0
        %985 = vmatpush1.bf16.msra.mxu0 0
        %986 = vmatprep.subr.bf16.mxu0 0
        %987 = vmatpush1.bf16.msra.mxu0 0
        %988 = vmatprep.subr.bf16.mxu0 0
        %989 = vmatpush1.bf16.msra.mxu0 0
        %990 = vmatprep.subr.bf16.mxu0 0
        %991 = vmatpush1.bf16.msra.mxu0 0
        %992 = vmatprep.subr.bf16.mxu0 0
        %993 = vmatpush1.bf16.msra.mxu0 0
        %994 = vmatprep.subr.bf16.mxu0 0
        %995 = vmatpush1.bf16.msra.mxu0 0
        %996 = vmatprep.subr.bf16.mxu0 0
        %997 = vmatpush1.bf16.msra.mxu0 0
        %998 = vmatprep.subr.bf16.mxu0 0
        %999 = vmatpush1.bf16.msra.mxu0 %v982
        %1000 = vmatprep.subr.bf16.mxu0 0
        %1001 = vmatpush2.bf16.msra.mxu0 0
        %1002 = vmatprep.subr.bf16.mxu0 0
        %1003 = vmatpush2.bf16.msra.mxu0 0
        %1004 = vmatprep.subr.bf16.mxu0 0
        %1005 = vmatpush2.bf16.msra.mxu0 0
        %1006 = vmatprep.subr.bf16.mxu0 0
        %1007 = vmatpush2.bf16.msra.mxu0 0
        %1008 = vmatprep.subr.bf16.mxu0 0
        %1009 = vmatpush2.bf16.msra.mxu0 0
        %1010 = vmatprep.subr.bf16.mxu0 0
        %1011 = vmatpush2.bf16.msra.mxu0 0
        %1012 = vmatprep.subr.bf16.mxu0 0
        %1013 = vmatpush2.bf16.msra.mxu0 0
        %1014 = vmatprep.subr.bf16.mxu0 0
        %1015 = vmatpush2.bf16.msra.mxu0 0
        %1016 = vmatprep.mubr.bf16.mxu0 0
        %1017 = vmatmul.mubr.bf16.gmra.mxu0 %v979
        %v1018 = vpop.f32.mrf.mxu0
        %v1019 = vadd.f32 %v973, %v1018
        %v1020 = vpop.f32.mrf.mxu0
        %v1021 = vpop.f32.mrf.mxu0
        %v1022 = vpop.f32.mrf.mxu0
        %1023 = vdwg.mxu0
        %1024 = vrot.lane.b32.xlu0 %v702, 112
        %v1025 = vpop.permute.xlu0 %1024
        %1026 = vrot.lane.b32.xlu0 %v702, 80
        %v1027 = vpop.permute.xlu0 %1026
        %v1029 = vsel %vm706, %v1025, 0
        %v1032 = vsel %vm706, %v1027, 0
        %1034 = vmatprep.subr.bf16.mxu0 0
        %1035 = vmatpush1.bf16.xpose.msra.mxu0 0
        %1036 = vmatprep.subr.bf16.mxu0 0
        %1037 = vmatpush1.bf16.xpose.msra.mxu0 0
        %1038 = vmatprep.subr.bf16.mxu0 0
        %1039 = vmatpush1.bf16.xpose.msra.mxu0 0
        %1040 = vmatprep.subr.bf16.mxu0 0
        %1041 = vmatpush1.bf16.xpose.msra.mxu0 0
        %1042 = vmatprep.subr.bf16.mxu0 0
        %1043 = vmatpush1.bf16.xpose.msra.mxu0 0
        %1044 = vmatprep.subr.bf16.mxu0 0
        %1045 = vmatpush1.bf16.xpose.msra.mxu0 0
        %1046 = vmatprep.subr.bf16.mxu0 0
        %1047 = vmatpush1.bf16.xpose.msra.mxu0 0
        %1048 = vmatprep.subr.bf16.mxu0 0
        %1049 = vmatpush1.bf16.xpose.msra.mxu0 %v1032
        %1050 = vmatprep.subr.bf16.mxu0 0
        %1051 = vmatpush2.bf16.xpose.msra.mxu0 0
        %1052 = vmatprep.subr.bf16.mxu0 0
        %1053 = vmatpush2.bf16.xpose.msra.mxu0 0
        %1054 = vmatprep.subr.bf16.mxu0 0
        %1055 = vmatpush2.bf16.xpose.msra.mxu0 0
        %1056 = vmatprep.subr.bf16.mxu0 0
        %1057 = vmatpush2.bf16.xpose.msra.mxu0 0
        %1058 = vmatprep.subr.bf16.mxu0 0
        %1059 = vmatpush2.bf16.xpose.msra.mxu0 0
        %1060 = vmatprep.subr.bf16.mxu0 0
        %1061 = vmatpush2.bf16.xpose.msra.mxu0 0
        %1062 = vmatprep.subr.bf16.mxu0 0
        %1063 = vmatpush2.bf16.xpose.msra.mxu0 0
        %1064 = vmatprep.subr.bf16.mxu0 0
        %1065 = vmatpush2.bf16.xpose.msra.mxu0 0
        %1066 = vmatprep.mubr.bf16.mxu0 0
        %1067 = vmatmul.mubr.bf16.gmra.mxu0 %v1029
        %v1068 = vpop.f32.mrf.mxu0
        %v1069 = vadd.f32 0.0, %v1068
        %v1070 = vpop.f32.mrf.mxu0
        %v1071 = vpop.f32.mrf.mxu0
        %v1072 = vpop.f32.mrf.mxu0
        %1073 = vdwg.mxu0
        %v1074 = vmul.f32 %v1069, 0.35355338
        %v1075 = vsel %vm603, %v1074, -1e+30
        %v1076 = vsel %vm706, %v1075, -inf
        %1077 = vmax.xlane.f32.xlu0 %v1076
        %v1078 = vpop.xlane.xlu0 %1077
        %v1079 = vsub.f32 %v1075, %v1078
        %v1080 = vmul.f32 %v1079, 1.442695
        %v1081 = vpow.pop %v1080
        %v1082 = vsel %vm706, %v1081, 0.0
        %1083 = vadd.xlane.f32.xlu0 %v1082
        %v1084 = vpop.xlane.xlu0 %1083
        %v1085 = vrcp.pop %v1084
        %v1086 = vmul.f32 %v1081, %v1085
        %v1087 = vpack.c.bf16 %v1086, %v1086
        %1088 = vrot.lane.b32.xlu0 %v702, 48
        %v1089 = vpop.permute.xlu0 %1088
        %v1091 = vsel %vm706, %v1087, 0
        %v1094 = vsel %vm772, %v1089, 0
        %1096 = vmatprep.subr.bf16.mxu0 0
        %1097 = vmatpush1.bf16.msra.mxu0 0
        %1098 = vmatprep.subr.bf16.mxu0 0
        %1099 = vmatpush1.bf16.msra.mxu0 0
        %1100 = vmatprep.subr.bf16.mxu0 0
        %1101 = vmatpush1.bf16.msra.mxu0 0
        %1102 = vmatprep.subr.bf16.mxu0 0
        %1103 = vmatpush1.bf16.msra.mxu0 0
        %1104 = vmatprep.subr.bf16.mxu0 0
        %1105 = vmatpush1.bf16.msra.mxu0 0
        %1106 = vmatprep.subr.bf16.mxu0 0
        %1107 = vmatpush1.bf16.msra.mxu0 0
        %1108 = vmatprep.subr.bf16.mxu0 0
        %1109 = vmatpush1.bf16.msra.mxu0 0
        %1110 = vmatprep.subr.bf16.mxu0 0
        %1111 = vmatpush1.bf16.msra.mxu0 %v1094
        %1112 = vmatprep.subr.bf16.mxu0 0
        %1113 = vmatpush2.bf16.msra.mxu0 0
        %1114 = vmatprep.subr.bf16.mxu0 0
        %1115 = vmatpush2.bf16.msra.mxu0 0
        %1116 = vmatprep.subr.bf16.mxu0 0
        %1117 = vmatpush2.bf16.msra.mxu0 0
        %1118 = vmatprep.subr.bf16.mxu0 0
        %1119 = vmatpush2.bf16.msra.mxu0 0
        %1120 = vmatprep.subr.bf16.mxu0 0
        %1121 = vmatpush2.bf16.msra.mxu0 0
        %1122 = vmatprep.subr.bf16.mxu0 0
        %1123 = vmatpush2.bf16.msra.mxu0 0
        %1124 = vmatprep.subr.bf16.mxu0 0
        %1125 = vmatpush2.bf16.msra.mxu0 0
        %1126 = vmatprep.subr.bf16.mxu0 0
        %1127 = vmatpush2.bf16.msra.mxu0 0
        %1128 = vmatprep.mubr.bf16.mxu0 0
        %1129 = vmatmul.mubr.bf16.gmra.mxu0 %v1091
        %v1130 = vpop.f32.mrf.mxu0
        %v1131 = vadd.f32 0.0, %v1130
        %v1132 = vpop.f32.mrf.mxu0
        %v1133 = vpop.f32.mrf.mxu0
        %v1134 = vpop.f32.mrf.mxu0
        %1135 = vdwg.mxu0
        %v1136 = vld [vmem:[%s5 + $0x8] sm:$0xf]
        %v1137 = vpack.c.bf16 %v1131, %v1131
        %v1139 = vsel %vm706, %v1137, 0
        %v1142 = vsel %vm772, %v1136, 0
        %1144 = vmatprep.subr.bf16.mxu0 0
        %1145 = vmatpush1.bf16.msra.mxu0 0
        %1146 = vmatprep.subr.bf16.mxu0 0
        %1147 = vmatpush1.bf16.msra.mxu0 0
        %1148 = vmatprep.subr.bf16.mxu0 0
        %1149 = vmatpush1.bf16.msra.mxu0 0
        %1150 = vmatprep.subr.bf16.mxu0 0
        %1151 = vmatpush1.bf16.msra.mxu0 0
        %1152 = vmatprep.subr.bf16.mxu0 0
        %1153 = vmatpush1.bf16.msra.mxu0 0
        %1154 = vmatprep.subr.bf16.mxu0 0
        %1155 = vmatpush1.bf16.msra.mxu0 0
        %1156 = vmatprep.subr.bf16.mxu0 0
        %1157 = vmatpush1.bf16.msra.mxu0 0
        %1158 = vmatprep.subr.bf16.mxu0 0
        %1159 = vmatpush1.bf16.msra.mxu0 %v1142
        %1160 = vmatprep.subr.bf16.mxu0 0
        %1161 = vmatpush2.bf16.msra.mxu0 0
        %1162 = vmatprep.subr.bf16.mxu0 0
        %1163 = vmatpush2.bf16.msra.mxu0 0
        %1164 = vmatprep.subr.bf16.mxu0 0
        %1165 = vmatpush2.bf16.msra.mxu0 0
        %1166 = vmatprep.subr.bf16.mxu0 0
        %1167 = vmatpush2.bf16.msra.mxu0 0
        %1168 = vmatprep.subr.bf16.mxu0 0
        %1169 = vmatpush2.bf16.msra.mxu0 0
        %1170 = vmatprep.subr.bf16.mxu0 0
        %1171 = vmatpush2.bf16.msra.mxu0 0
        %1172 = vmatprep.subr.bf16.mxu0 0
        %1173 = vmatpush2.bf16.msra.mxu0 0
        %1174 = vmatprep.subr.bf16.mxu0 0
        %1175 = vmatpush2.bf16.msra.mxu0 0
        %1176 = vmatprep.mubr.bf16.mxu0 0
        %1177 = vmatmul.mubr.bf16.gmra.mxu0 %v1139
        %v1178 = vpop.f32.mrf.mxu0
        %v1179 = vadd.f32 0.0, %v1178
        %v1180 = vpop.f32.mrf.mxu0
        %v1181 = vpop.f32.mrf.mxu0
        %v1182 = vpop.f32.mrf.mxu0
        %1183 = vdwg.mxu0
        %v1184 = vadd.f32 %v1019, %v1179
        %1185 = vrot.lane.b32.xlu0 %v702, 104
        %v1186 = vpop.permute.xlu0 %1185
        %1187 = vrot.lane.b32.xlu0 %v702, 72
        %v1188 = vpop.permute.xlu0 %1187
        %v1190 = vsel %vm706, %v1186, 0
        %v1193 = vsel %vm706, %v1188, 0
        %1195 = vmatprep.subr.bf16.mxu0 0
        %1196 = vmatpush1.bf16.xpose.msra.mxu0 0
        %1197 = vmatprep.subr.bf16.mxu0 0
        %1198 = vmatpush1.bf16.xpose.msra.mxu0 0
        %1199 = vmatprep.subr.bf16.mxu0 0
        %1200 = vmatpush1.bf16.xpose.msra.mxu0 0
        %1201 = vmatprep.subr.bf16.mxu0 0
        %1202 = vmatpush1.bf16.xpose.msra.mxu0 0
        %1203 = vmatprep.subr.bf16.mxu0 0
        %1204 = vmatpush1.bf16.xpose.msra.mxu0 0
        %1205 = vmatprep.subr.bf16.mxu0 0
        %1206 = vmatpush1.bf16.xpose.msra.mxu0 0
        %1207 = vmatprep.subr.bf16.mxu0 0
        %1208 = vmatpush1.bf16.xpose.msra.mxu0 0
        %1209 = vmatprep.subr.bf16.mxu0 0
        %1210 = vmatpush1.bf16.xpose.msra.mxu0 %v1193
        %1211 = vmatprep.subr.bf16.mxu0 0
        %1212 = vmatpush2.bf16.xpose.msra.mxu0 0
        %1213 = vmatprep.subr.bf16.mxu0 0
        %1214 = vmatpush2.bf16.xpose.msra.mxu0 0
        %1215 = vmatprep.subr.bf16.mxu0 0
        %1216 = vmatpush2.bf16.xpose.msra.mxu0 0
        %1217 = vmatprep.subr.bf16.mxu0 0
        %1218 = vmatpush2.bf16.xpose.msra.mxu0 0
        %1219 = vmatprep.subr.bf16.mxu0 0
        %1220 = vmatpush2.bf16.xpose.msra.mxu0 0
        %1221 = vmatprep.subr.bf16.mxu0 0
        %1222 = vmatpush2.bf16.xpose.msra.mxu0 0
        %1223 = vmatprep.subr.bf16.mxu0 0
        %1224 = vmatpush2.bf16.xpose.msra.mxu0 0
        %1225 = vmatprep.subr.bf16.mxu0 0
        %1226 = vmatpush2.bf16.xpose.msra.mxu0 0
        %1227 = vmatprep.mubr.bf16.mxu0 0
        %1228 = vmatmul.mubr.bf16.gmra.mxu0 %v1190
        %v1229 = vpop.f32.mrf.mxu0
        %v1230 = vadd.f32 0.0, %v1229
        %v1231 = vpop.f32.mrf.mxu0
        %v1232 = vpop.f32.mrf.mxu0
        %v1233 = vpop.f32.mrf.mxu0
        %1234 = vdwg.mxu0
        %v1235 = vmul.f32 %v1230, 0.35355338
        %v1236 = vsel %vm603, %v1235, -1e+30
        %v1237 = vsel %vm706, %v1236, -inf
        %1238 = vmax.xlane.f32.xlu0 %v1237
        %v1239 = vpop.xlane.xlu0 %1238
        %v1240 = vsub.f32 %v1236, %v1239
        %v1241 = vmul.f32 %v1240, 1.442695
        %v1242 = vpow.pop %v1241
        %v1243 = vsel %vm706, %v1242, 0.0
        %1244 = vadd.xlane.f32.xlu0 %v1243
        %v1245 = vpop.xlane.xlu0 %1244
        %v1246 = vrcp.pop %v1245
        %v1247 = vmul.f32 %v1242, %v1246
        %v1248 = vpack.c.bf16 %v1247, %v1247
        %1249 = vrot.lane.b32.xlu0 %v702, 40
        %v1250 = vpop.permute.xlu0 %1249
        %v1252 = vsel %vm706, %v1248, 0
        %v1255 = vsel %vm772, %v1250, 0
        %1257 = vmatprep.subr.bf16.mxu0 0
        %1258 = vmatpush1.bf16.msra.mxu0 0
        %1259 = vmatprep.subr.bf16.mxu0 0
        %1260 = vmatpush1.bf16.msra.mxu0 0
        %1261 = vmatprep.subr.bf16.mxu0 0
        %1262 = vmatpush1.bf16.msra.mxu0 0
        %1263 = vmatprep.subr.bf16.mxu0 0
        %1264 = vmatpush1.bf16.msra.mxu0 0
        %1265 = vmatprep.subr.bf16.mxu0 0
        %1266 = vmatpush1.bf16.msra.mxu0 0
        %1267 = vmatprep.subr.bf16.mxu0 0
        %1268 = vmatpush1.bf16.msra.mxu0 0
        %1269 = vmatprep.subr.bf16.mxu0 0
        %1270 = vmatpush1.bf16.msra.mxu0 0
        %1271 = vmatprep.subr.bf16.mxu0 0
        %1272 = vmatpush1.bf16.msra.mxu0 %v1255
        %1273 = vmatprep.subr.bf16.mxu0 0
        %1274 = vmatpush2.bf16.msra.mxu0 0
        %1275 = vmatprep.subr.bf16.mxu0 0
        %1276 = vmatpush2.bf16.msra.mxu0 0
        %1277 = vmatprep.subr.bf16.mxu0 0
        %1278 = vmatpush2.bf16.msra.mxu0 0
        %1279 = vmatprep.subr.bf16.mxu0 0
        %1280 = vmatpush2.bf16.msra.mxu0 0
        %1281 = vmatprep.subr.bf16.mxu0 0
        %1282 = vmatpush2.bf16.msra.mxu0 0
        %1283 = vmatprep.subr.bf16.mxu0 0
        %1284 = vmatpush2.bf16.msra.mxu0 0
        %1285 = vmatprep.subr.bf16.mxu0 0
        %1286 = vmatpush2.bf16.msra.mxu0 0
        %1287 = vmatprep.subr.bf16.mxu0 0
        %1288 = vmatpush2.bf16.msra.mxu0 0
        %1289 = vmatprep.mubr.bf16.mxu0 0
        %1290 = vmatmul.mubr.bf16.gmra.mxu0 %v1252
        %v1291 = vpop.f32.mrf.mxu0
        %v1292 = vadd.f32 0.0, %v1291
        %v1293 = vpop.f32.mrf.mxu0
        %v1294 = vpop.f32.mrf.mxu0
        %v1295 = vpop.f32.mrf.mxu0
        %1296 = vdwg.mxu0
        %v1297 = vld [vmem:[%s5 + $0xc] sm:$0xf]
        %v1298 = vpack.c.bf16 %v1292, %v1292
        %v1300 = vsel %vm706, %v1298, 0
        %v1303 = vsel %vm772, %v1297, 0
        %1305 = vmatprep.subr.bf16.mxu0 0
        %1306 = vmatpush1.bf16.msra.mxu0 0
        %1307 = vmatprep.subr.bf16.mxu0 0
        %1308 = vmatpush1.bf16.msra.mxu0 0
        %1309 = vmatprep.subr.bf16.mxu0 0
        %1310 = vmatpush1.bf16.msra.mxu0 0
        %1311 = vmatprep.subr.bf16.mxu0 0
        %1312 = vmatpush1.bf16.msra.mxu0 0
        %1313 = vmatprep.subr.bf16.mxu0 0
        %1314 = vmatpush1.bf16.msra.mxu0 0
        %1315 = vmatprep.subr.bf16.mxu0 0
        %1316 = vmatpush1.bf16.msra.mxu0 0
        %1317 = vmatprep.subr.bf16.mxu0 0
        %1318 = vmatpush1.bf16.msra.mxu0 0
        %1319 = vmatprep.subr.bf16.mxu0 0
        %1320 = vmatpush1.bf16.msra.mxu0 %v1303
        %1321 = vmatprep.subr.bf16.mxu0 0
        %1322 = vmatpush2.bf16.msra.mxu0 0
        %1323 = vmatprep.subr.bf16.mxu0 0
        %1324 = vmatpush2.bf16.msra.mxu0 0
        %1325 = vmatprep.subr.bf16.mxu0 0
        %1326 = vmatpush2.bf16.msra.mxu0 0
        %1327 = vmatprep.subr.bf16.mxu0 0
        %1328 = vmatpush2.bf16.msra.mxu0 0
        %1329 = vmatprep.subr.bf16.mxu0 0
        %1330 = vmatpush2.bf16.msra.mxu0 0
        %1331 = vmatprep.subr.bf16.mxu0 0
        %1332 = vmatpush2.bf16.msra.mxu0 0
        %1333 = vmatprep.subr.bf16.mxu0 0
        %1334 = vmatpush2.bf16.msra.mxu0 0
        %1335 = vmatprep.subr.bf16.mxu0 0
        %1336 = vmatpush2.bf16.msra.mxu0 0
        %1337 = vmatprep.mubr.bf16.mxu0 0
        %1338 = vmatmul.mubr.bf16.gmra.mxu0 %v1300
        %v1339 = vpop.f32.mrf.mxu0
        %v1340 = vadd.f32 0.0, %v1339
        %v1341 = vpop.f32.mrf.mxu0
        %v1342 = vpop.f32.mrf.mxu0
        %v1343 = vpop.f32.mrf.mxu0
        %1344 = vdwg.mxu0
        %v1345 = vadd.f32 %v1184, %v1340
        %v1346 = vadd.f32 %v598, %v1345
        %v1347 = vld [vmem:[%s6] sm:$0x1]
        %v1349 = vlaneseq
        %v1350 = vshrl.u32 %v1349, 7
        %v1351 = vsub.s32 0, %v1350
        %v1352 = vrot.slane %v1347, %v1351
        %v1354 = vadd.f32 %v1346, %v1352
        %v1355 = vld [vmem:[%s7] sm:$0x1]
        %v1356 = vld [vmem:[%s8] sm:$0x1]
        %v1357 = vsel %vm606, %v1354, 0.0
        %1358 = vadd.xlane.f32.xlu0 %v1357
        %v1359 = vpop.xlane.xlu0 %1358
        %v1360 = vmul.f32 %v1359, %v610
        %v1361 = vsub.f32 %v1354, %v1360
        %v1362 = vmul.f32 %v1361, %v1361
        %v1363 = vsel %vm606, %v1362, 0.0
        %1364 = vadd.xlane.f32.xlu0 %v1363
        %v1365 = vpop.xlane.xlu0 %1364
        %v1366 = vmul.f32 %v1365, %v610
        %v1367 = vadd.f32 %v1366, 1e-05
        %v1368 = vrsqrt.pop %v1367
        %v1369 = vmul.f32 %v1361, %v1368
        %v1371 = vlaneseq
        %v1372 = vshrl.u32 %v1371, 7
        %v1373 = vsub.s32 0, %v1372
        %v1374 = vrot.slane %v1355, %v1373
        %v1376 = vmul.f32 %v1369, %v1374
        %v1378 = vlaneseq
        %v1379 = vshrl.u32 %v1378, 7
        %v1380 = vsub.s32 0, %v1379
        %v1381 = vrot.slane %v1356, %v1380
        %v1383 = vadd.f32 %v1376, %v1381
        %v1384 = vpack.c.bf16 %v1383, %v1383
        %v1385 = vld [vmem:[%s9] sm:$0xf]
        %v1386 = vld [vmem:[%s9 + $0x4] sm:$0xf]
        %v1387 = vld [vmem:[%s9 + $0x8] sm:$0xf]
        %v1388 = vld [vmem:[%s9 + $0xc] sm:$0xf]
        %v1389 = vld [vmem:[%s10] sm:$0x1]
        %v1391 = vlaneseq
        %v1392 = vshrl.u32 %v1391, 7
        %v1393 = vsub.s32 0, %v1392
        %v1394 = vrot.slane %v1389, %v1393
        %v1400 = vunpack.c.l.b16 %v1385
        %v1401 = vunpack.c.l.b16 %v1386
        %v1402 = vunpack.c.l.b16 %v1387
        %v1403 = vunpack.c.l.b16 %v1388
        %v1404 = vpack.c.b16 %v1401, %v1400
        %v1405 = vpack.c.b16 %v1403, %v1402
        %v1409 = vsel %vm606, %v1384, 0
        %1411 = vmatprep.subr.bf16.mxu0 0
        %1412 = vmatpush1.bf16.msra.mxu0 0
        %1413 = vmatprep.subr.bf16.mxu0 0
        %1414 = vmatpush1.bf16.msra.mxu0 0
        %1415 = vmatprep.subr.bf16.mxu0 0
        %1416 = vmatpush1.bf16.msra.mxu0 0
        %1417 = vmatprep.subr.bf16.mxu0 0
        %1418 = vmatpush1.bf16.msra.mxu0 0
        %1419 = vmatprep.subr.bf16.mxu0 0
        %1420 = vmatpush1.bf16.msra.mxu0 0
        %1421 = vmatprep.subr.bf16.mxu0 0
        %1422 = vmatpush1.bf16.msra.mxu0 0
        %1423 = vmatprep.subr.bf16.mxu0 0
        %1424 = vmatpush1.bf16.msra.mxu0 %v1405
        %1425 = vmatprep.subr.bf16.mxu0 0
        %1426 = vmatpush1.bf16.msra.mxu0 %v1404
        %1427 = vmatprep.subr.bf16.mxu0 0
        %1428 = vmatpush2.bf16.msra.mxu0 0
        %1429 = vmatprep.subr.bf16.mxu0 0
        %1430 = vmatpush2.bf16.msra.mxu0 0
        %1431 = vmatprep.subr.bf16.mxu0 0
        %1432 = vmatpush2.bf16.msra.mxu0 0
        %1433 = vmatprep.subr.bf16.mxu0 0
        %1434 = vmatpush2.bf16.msra.mxu0 0
        %1435 = vmatprep.subr.bf16.mxu0 0
        %1436 = vmatpush2.bf16.msra.mxu0 0
        %1437 = vmatprep.subr.bf16.mxu0 0
        %1438 = vmatpush2.bf16.msra.mxu0 0
        %1439 = vmatprep.subr.bf16.mxu0 0
        %1440 = vmatpush2.bf16.msra.mxu0 0
        %1441 = vmatprep.subr.bf16.mxu0 0
        %1442 = vmatpush2.bf16.msra.mxu0 0
        %1443 = vmatprep.mubr.bf16.mxu0 0
        %1444 = vmatmul.mubr.bf16.gmra.mxu0 %v1409
        %v1445 = vpop.f32.mrf.mxu0
        %v1446 = vadd.f32 %v1394, %v1445
        %v1447 = vpop.f32.mrf.mxu0
        %v1448 = vpop.f32.mrf.mxu0
        %v1449 = vpop.f32.mrf.mxu0
        %1450 = vdwg.mxu0
        %v1451 = vmul.f32 %v1446, %v1446
        %v1452 = vmul.f32 %v1446, %v1451
        %v1453 = vmul.f32 %v1452, 0.044715
        %v1454 = vadd.f32 %v1446, %v1453
        %v1455 = vmul.f32 %v1454, 0.7978846
        %v1456 = vtanh.pop %v1455
        %v1457 = vadd.f32 %v1456, 1.0
        %v1458 = vmul.f32 %v1457, 0.5
        %v1459 = vmul.f32 %v1446, %v1458
        %v1460 = vpack.c.bf16 %v1459, %v1459
        %v1461 = vld [vmem:[%s11] sm:$0xf]
        %v1462 = vld [vmem:[%s11 + $0x4] sm:$0xf]
        %v1463 = vld [vmem:[%s11 + $0x8] sm:$0xf]
        %v1464 = vld [vmem:[%s11 + $0xc] sm:$0xf]
        %v1465 = vld [vmem:[%s11 + $0x10] sm:$0xf]
        %v1466 = vld [vmem:[%s11 + $0x14] sm:$0xf]
        %v1467 = vld [vmem:[%s11 + $0x18] sm:$0xf]
        %v1468 = vld [vmem:[%s11 + $0x1c] sm:$0xf]
        %v1469 = vld [vmem:[%s11 + $0x20] sm:$0xf]
        %v1470 = vld [vmem:[%s11 + $0x24] sm:$0xf]
        %v1471 = vld [vmem:[%s11 + $0x28] sm:$0xf]
        %v1472 = vld [vmem:[%s11 + $0x2c] sm:$0xf]
        %v1473 = vld [vmem:[%s11 + $0x30] sm:$0xf]
        %v1474 = vld [vmem:[%s11 + $0x34] sm:$0xf]
        %v1475 = vld [vmem:[%s11 + $0x38] sm:$0xf]
        %v1476 = vld [vmem:[%s11 + $0x3c] sm:$0xf]
        %v1493 = vunpack.c.l.b16 %v1461
        %v1494 = vunpack.c.l.b16 %v1462
        %v1495 = vunpack.c.l.b16 %v1463
        %v1496 = vunpack.c.l.b16 %v1464
        %v1497 = vunpack.c.l.b16 %v1465
        %v1498 = vunpack.c.l.b16 %v1466
        %v1499 = vunpack.c.l.b16 %v1467
        %v1500 = vunpack.c.l.b16 %v1468
        %v1501 = vunpack.c.l.b16 %v1469
        %v1502 = vunpack.c.l.b16 %v1470
        %v1503 = vunpack.c.l.b16 %v1471
        %v1504 = vunpack.c.l.b16 %v1472
        %v1505 = vunpack.c.l.b16 %v1473
        %v1506 = vunpack.c.l.b16 %v1474
        %v1507 = vunpack.c.l.b16 %v1475
        %v1508 = vunpack.c.l.b16 %v1476
        %v1509 = vpack.c.b16 %v1494, %v1493
        %v1510 = vpack.c.b16 %v1496, %v1495
        %v1511 = vpack.c.b16 %v1498, %v1497
        %v1512 = vpack.c.b16 %v1500, %v1499
        %v1513 = vpack.c.b16 %v1502, %v1501
        %v1514 = vpack.c.b16 %v1504, %v1503
        %v1515 = vpack.c.b16 %v1506, %v1505
        %v1516 = vpack.c.b16 %v1508, %v1507
        %1525 = vmatprep.subr.bf16.mxu0 0
        %1526 = vmatpush1.bf16.msra.mxu0 %v1516
        %1527 = vmatprep.subr.bf16.mxu0 0
        %1528 = vmatpush1.bf16.msra.mxu0 %v1515
        %1529 = vmatprep.subr.bf16.mxu0 0
        %1530 = vmatpush1.bf16.msra.mxu0 %v1514
        %1531 = vmatprep.subr.bf16.mxu0 0
        %1532 = vmatpush1.bf16.msra.mxu0 %v1513
        %1533 = vmatprep.subr.bf16.mxu0 0
        %1534 = vmatpush1.bf16.msra.mxu0 %v1512
        %1535 = vmatprep.subr.bf16.mxu0 0
        %1536 = vmatpush1.bf16.msra.mxu0 %v1511
        %1537 = vmatprep.subr.bf16.mxu0 0
        %1538 = vmatpush1.bf16.msra.mxu0 %v1510
        %1539 = vmatprep.subr.bf16.mxu0 0
        %1540 = vmatpush1.bf16.msra.mxu0 %v1509
        %1541 = vmatprep.subr.bf16.mxu0 0
        %1542 = vmatpush2.bf16.msra.mxu0 0
        %1543 = vmatprep.subr.bf16.mxu0 0
        %1544 = vmatpush2.bf16.msra.mxu0 0
        %1545 = vmatprep.subr.bf16.mxu0 0
        %1546 = vmatpush2.bf16.msra.mxu0 0
        %1547 = vmatprep.subr.bf16.mxu0 0
        %1548 = vmatpush2.bf16.msra.mxu0 0
        %1549 = vmatprep.subr.bf16.mxu0 0
        %1550 = vmatpush2.bf16.msra.mxu0 0
        %1551 = vmatprep.subr.bf16.mxu0 0
        %1552 = vmatpush2.bf16.msra.mxu0 0
        %1553 = vmatprep.subr.bf16.mxu0 0
        %1554 = vmatpush2.bf16.msra.mxu0 0
        %1555 = vmatprep.subr.bf16.mxu0 0
        %1556 = vmatpush2.bf16.msra.mxu0 0
        %1557 = vmatprep.mubr.bf16.mxu0 0
        %1558 = vmatmul.mubr.bf16.gmra.mxu0 %v1460
        %v1559 = vpop.f32.mrf.mxu0
        %v1560 = vadd.f32 0.0, %v1559
        %v1561 = vpop.f32.mrf.mxu0
        %v1562 = vpop.f32.mrf.mxu0
        %v1563 = vpop.f32.mrf.mxu0
        %1564 = vdwg.mxu0
        %v1565 = vadd.f32 %v1354, %v1560
        %v1566 = vld [vmem:[%s12] sm:$0x1]
        %v1568 = vlaneseq
        %v1569 = vshrl.u32 %v1568, 7
        %v1570 = vsub.s32 0, %v1569
        %v1571 = vrot.slane %v1566, %v1570
        %v1573 = vadd.f32 %v1565, %v1571
        %s1574 = scalar_lea.vmem %s1, 1
        %v1575 = vld [vmem:[%s1574] sm:$0x1]
        %s1576 = scalar_lea.vmem %s2, 1
        %v1577 = vld [vmem:[%s1576] sm:$0x1]
        %v1578 = vsel %vm606, %v1573, 0.0
        %1579 = vadd.xlane.f32.xlu0 %v1578
        %v1580 = vpop.xlane.xlu0 %1579
        %v1581 = vmul.f32 %v1580, %v610
        %v1582 = vsub.f32 %v1573, %v1581
        %v1583 = vmul.f32 %v1582, %v1582
        %v1584 = vsel %vm606, %v1583, 0.0
        %1585 = vadd.xlane.f32.xlu0 %v1584
        %v1586 = vpop.xlane.xlu0 %1585
        %v1587 = vmul.f32 %v1586, %v610
        %v1588 = vadd.f32 %v1587, 1e-05
        %v1589 = vrsqrt.pop %v1588
        %v1590 = vmul.f32 %v1582, %v1589
        %v1592 = vlaneseq
        %v1593 = vshrl.u32 %v1592, 7
        %v1594 = vsub.s32 0, %v1593
        %v1595 = vrot.slane %v1575, %v1594
        %v1597 = vmul.f32 %v1590, %v1595
        %v1599 = vlaneseq
        %v1600 = vshrl.u32 %v1599, 7
        %v1601 = vsub.s32 0, %v1600
        %v1602 = vrot.slane %v1577, %v1601
        %v1604 = vadd.f32 %v1597, %v1602
        %v1605 = vpack.c.bf16 %v1604, %v1604
        %s1606 = scalar_lea.vmem %s3, 16
        %v1607 = vld [vmem:[%s1606] sm:$0xf]
        %v1608 = vld [vmem:[%s1606 + $0x4] sm:$0xf]
        %v1609 = vld [vmem:[%s1606 + $0x8] sm:$0xf]
        %v1610 = vld [vmem:[%s1606 + $0xc] sm:$0xf]
        %s1611 = scalar_lea.vmem %s4, 1
        %v1612 = vld [vmem:[%s1611] sm:$0x1]
        %v1614 = vlaneseq
        %v1615 = vshrl.u32 %v1614, 7
        %v1616 = vsub.s32 0, %v1615
        %v1617 = vrot.slane %v1612, %v1616
        %v1623 = vunpack.c.l.b16 %v1607
        %v1624 = vunpack.c.l.b16 %v1608
        %v1625 = vunpack.c.l.b16 %v1609
        %v1626 = vunpack.c.l.b16 %v1610
        %v1627 = vpack.c.b16 %v1624, %v1623
        %v1628 = vpack.c.b16 %v1626, %v1625
        %v1632 = vsel %vm606, %v1605, 0
        %1634 = vmatprep.subr.bf16.mxu0 0
        %1635 = vmatpush1.bf16.msra.mxu0 0
        %1636 = vmatprep.subr.bf16.mxu0 0
        %1637 = vmatpush1.bf16.msra.mxu0 0
        %1638 = vmatprep.subr.bf16.mxu0 0
        %1639 = vmatpush1.bf16.msra.mxu0 0
        %1640 = vmatprep.subr.bf16.mxu0 0
        %1641 = vmatpush1.bf16.msra.mxu0 0
        %1642 = vmatprep.subr.bf16.mxu0 0
        %1643 = vmatpush1.bf16.msra.mxu0 0
        %1644 = vmatprep.subr.bf16.mxu0 0
        %1645 = vmatpush1.bf16.msra.mxu0 0
        %1646 = vmatprep.subr.bf16.mxu0 0
        %1647 = vmatpush1.bf16.msra.mxu0 %v1628
        %1648 = vmatprep.subr.bf16.mxu0 0
        %1649 = vmatpush1.bf16.msra.mxu0 %v1627
        %1650 = vmatprep.subr.bf16.mxu0 0
        %1651 = vmatpush2.bf16.msra.mxu0 0
        %1652 = vmatprep.subr.bf16.mxu0 0
        %1653 = vmatpush2.bf16.msra.mxu0 0
        %1654 = vmatprep.subr.bf16.mxu0 0
        %1655 = vmatpush2.bf16.msra.mxu0 0
        %1656 = vmatprep.subr.bf16.mxu0 0
        %1657 = vmatpush2.bf16.msra.mxu0 0
        %1658 = vmatprep.subr.bf16.mxu0 0
        %1659 = vmatpush2.bf16.msra.mxu0 0
        %1660 = vmatprep.subr.bf16.mxu0 0
        %1661 = vmatpush2.bf16.msra.mxu0 0
        %1662 = vmatprep.subr.bf16.mxu0 0
        %1663 = vmatpush2.bf16.msra.mxu0 0
        %1664 = vmatprep.subr.bf16.mxu0 0
        %1665 = vmatpush2.bf16.msra.mxu0 0
        %1666 = vmatprep.mubr.bf16.mxu0 0
        %1667 = vmatmul.mubr.bf16.gmra.mxu0 %v1632
        %v1668 = vpop.f32.mrf.mxu0
        %v1669 = vadd.f32 %v1617, %v1668
        %v1670 = vpop.f32.mrf.mxu0
        %v1671 = vpop.f32.mrf.mxu0
        %v1672 = vpop.f32.mrf.mxu0
        %1673 = vdwg.mxu0
        %v1674 = vpack.c.bf16 %v1669, %v1669
        %1676 = vrot.lane.b32.xlu0 %v1674, 96
        %v1677 = vpop.permute.xlu0 %1676
        %v1679 = vsel %vm706, %v1674, 0
        %v1682 = vsel %vm706, %v1677, 0
        %1684 = vmatprep.subr.bf16.mxu0 0
        %1685 = vmatpush1.bf16.xpose.msra.mxu0 0
        %1686 = vmatprep.subr.bf16.mxu0 0
        %1687 = vmatpush1.bf16.xpose.msra.mxu0 0
        %1688 = vmatprep.subr.bf16.mxu0 0
        %1689 = vmatpush1.bf16.xpose.msra.mxu0 0
        %1690 = vmatprep.subr.bf16.mxu0 0
        %1691 = vmatpush1.bf16.xpose.msra.mxu0 0
        %1692 = vmatprep.subr.bf16.mxu0 0
        %1693 = vmatpush1.bf16.xpose.msra.mxu0 0
        %1694 = vmatprep.subr.bf16.mxu0 0
        %1695 = vmatpush1.bf16.xpose.msra.mxu0 0
        %1696 = vmatprep.subr.bf16.mxu0 0
        %1697 = vmatpush1.bf16.xpose.msra.mxu0 0
        %1698 = vmatprep.subr.bf16.mxu0 0
        %1699 = vmatpush1.bf16.xpose.msra.mxu0 %v1682
        %1700 = vmatprep.subr.bf16.mxu0 0
        %1701 = vmatpush2.bf16.xpose.msra.mxu0 0
        %1702 = vmatprep.subr.bf16.mxu0 0
        %1703 = vmatpush2.bf16.xpose.msra.mxu0 0
        %1704 = vmatprep.subr.bf16.mxu0 0
        %1705 = vmatpush2.bf16.xpose.msra.mxu0 0
        %1706 = vmatprep.subr.bf16.mxu0 0
        %1707 = vmatpush2.bf16.xpose.msra.mxu0 0
        %1708 = vmatprep.subr.bf16.mxu0 0
        %1709 = vmatpush2.bf16.xpose.msra.mxu0 0
        %1710 = vmatprep.subr.bf16.mxu0 0
        %1711 = vmatpush2.bf16.xpose.msra.mxu0 0
        %1712 = vmatprep.subr.bf16.mxu0 0
        %1713 = vmatpush2.bf16.xpose.msra.mxu0 0
        %1714 = vmatprep.subr.bf16.mxu0 0
        %1715 = vmatpush2.bf16.xpose.msra.mxu0 0
        %1716 = vmatprep.mubr.bf16.mxu0 0
        %1717 = vmatmul.mubr.bf16.gmra.mxu0 %v1679
        %v1718 = vpop.f32.mrf.mxu0
        %v1719 = vadd.f32 0.0, %v1718
        %v1720 = vpop.f32.mrf.mxu0
        %v1721 = vpop.f32.mrf.mxu0
        %v1722 = vpop.f32.mrf.mxu0
        %1723 = vdwg.mxu0
        %v1724 = vmul.f32 %v1719, 0.35355338
        %v1725 = vsel %vm603, %v1724, -1e+30
        %v1726 = vsel %vm706, %v1725, -inf
        %1727 = vmax.xlane.f32.xlu0 %v1726
        %v1728 = vpop.xlane.xlu0 %1727
        %v1729 = vsub.f32 %v1725, %v1728
        %v1730 = vmul.f32 %v1729, 1.442695
        %v1731 = vpow.pop %v1730
        %v1732 = vsel %vm706, %v1731, 0.0
        %1733 = vadd.xlane.f32.xlu0 %v1732
        %v1734 = vpop.xlane.xlu0 %1733
        %v1735 = vrcp.pop %v1734
        %v1736 = vmul.f32 %v1731, %v1735
        %v1737 = vpack.c.bf16 %v1736, %v1736
        %1738 = vrot.lane.b32.xlu0 %v1674, 64
        %v1739 = vpop.permute.xlu0 %1738
        %v1741 = vsel %vm706, %v1737, 0
        %v1744 = vsel %vm772, %v1739, 0
        %1746 = vmatprep.subr.bf16.mxu0 0
        %1747 = vmatpush1.bf16.msra.mxu0 0
        %1748 = vmatprep.subr.bf16.mxu0 0
        %1749 = vmatpush1.bf16.msra.mxu0 0
        %1750 = vmatprep.subr.bf16.mxu0 0
        %1751 = vmatpush1.bf16.msra.mxu0 0
        %1752 = vmatprep.subr.bf16.mxu0 0
        %1753 = vmatpush1.bf16.msra.mxu0 0
        %1754 = vmatprep.subr.bf16.mxu0 0
        %1755 = vmatpush1.bf16.msra.mxu0 0
        %1756 = vmatprep.subr.bf16.mxu0 0
        %1757 = vmatpush1.bf16.msra.mxu0 0
        %1758 = vmatprep.subr.bf16.mxu0 0
        %1759 = vmatpush1.bf16.msra.mxu0 0
        %1760 = vmatprep.subr.bf16.mxu0 0
        %1761 = vmatpush1.bf16.msra.mxu0 %v1744
        %1762 = vmatprep.subr.bf16.mxu0 0
        %1763 = vmatpush2.bf16.msra.mxu0 0
        %1764 = vmatprep.subr.bf16.mxu0 0
        %1765 = vmatpush2.bf16.msra.mxu0 0
        %1766 = vmatprep.subr.bf16.mxu0 0
        %1767 = vmatpush2.bf16.msra.mxu0 0
        %1768 = vmatprep.subr.bf16.mxu0 0
        %1769 = vmatpush2.bf16.msra.mxu0 0
        %1770 = vmatprep.subr.bf16.mxu0 0
        %1771 = vmatpush2.bf16.msra.mxu0 0
        %1772 = vmatprep.subr.bf16.mxu0 0
        %1773 = vmatpush2.bf16.msra.mxu0 0
        %1774 = vmatprep.subr.bf16.mxu0 0
        %1775 = vmatpush2.bf16.msra.mxu0 0
        %1776 = vmatprep.subr.bf16.mxu0 0
        %1777 = vmatpush2.bf16.msra.mxu0 0
        %1778 = vmatprep.mubr.bf16.mxu0 0
        %1779 = vmatmul.mubr.bf16.gmra.mxu0 %v1741
        %v1780 = vpop.f32.mrf.mxu0
        %v1781 = vadd.f32 0.0, %v1780
        %v1782 = vpop.f32.mrf.mxu0
        %v1783 = vpop.f32.mrf.mxu0
        %v1784 = vpop.f32.mrf.mxu0
        %1785 = vdwg.mxu0
        %s1786 = scalar_lea.vmem %s5, 16
        %v1787 = vld [vmem:[%s1786] sm:$0xf]
        %v1788 = vpack.c.bf16 %v1781, %v1781
        %1789 = vrot.lane.b32.xlu0 %v1674, 120
        %v1790 = vpop.permute.xlu0 %1789
        %1791 = vrot.lane.b32.xlu0 %v1674, 88
        %v1792 = vpop.permute.xlu0 %1791
        %v1794 = vsel %vm706, %v1790, 0
        %v1797 = vsel %vm706, %v1792, 0
        %1799 = vmatprep.subr.bf16.mxu0 0
        %1800 = vmatpush1.bf16.xpose.msra.mxu0 0
        %1801 = vmatprep.subr.bf16.mxu0 0
        %1802 = vmatpush1.bf16.xpose.msra.mxu0 0
        %1803 = vmatprep.subr.bf16.mxu0 0
        %1804 = vmatpush1.bf16.xpose.msra.mxu0 0
        %1805 = vmatprep.subr.bf16.mxu0 0
        %1806 = vmatpush1.bf16.xpose.msra.mxu0 0
        %1807 = vmatprep.subr.bf16.mxu0 0
        %1808 = vmatpush1.bf16.xpose.msra.mxu0 0
        %1809 = vmatprep.subr.bf16.mxu0 0
        %1810 = vmatpush1.bf16.xpose.msra.mxu0 0
        %1811 = vmatprep.subr.bf16.mxu0 0
        %1812 = vmatpush1.bf16.xpose.msra.mxu0 0
        %1813 = vmatprep.subr.bf16.mxu0 0
        %1814 = vmatpush1.bf16.xpose.msra.mxu0 %v1797
        %1815 = vmatprep.subr.bf16.mxu0 0
        %1816 = vmatpush2.bf16.xpose.msra.mxu0 0
        %1817 = vmatprep.subr.bf16.mxu0 0
        %1818 = vmatpush2.bf16.xpose.msra.mxu0 0
        %1819 = vmatprep.subr.bf16.mxu0 0
        %1820 = vmatpush2.bf16.xpose.msra.mxu0 0
        %1821 = vmatprep.subr.bf16.mxu0 0
        %1822 = vmatpush2.bf16.xpose.msra.mxu0 0
        %1823 = vmatprep.subr.bf16.mxu0 0
        %1824 = vmatpush2.bf16.xpose.msra.mxu0 0
        %1825 = vmatprep.subr.bf16.mxu0 0
        %1826 = vmatpush2.bf16.xpose.msra.mxu0 0
        %1827 = vmatprep.subr.bf16.mxu0 0
        %1828 = vmatpush2.bf16.xpose.msra.mxu0 0
        %1829 = vmatprep.subr.bf16.mxu0 0
        %1830 = vmatpush2.bf16.xpose.msra.mxu0 0
        %1831 = vmatprep.mubr.bf16.mxu0 0
        %1832 = vmatmul.mubr.bf16.gmra.mxu0 %v1794
        %v1833 = vpop.f32.mrf.mxu0
        %v1834 = vadd.f32 0.0, %v1833
        %v1835 = vpop.f32.mrf.mxu0
        %v1836 = vpop.f32.mrf.mxu0
        %v1837 = vpop.f32.mrf.mxu0
        %1838 = vdwg.mxu0
        %v1839 = vmul.f32 %v1834, 0.35355338
        %v1840 = vsel %vm603, %v1839, -1e+30
        %v1841 = vsel %vm706, %v1840, -inf
        %1842 = vmax.xlane.f32.xlu0 %v1841
        %v1843 = vpop.xlane.xlu0 %1842
        %v1844 = vsub.f32 %v1840, %v1843
        %v1845 = vmul.f32 %v1844, 1.442695
        %v1846 = vpow.pop %v1845
        %v1847 = vsel %vm706, %v1846, 0.0
        %1848 = vadd.xlane.f32.xlu0 %v1847
        %v1849 = vpop.xlane.xlu0 %1848
        %v1850 = vrcp.pop %v1849
        %v1851 = vmul.f32 %v1846, %v1850
        %v1852 = vpack.c.bf16 %v1851, %v1851
        %1853 = vrot.lane.b32.xlu0 %v1674, 56
        %v1854 = vpop.permute.xlu0 %1853
        %v1856 = vsel %vm706, %v1852, 0
        %v1859 = vsel %vm772, %v1854, 0
        %1861 = vmatprep.subr.bf16.mxu0 0
        %1862 = vmatpush1.bf16.msra.mxu0 0
        %1863 = vmatprep.subr.bf16.mxu0 0
        %1864 = vmatpush1.bf16.msra.mxu0 0
        %1865 = vmatprep.subr.bf16.mxu0 0
        %1866 = vmatpush1.bf16.msra.mxu0 0
        %1867 = vmatprep.subr.bf16.mxu0 0
        %1868 = vmatpush1.bf16.msra.mxu0 0
        %1869 = vmatprep.subr.bf16.mxu0 0
        %1870 = vmatpush1.bf16.msra.mxu0 0
        %1871 = vmatprep.subr.bf16.mxu0 0
        %1872 = vmatpush1.bf16.msra.mxu0 0
        %1873 = vmatprep.subr.bf16.mxu0 0
        %1874 = vmatpush1.bf16.msra.mxu0 0
        %1875 = vmatprep.subr.bf16.mxu0 0
        %1876 = vmatpush1.bf16.msra.mxu0 %v1859
        %1877 = vmatprep.subr.bf16.mxu0 0
        %1878 = vmatpush2.bf16.msra.mxu0 0
        %1879 = vmatprep.subr.bf16.mxu0 0
        %1880 = vmatpush2.bf16.msra.mxu0 0
        %1881 = vmatprep.subr.bf16.mxu0 0
        %1882 = vmatpush2.bf16.msra.mxu0 0
        %1883 = vmatprep.subr.bf16.mxu0 0
        %1884 = vmatpush2.bf16.msra.mxu0 0
        %1885 = vmatprep.subr.bf16.mxu0 0
        %1886 = vmatpush2.bf16.msra.mxu0 0
        %1887 = vmatprep.subr.bf16.mxu0 0
        %1888 = vmatpush2.bf16.msra.mxu0 0
        %1889 = vmatprep.subr.bf16.mxu0 0
        %1890 = vmatpush2.bf16.msra.mxu0 0
        %1891 = vmatprep.subr.bf16.mxu0 0
        %1892 = vmatpush2.bf16.msra.mxu0 0
        %1893 = vmatprep.mubr.bf16.mxu0 0
        %1894 = vmatmul.mubr.bf16.gmra.mxu0 %v1856
        %v1895 = vpop.f32.mrf.mxu0
        %v1896 = vadd.f32 0.0, %v1895
        %v1897 = vpop.f32.mrf.mxu0
        %v1898 = vpop.f32.mrf.mxu0
        %v1899 = vpop.f32.mrf.mxu0
        %1900 = vdwg.mxu0
        %v1901 = vld [vmem:[%s1786 + $0x4] sm:$0xf]
        %v1902 = vpack.c.bf16 %v1896, %v1896
        %v1904 = vsel %vm706, %v1902, 0
        %v1907 = vsel %vm772, %v1901, 0
        %1909 = vmatprep.subr.bf16.mxu0 0
        %1910 = vmatpush1.bf16.msra.mxu0 0
        %1911 = vmatprep.subr.bf16.mxu0 0
        %1912 = vmatpush1.bf16.msra.mxu0 0
        %1913 = vmatprep.subr.bf16.mxu0 0
        %1914 = vmatpush1.bf16.msra.mxu0 0
        %1915 = vmatprep.subr.bf16.mxu0 0
        %1916 = vmatpush1.bf16.msra.mxu0 0
        %1917 = vmatprep.subr.bf16.mxu0 0
        %1918 = vmatpush1.bf16.msra.mxu0 0
        %1919 = vmatprep.subr.bf16.mxu0 0
        %1920 = vmatpush1.bf16.msra.mxu0 0
        %1921 = vmatprep.subr.bf16.mxu0 0
        %1922 = vmatpush1.bf16.msra.mxu0 0
        %1923 = vmatprep.subr.bf16.mxu0 0
        %1924 = vmatpush1.bf16.msra.mxu0 %v1907
        %1925 = vmatprep.subr.bf16.mxu0 0
        %1926 = vmatpush2.bf16.msra.mxu0 0
        %1927 = vmatprep.subr.bf16.mxu0 0
        %1928 = vmatpush2.bf16.msra.mxu0 0
        %1929 = vmatprep.subr.bf16.mxu0 0
        %1930 = vmatpush2.bf16.msra.mxu0 0
        %1931 = vmatprep.subr.bf16.mxu0 0
        %1932 = vmatpush2.bf16.msra.mxu0 0
        %1933 = vmatprep.subr.bf16.mxu0 0
        %1934 = vmatpush2.bf16.msra.mxu0 0
        %1935 = vmatprep.subr.bf16.mxu0 0
        %1936 = vmatpush2.bf16.msra.mxu0 0
        %1937 = vmatprep.subr.bf16.mxu0 0
        %1938 = vmatpush2.bf16.msra.mxu0 0
        %1939 = vmatprep.subr.bf16.mxu0 0
        %1940 = vmatpush2.bf16.msra.mxu0 0
        %1941 = vmatprep.mubr.bf16.mxu0 0
        %1942 = vmatmul.mubr.bf16.gmra.mxu0 %v1904
        %v1943 = vpop.f32.mrf.mxu0
        %v1944 = vadd.f32 0.0, %v1943
        %v1945 = vpop.f32.mrf.mxu0
        %v1946 = vpop.f32.mrf.mxu0
        %v1947 = vpop.f32.mrf.mxu0
        %1948 = vdwg.mxu0
        %v1950 = vsel %vm706, %v1788, 0
        %v1953 = vsel %vm772, %v1787, 0
        %1955 = vmatprep.subr.bf16.mxu0 0
        %1956 = vmatpush1.bf16.msra.mxu0 0
        %1957 = vmatprep.subr.bf16.mxu0 0
        %1958 = vmatpush1.bf16.msra.mxu0 0
        %1959 = vmatprep.subr.bf16.mxu0 0
        %1960 = vmatpush1.bf16.msra.mxu0 0
        %1961 = vmatprep.subr.bf16.mxu0 0
        %1962 = vmatpush1.bf16.msra.mxu0 0
        %1963 = vmatprep.subr.bf16.mxu0 0
        %1964 = vmatpush1.bf16.msra.mxu0 0
        %1965 = vmatprep.subr.bf16.mxu0 0
        %1966 = vmatpush1.bf16.msra.mxu0 0
        %1967 = vmatprep.subr.bf16.mxu0 0
        %1968 = vmatpush1.bf16.msra.mxu0 0
        %1969 = vmatprep.subr.bf16.mxu0 0
        %1970 = vmatpush1.bf16.msra.mxu0 %v1953
        %1971 = vmatprep.subr.bf16.mxu0 0
        %1972 = vmatpush2.bf16.msra.mxu0 0
        %1973 = vmatprep.subr.bf16.mxu0 0
        %1974 = vmatpush2.bf16.msra.mxu0 0
        %1975 = vmatprep.subr.bf16.mxu0 0
        %1976 = vmatpush2.bf16.msra.mxu0 0
        %1977 = vmatprep.subr.bf16.mxu0 0
        %1978 = vmatpush2.bf16.msra.mxu0 0
        %1979 = vmatprep.subr.bf16.mxu0 0
        %1980 = vmatpush2.bf16.msra.mxu0 0
        %1981 = vmatprep.subr.bf16.mxu0 0
        %1982 = vmatpush2.bf16.msra.mxu0 0
        %1983 = vmatprep.subr.bf16.mxu0 0
        %1984 = vmatpush2.bf16.msra.mxu0 0
        %1985 = vmatprep.subr.bf16.mxu0 0
        %1986 = vmatpush2.bf16.msra.mxu0 0
        %1987 = vmatprep.mubr.bf16.mxu0 0
        %1988 = vmatmul.mubr.bf16.gmra.mxu0 %v1950
        %v1989 = vpop.f32.mrf.mxu0
        %v1990 = vadd.f32 %v1944, %v1989
        %v1991 = vpop.f32.mrf.mxu0
        %v1992 = vpop.f32.mrf.mxu0
        %v1993 = vpop.f32.mrf.mxu0
        %1994 = vdwg.mxu0
        %1995 = vrot.lane.b32.xlu0 %v1674, 112
        %v1996 = vpop.permute.xlu0 %1995
        %1997 = vrot.lane.b32.xlu0 %v1674, 80
        %v1998 = vpop.permute.xlu0 %1997
        %v2000 = vsel %vm706, %v1996, 0
        %v2003 = vsel %vm706, %v1998, 0
        %2005 = vmatprep.subr.bf16.mxu0 0
        %2006 = vmatpush1.bf16.xpose.msra.mxu0 0
        %2007 = vmatprep.subr.bf16.mxu0 0
        %2008 = vmatpush1.bf16.xpose.msra.mxu0 0
        %2009 = vmatprep.subr.bf16.mxu0 0
        %2010 = vmatpush1.bf16.xpose.msra.mxu0 0
        %2011 = vmatprep.subr.bf16.mxu0 0
        %2012 = vmatpush1.bf16.xpose.msra.mxu0 0
        %2013 = vmatprep.subr.bf16.mxu0 0
        %2014 = vmatpush1.bf16.xpose.msra.mxu0 0
        %2015 = vmatprep.subr.bf16.mxu0 0
        %2016 = vmatpush1.bf16.xpose.msra.mxu0 0
        %2017 = vmatprep.subr.bf16.mxu0 0
        %2018 = vmatpush1.bf16.xpose.msra.mxu0 0
        %2019 = vmatprep.subr.bf16.mxu0 0
        %2020 = vmatpush1.bf16.xpose.msra.mxu0 %v2003
        %2021 = vmatprep.subr.bf16.mxu0 0
        %2022 = vmatpush2.bf16.xpose.msra.mxu0 0
        %2023 = vmatprep.subr.bf16.mxu0 0
        %2024 = vmatpush2.bf16.xpose.msra.mxu0 0
        %2025 = vmatprep.subr.bf16.mxu0 0
        %2026 = vmatpush2.bf16.xpose.msra.mxu0 0
        %2027 = vmatprep.subr.bf16.mxu0 0
        %2028 = vmatpush2.bf16.xpose.msra.mxu0 0
        %2029 = vmatprep.subr.bf16.mxu0 0
        %2030 = vmatpush2.bf16.xpose.msra.mxu0 0
        %2031 = vmatprep.subr.bf16.mxu0 0
        %2032 = vmatpush2.bf16.xpose.msra.mxu0 0
        %2033 = vmatprep.subr.bf16.mxu0 0
        %2034 = vmatpush2.bf16.xpose.msra.mxu0 0
        %2035 = vmatprep.subr.bf16.mxu0 0
        %2036 = vmatpush2.bf16.xpose.msra.mxu0 0
        %2037 = vmatprep.mubr.bf16.mxu0 0
        %2038 = vmatmul.mubr.bf16.gmra.mxu0 %v2000
        %v2039 = vpop.f32.mrf.mxu0
        %v2040 = vadd.f32 0.0, %v2039
        %v2041 = vpop.f32.mrf.mxu0
        %v2042 = vpop.f32.mrf.mxu0
        %v2043 = vpop.f32.mrf.mxu0
        %2044 = vdwg.mxu0
        %v2045 = vmul.f32 %v2040, 0.35355338
        %v2046 = vsel %vm603, %v2045, -1e+30
        %v2047 = vsel %vm706, %v2046, -inf
        %2048 = vmax.xlane.f32.xlu0 %v2047
        %v2049 = vpop.xlane.xlu0 %2048
        %v2050 = vsub.f32 %v2046, %v2049
        %v2051 = vmul.f32 %v2050, 1.442695
        %v2052 = vpow.pop %v2051
        %v2053 = vsel %vm706, %v2052, 0.0
        %2054 = vadd.xlane.f32.xlu0 %v2053
        %v2055 = vpop.xlane.xlu0 %2054
        %v2056 = vrcp.pop %v2055
        %v2057 = vmul.f32 %v2052, %v2056
        %v2058 = vpack.c.bf16 %v2057, %v2057
        %2059 = vrot.lane.b32.xlu0 %v1674, 48
        %v2060 = vpop.permute.xlu0 %2059
        %v2062 = vsel %vm706, %v2058, 0
        %v2065 = vsel %vm772, %v2060, 0
        %2067 = vmatprep.subr.bf16.mxu0 0
        %2068 = vmatpush1.bf16.msra.mxu0 0
        %2069 = vmatprep.subr.bf16.mxu0 0
        %2070 = vmatpush1.bf16.msra.mxu0 0
        %2071 = vmatprep.subr.bf16.mxu0 0
        %2072 = vmatpush1.bf16.msra.mxu0 0
        %2073 = vmatprep.subr.bf16.mxu0 0
        %2074 = vmatpush1.bf16.msra.mxu0 0
        %2075 = vmatprep.subr.bf16.mxu0 0
        %2076 = vmatpush1.bf16.msra.mxu0 0
        %2077 = vmatprep.subr.bf16.mxu0 0
        %2078 = vmatpush1.bf16.msra.mxu0 0
        %2079 = vmatprep.subr.bf16.mxu0 0
        %2080 = vmatpush1.bf16.msra.mxu0 0
        %2081 = vmatprep.subr.bf16.mxu0 0
        %2082 = vmatpush1.bf16.msra.mxu0 %v2065
        %2083 = vmatprep.subr.bf16.mxu0 0
        %2084 = vmatpush2.bf16.msra.mxu0 0
        %2085 = vmatprep.subr.bf16.mxu0 0
        %2086 = vmatpush2.bf16.msra.mxu0 0
        %2087 = vmatprep.subr.bf16.mxu0 0
        %2088 = vmatpush2.bf16.msra.mxu0 0
        %2089 = vmatprep.subr.bf16.mxu0 0
        %2090 = vmatpush2.bf16.msra.mxu0 0
        %2091 = vmatprep.subr.bf16.mxu0 0
        %2092 = vmatpush2.bf16.msra.mxu0 0
        %2093 = vmatprep.subr.bf16.mxu0 0
        %2094 = vmatpush2.bf16.msra.mxu0 0
        %2095 = vmatprep.subr.bf16.mxu0 0
        %2096 = vmatpush2.bf16.msra.mxu0 0
        %2097 = vmatprep.subr.bf16.mxu0 0
        %2098 = vmatpush2.bf16.msra.mxu0 0
        %2099 = vmatprep.mubr.bf16.mxu0 0
        %2100 = vmatmul.mubr.bf16.gmra.mxu0 %v2062
        %v2101 = vpop.f32.mrf.mxu0
        %v2102 = vadd.f32 0.0, %v2101
        %v2103 = vpop.f32.mrf.mxu0
        %v2104 = vpop.f32.mrf.mxu0
        %v2105 = vpop.f32.mrf.mxu0
        %2106 = vdwg.mxu0
        %v2107 = vld [vmem:[%s1786 + $0x8] sm:$0xf]
        %v2108 = vpack.c.bf16 %v2102, %v2102
        %v2110 = vsel %vm706, %v2108, 0
        %v2113 = vsel %vm772, %v2107, 0
        %2115 = vmatprep.subr.bf16.mxu0 0
        %2116 = vmatpush1.bf16.msra.mxu0 0
        %2117 = vmatprep.subr.bf16.mxu0 0
        %2118 = vmatpush1.bf16.msra.mxu0 0
        %2119 = vmatprep.subr.bf16.mxu0 0
        %2120 = vmatpush1.bf16.msra.mxu0 0
        %2121 = vmatprep.subr.bf16.mxu0 0
        %2122 = vmatpush1.bf16.msra.mxu0 0
        %2123 = vmatprep.subr.bf16.mxu0 0
        %2124 = vmatpush1.bf16.msra.mxu0 0
        %2125 = vmatprep.subr.bf16.mxu0 0
        %2126 = vmatpush1.bf16.msra.mxu0 0
        %2127 = vmatprep.subr.bf16.mxu0 0
        %2128 = vmatpush1.bf16.msra.mxu0 0
        %2129 = vmatprep.subr.bf16.mxu0 0
        %2130 = vmatpush1.bf16.msra.mxu0 %v2113
        %2131 = vmatprep.subr.bf16.mxu0 0
        %2132 = vmatpush2.bf16.msra.mxu0 0
        %2133 = vmatprep.subr.bf16.mxu0 0
        %2134 = vmatpush2.bf16.msra.mxu0 0
        %2135 = vmatprep.subr.bf16.mxu0 0
        %2136 = vmatpush2.bf16.msra.mxu0 0
        %2137 = vmatprep.subr.bf16.mxu0 0
        %2138 = vmatpush2.bf16.msra.mxu0 0
        %2139 = vmatprep.subr.bf16.mxu0 0
        %2140 = vmatpush2.bf16.msra.mxu0 0
        %2141 = vmatprep.subr.bf16.mxu0 0
        %2142 = vmatpush2.bf16.msra.mxu0 0
        %2143 = vmatprep.subr.bf16.mxu0 0
        %2144 = vmatpush2.bf16.msra.mxu0 0
        %2145 = vmatprep.subr.bf16.mxu0 0
        %2146 = vmatpush2.bf16.msra.mxu0 0
        %2147 = vmatprep.mubr.bf16.mxu0 0
        %2148 = vmatmul.mubr.bf16.gmra.mxu0 %v2110
        %v2149 = vpop.f32.mrf.mxu0
        %v2150 = vadd.f32 0.0, %v2149
        %v2151 = vpop.f32.mrf.mxu0
        %v2152 = vpop.f32.mrf.mxu0
        %v2153 = vpop.f32.mrf.mxu0
        %2154 = vdwg.mxu0
        %v2155 = vadd.f32 %v1990, %v2150
        %2156 = vrot.lane.b32.xlu0 %v1674, 104
        %v2157 = vpop.permute.xlu0 %2156
        %2158 = vrot.lane.b32.xlu0 %v1674, 72
        %v2159 = vpop.permute.xlu0 %2158
        %v2161 = vsel %vm706, %v2157, 0
        %v2164 = vsel %vm706, %v2159, 0
        %2166 = vmatprep.subr.bf16.mxu0 0
        %2167 = vmatpush1.bf16.xpose.msra.mxu0 0
        %2168 = vmatprep.subr.bf16.mxu0 0
        %2169 = vmatpush1.bf16.xpose.msra.mxu0 0
        %2170 = vmatprep.subr.bf16.mxu0 0
        %2171 = vmatpush1.bf16.xpose.msra.mxu0 0
        %2172 = vmatprep.subr.bf16.mxu0 0
        %2173 = vmatpush1.bf16.xpose.msra.mxu0 0
        %2174 = vmatprep.subr.bf16.mxu0 0
        %2175 = vmatpush1.bf16.xpose.msra.mxu0 0
        %2176 = vmatprep.subr.bf16.mxu0 0
        %2177 = vmatpush1.bf16.xpose.msra.mxu0 0
        %2178 = vmatprep.subr.bf16.mxu0 0
        %2179 = vmatpush1.bf16.xpose.msra.mxu0 0
        %2180 = vmatprep.subr.bf16.mxu0 0
        %2181 = vmatpush1.bf16.xpose.msra.mxu0 %v2164
        %2182 = vmatprep.subr.bf16.mxu0 0
        %2183 = vmatpush2.bf16.xpose.msra.mxu0 0
        %2184 = vmatprep.subr.bf16.mxu0 0
        %2185 = vmatpush2.bf16.xpose.msra.mxu0 0
        %2186 = vmatprep.subr.bf16.mxu0 0
        %2187 = vmatpush2.bf16.xpose.msra.mxu0 0
        %2188 = vmatprep.subr.bf16.mxu0 0
        %2189 = vmatpush2.bf16.xpose.msra.mxu0 0
        %2190 = vmatprep.subr.bf16.mxu0 0
        %2191 = vmatpush2.bf16.xpose.msra.mxu0 0
        %2192 = vmatprep.subr.bf16.mxu0 0
        %2193 = vmatpush2.bf16.xpose.msra.mxu0 0
        %2194 = vmatprep.subr.bf16.mxu0 0
        %2195 = vmatpush2.bf16.xpose.msra.mxu0 0
        %2196 = vmatprep.subr.bf16.mxu0 0
        %2197 = vmatpush2.bf16.xpose.msra.mxu0 0
        %2198 = vmatprep.mubr.bf16.mxu0 0
        %2199 = vmatmul.mubr.bf16.gmra.mxu0 %v2161
        %v2200 = vpop.f32.mrf.mxu0
        %v2201 = vadd.f32 0.0, %v2200
        %v2202 = vpop.f32.mrf.mxu0
        %v2203 = vpop.f32.mrf.mxu0
        %v2204 = vpop.f32.mrf.mxu0
        %2205 = vdwg.mxu0
        %v2206 = vmul.f32 %v2201, 0.35355338
        %v2207 = vsel %vm603, %v2206, -1e+30
        %v2208 = vsel %vm706, %v2207, -inf
        %2209 = vmax.xlane.f32.xlu0 %v2208
        %v2210 = vpop.xlane.xlu0 %2209
        %v2211 = vsub.f32 %v2207, %v2210
        %v2212 = vmul.f32 %v2211, 1.442695
        %v2213 = vpow.pop %v2212
        %v2214 = vsel %vm706, %v2213, 0.0
        %2215 = vadd.xlane.f32.xlu0 %v2214
        %v2216 = vpop.xlane.xlu0 %2215
        %v2217 = vrcp.pop %v2216
        %v2218 = vmul.f32 %v2213, %v2217
        %v2219 = vpack.c.bf16 %v2218, %v2218
        %2220 = vrot.lane.b32.xlu0 %v1674, 40
        %v2221 = vpop.permute.xlu0 %2220
        %v2223 = vsel %vm706, %v2219, 0
        %v2226 = vsel %vm772, %v2221, 0
        %2228 = vmatprep.subr.bf16.mxu0 0
        %2229 = vmatpush1.bf16.msra.mxu0 0
        %2230 = vmatprep.subr.bf16.mxu0 0
        %2231 = vmatpush1.bf16.msra.mxu0 0
        %2232 = vmatprep.subr.bf16.mxu0 0
        %2233 = vmatpush1.bf16.msra.mxu0 0
        %2234 = vmatprep.subr.bf16.mxu0 0
        %2235 = vmatpush1.bf16.msra.mxu0 0
        %2236 = vmatprep.subr.bf16.mxu0 0
        %2237 = vmatpush1.bf16.msra.mxu0 0
        %2238 = vmatprep.subr.bf16.mxu0 0
        %2239 = vmatpush1.bf16.msra.mxu0 0
        %2240 = vmatprep.subr.bf16.mxu0 0
        %2241 = vmatpush1.bf16.msra.mxu0 0
        %2242 = vmatprep.subr.bf16.mxu0 0
        %2243 = vmatpush1.bf16.msra.mxu0 %v2226
        %2244 = vmatprep.subr.bf16.mxu0 0
        %2245 = vmatpush2.bf16.msra.mxu0 0
        %2246 = vmatprep.subr.bf16.mxu0 0
        %2247 = vmatpush2.bf16.msra.mxu0 0
        %2248 = vmatprep.subr.bf16.mxu0 0
        %2249 = vmatpush2.bf16.msra.mxu0 0
        %2250 = vmatprep.subr.bf16.mxu0 0
        %2251 = vmatpush2.bf16.msra.mxu0 0
        %2252 = vmatprep.subr.bf16.mxu0 0
        %2253 = vmatpush2.bf16.msra.mxu0 0
        %2254 = vmatprep.subr.bf16.mxu0 0
        %2255 = vmatpush2.bf16.msra.mxu0 0
        %2256 = vmatprep.subr.bf16.mxu0 0
        %2257 = vmatpush2.bf16.msra.mxu0 0
        %2258 = vmatprep.subr.bf16.mxu0 0
        %2259 = vmatpush2.bf16.msra.mxu0 0
        %2260 = vmatprep.mubr.bf16.mxu0 0
        %2261 = vmatmul.mubr.bf16.gmra.mxu0 %v2223
        %v2262 = vpop.f32.mrf.mxu0
        %v2263 = vadd.f32 0.0, %v2262
        %v2264 = vpop.f32.mrf.mxu0
        %v2265 = vpop.f32.mrf.mxu0
        %v2266 = vpop.f32.mrf.mxu0
        %2267 = vdwg.mxu0
        %v2268 = vld [vmem:[%s1786 + $0xc] sm:$0xf]
        %v2269 = vpack.c.bf16 %v2263, %v2263
        %v2271 = vsel %vm706, %v2269, 0
        %v2274 = vsel %vm772, %v2268, 0
        %2276 = vmatprep.subr.bf16.mxu0 0
        %2277 = vmatpush1.bf16.msra.mxu0 0
        %2278 = vmatprep.subr.bf16.mxu0 0
        %2279 = vmatpush1.bf16.msra.mxu0 0
        %2280 = vmatprep.subr.bf16.mxu0 0
        %2281 = vmatpush1.bf16.msra.mxu0 0
        %2282 = vmatprep.subr.bf16.mxu0 0
        %2283 = vmatpush1.bf16.msra.mxu0 0
        %2284 = vmatprep.subr.bf16.mxu0 0
        %2285 = vmatpush1.bf16.msra.mxu0 0
        %2286 = vmatprep.subr.bf16.mxu0 0
        %2287 = vmatpush1.bf16.msra.mxu0 0
        %2288 = vmatprep.subr.bf16.mxu0 0
        %2289 = vmatpush1.bf16.msra.mxu0 0
        %2290 = vmatprep.subr.bf16.mxu0 0
        %2291 = vmatpush1.bf16.msra.mxu0 %v2274
        %2292 = vmatprep.subr.bf16.mxu0 0
        %2293 = vmatpush2.bf16.msra.mxu0 0
        %2294 = vmatprep.subr.bf16.mxu0 0
        %2295 = vmatpush2.bf16.msra.mxu0 0
        %2296 = vmatprep.subr.bf16.mxu0 0
        %2297 = vmatpush2.bf16.msra.mxu0 0
        %2298 = vmatprep.subr.bf16.mxu0 0
        %2299 = vmatpush2.bf16.msra.mxu0 0
        %2300 = vmatprep.subr.bf16.mxu0 0
        %2301 = vmatpush2.bf16.msra.mxu0 0
        %2302 = vmatprep.subr.bf16.mxu0 0
        %2303 = vmatpush2.bf16.msra.mxu0 0
        %2304 = vmatprep.subr.bf16.mxu0 0
        %2305 = vmatpush2.bf16.msra.mxu0 0
        %2306 = vmatprep.subr.bf16.mxu0 0
        %2307 = vmatpush2.bf16.msra.mxu0 0
        %2308 = vmatprep.mubr.bf16.mxu0 0
        %2309 = vmatmul.mubr.bf16.gmra.mxu0 %v2271
        %v2310 = vpop.f32.mrf.mxu0
        %v2311 = vadd.f32 0.0, %v2310
        %v2312 = vpop.f32.mrf.mxu0
        %v2313 = vpop.f32.mrf.mxu0
        %v2314 = vpop.f32.mrf.mxu0
        %2315 = vdwg.mxu0
        %v2316 = vadd.f32 %v2155, %v2311
        %v2317 = vadd.f32 %v1573, %v2316
        %s2318 = scalar_lea.vmem %s6, 1
        %v2319 = vld [vmem:[%s2318] sm:$0x1]
        %v2321 = vlaneseq
        %v2322 = vshrl.u32 %v2321, 7
        %v2323 = vsub.s32 0, %v2322
        %v2324 = vrot.slane %v2319, %v2323
        %v2326 = vadd.f32 %v2317, %v2324
        %s2327 = scalar_lea.vmem %s7, 1
        %v2328 = vld [vmem:[%s2327] sm:$0x1]
        %s2329 = scalar_lea.vmem %s8, 1
        %v2330 = vld [vmem:[%s2329] sm:$0x1]
        %v2331 = vsel %vm606, %v2326, 0.0
        %2332 = vadd.xlane.f32.xlu0 %v2331
        %v2333 = vpop.xlane.xlu0 %2332
        %v2334 = vmul.f32 %v2333, %v610
        %v2335 = vsub.f32 %v2326, %v2334
        %v2336 = vmul.f32 %v2335, %v2335
        %v2337 = vsel %vm606, %v2336, 0.0
        %2338 = vadd.xlane.f32.xlu0 %v2337
        %v2339 = vpop.xlane.xlu0 %2338
        %v2340 = vmul.f32 %v2339, %v610
        %v2341 = vadd.f32 %v2340, 1e-05
        %v2342 = vrsqrt.pop %v2341
        %v2343 = vmul.f32 %v2335, %v2342
        %v2345 = vlaneseq
        %v2346 = vshrl.u32 %v2345, 7
        %v2347 = vsub.s32 0, %v2346
        %v2348 = vrot.slane %v2328, %v2347
        %v2350 = vmul.f32 %v2343, %v2348
        %v2352 = vlaneseq
        %v2353 = vshrl.u32 %v2352, 7
        %v2354 = vsub.s32 0, %v2353
        %v2355 = vrot.slane %v2330, %v2354
        %v2357 = vadd.f32 %v2350, %v2355
        %v2358 = vpack.c.bf16 %v2357, %v2357
        %s2359 = scalar_lea.vmem %s9, 16
        %v2360 = vld [vmem:[%s2359] sm:$0xf]
        %v2361 = vld [vmem:[%s2359 + $0x4] sm:$0xf]
        %v2362 = vld [vmem:[%s2359 + $0x8] sm:$0xf]
        %v2363 = vld [vmem:[%s2359 + $0xc] sm:$0xf]
        %s2364 = scalar_lea.vmem %s10, 1
        %v2365 = vld [vmem:[%s2364] sm:$0x1]
        %v2367 = vlaneseq
        %v2368 = vshrl.u32 %v2367, 7
        %v2369 = vsub.s32 0, %v2368
        %v2370 = vrot.slane %v2365, %v2369
        %v2376 = vunpack.c.l.b16 %v2360
        %v2377 = vunpack.c.l.b16 %v2361
        %v2378 = vunpack.c.l.b16 %v2362
        %v2379 = vunpack.c.l.b16 %v2363
        %v2380 = vpack.c.b16 %v2377, %v2376
        %v2381 = vpack.c.b16 %v2379, %v2378
        %v2385 = vsel %vm606, %v2358, 0
        %2387 = vmatprep.subr.bf16.mxu0 0
        %2388 = vmatpush1.bf16.msra.mxu0 0
        %2389 = vmatprep.subr.bf16.mxu0 0
        %2390 = vmatpush1.bf16.msra.mxu0 0
        %2391 = vmatprep.subr.bf16.mxu0 0
        %2392 = vmatpush1.bf16.msra.mxu0 0
        %2393 = vmatprep.subr.bf16.mxu0 0
        %2394 = vmatpush1.bf16.msra.mxu0 0
        %2395 = vmatprep.subr.bf16.mxu0 0
        %2396 = vmatpush1.bf16.msra.mxu0 0
        %2397 = vmatprep.subr.bf16.mxu0 0
        %2398 = vmatpush1.bf16.msra.mxu0 0
        %2399 = vmatprep.subr.bf16.mxu0 0
        %2400 = vmatpush1.bf16.msra.mxu0 %v2381
        %2401 = vmatprep.subr.bf16.mxu0 0
        %2402 = vmatpush1.bf16.msra.mxu0 %v2380
        %2403 = vmatprep.subr.bf16.mxu0 0
        %2404 = vmatpush2.bf16.msra.mxu0 0
        %2405 = vmatprep.subr.bf16.mxu0 0
        %2406 = vmatpush2.bf16.msra.mxu0 0
        %2407 = vmatprep.subr.bf16.mxu0 0
        %2408 = vmatpush2.bf16.msra.mxu0 0
        %2409 = vmatprep.subr.bf16.mxu0 0
        %2410 = vmatpush2.bf16.msra.mxu0 0
        %2411 = vmatprep.subr.bf16.mxu0 0
        %2412 = vmatpush2.bf16.msra.mxu0 0
        %2413 = vmatprep.subr.bf16.mxu0 0
        %2414 = vmatpush2.bf16.msra.mxu0 0
        %2415 = vmatprep.subr.bf16.mxu0 0
        %2416 = vmatpush2.bf16.msra.mxu0 0
        %2417 = vmatprep.subr.bf16.mxu0 0
        %2418 = vmatpush2.bf16.msra.mxu0 0
        %2419 = vmatprep.mubr.bf16.mxu0 0
        %2420 = vmatmul.mubr.bf16.gmra.mxu0 %v2385
        %v2421 = vpop.f32.mrf.mxu0
        %v2422 = vadd.f32 %v2370, %v2421
        %v2423 = vpop.f32.mrf.mxu0
        %v2424 = vpop.f32.mrf.mxu0
        %v2425 = vpop.f32.mrf.mxu0
        %2426 = vdwg.mxu0
        %v2427 = vmul.f32 %v2422, %v2422
        %v2428 = vmul.f32 %v2422, %v2427
        %v2429 = vmul.f32 %v2428, 0.044715
        %v2430 = vadd.f32 %v2422, %v2429
        %v2431 = vmul.f32 %v2430, 0.7978846
        %v2432 = vtanh.pop %v2431
        %v2433 = vadd.f32 %v2432, 1.0
        %v2434 = vmul.f32 %v2433, 0.5
        %v2435 = vmul.f32 %v2422, %v2434
        %v2436 = vpack.c.bf16 %v2435, %v2435
        %s2437 = scalar_lea.vmem %s11, 64
        %v2438 = vld [vmem:[%s2437] sm:$0xf]
        %v2439 = vld [vmem:[%s2437 + $0x4] sm:$0xf]
        %v2440 = vld [vmem:[%s2437 + $0x8] sm:$0xf]
        %v2441 = vld [vmem:[%s2437 + $0xc] sm:$0xf]
        %v2442 = vld [vmem:[%s2437 + $0x10] sm:$0xf]
        %v2443 = vld [vmem:[%s2437 + $0x14] sm:$0xf]
        %v2444 = vld [vmem:[%s2437 + $0x18] sm:$0xf]
        %v2445 = vld [vmem:[%s2437 + $0x1c] sm:$0xf]
        %v2446 = vld [vmem:[%s2437 + $0x20] sm:$0xf]
        %v2447 = vld [vmem:[%s2437 + $0x24] sm:$0xf]
        %v2448 = vld [vmem:[%s2437 + $0x28] sm:$0xf]
        %v2449 = vld [vmem:[%s2437 + $0x2c] sm:$0xf]
        %v2450 = vld [vmem:[%s2437 + $0x30] sm:$0xf]
        %v2451 = vld [vmem:[%s2437 + $0x34] sm:$0xf]
        %v2452 = vld [vmem:[%s2437 + $0x38] sm:$0xf]
        %v2453 = vld [vmem:[%s2437 + $0x3c] sm:$0xf]
        %v2470 = vunpack.c.l.b16 %v2438
        %v2471 = vunpack.c.l.b16 %v2439
        %v2472 = vunpack.c.l.b16 %v2440
        %v2473 = vunpack.c.l.b16 %v2441
        %v2474 = vunpack.c.l.b16 %v2442
        %v2475 = vunpack.c.l.b16 %v2443
        %v2476 = vunpack.c.l.b16 %v2444
        %v2477 = vunpack.c.l.b16 %v2445
        %v2478 = vunpack.c.l.b16 %v2446
        %v2479 = vunpack.c.l.b16 %v2447
        %v2480 = vunpack.c.l.b16 %v2448
        %v2481 = vunpack.c.l.b16 %v2449
        %v2482 = vunpack.c.l.b16 %v2450
        %v2483 = vunpack.c.l.b16 %v2451
        %v2484 = vunpack.c.l.b16 %v2452
        %v2485 = vunpack.c.l.b16 %v2453
        %v2486 = vpack.c.b16 %v2471, %v2470
        %v2487 = vpack.c.b16 %v2473, %v2472
        %v2488 = vpack.c.b16 %v2475, %v2474
        %v2489 = vpack.c.b16 %v2477, %v2476
        %v2490 = vpack.c.b16 %v2479, %v2478
        %v2491 = vpack.c.b16 %v2481, %v2480
        %v2492 = vpack.c.b16 %v2483, %v2482
        %v2493 = vpack.c.b16 %v2485, %v2484
        %2502 = vmatprep.subr.bf16.mxu0 0
        %2503 = vmatpush1.bf16.msra.mxu0 %v2493
        %2504 = vmatprep.subr.bf16.mxu0 0
        %2505 = vmatpush1.bf16.msra.mxu0 %v2492
        %2506 = vmatprep.subr.bf16.mxu0 0
        %2507 = vmatpush1.bf16.msra.mxu0 %v2491
        %2508 = vmatprep.subr.bf16.mxu0 0
        %2509 = vmatpush1.bf16.msra.mxu0 %v2490
        %2510 = vmatprep.subr.bf16.mxu0 0
        %2511 = vmatpush1.bf16.msra.mxu0 %v2489
        %2512 = vmatprep.subr.bf16.mxu0 0
        %2513 = vmatpush1.bf16.msra.mxu0 %v2488
        %2514 = vmatprep.subr.bf16.mxu0 0
        %2515 = vmatpush1.bf16.msra.mxu0 %v2487
        %2516 = vmatprep.subr.bf16.mxu0 0
        %2517 = vmatpush1.bf16.msra.mxu0 %v2486
        %2518 = vmatprep.subr.bf16.mxu0 0
        %2519 = vmatpush2.bf16.msra.mxu0 0
        %2520 = vmatprep.subr.bf16.mxu0 0
        %2521 = vmatpush2.bf16.msra.mxu0 0
        %2522 = vmatprep.subr.bf16.mxu0 0
        %2523 = vmatpush2.bf16.msra.mxu0 0
        %2524 = vmatprep.subr.bf16.mxu0 0
        %2525 = vmatpush2.bf16.msra.mxu0 0
        %2526 = vmatprep.subr.bf16.mxu0 0
        %2527 = vmatpush2.bf16.msra.mxu0 0
        %2528 = vmatprep.subr.bf16.mxu0 0
        %2529 = vmatpush2.bf16.msra.mxu0 0
        %2530 = vmatprep.subr.bf16.mxu0 0
        %2531 = vmatpush2.bf16.msra.mxu0 0
        %2532 = vmatprep.subr.bf16.mxu0 0
        %2533 = vmatpush2.bf16.msra.mxu0 0
        %2534 = vmatprep.mubr.bf16.mxu0 0
        %2535 = vmatmul.mubr.bf16.gmra.mxu0 %v2436
        %v2536 = vpop.f32.mrf.mxu0
        %v2537 = vadd.f32 0.0, %v2536
        %v2538 = vpop.f32.mrf.mxu0
        %v2539 = vpop.f32.mrf.mxu0
        %v2540 = vpop.f32.mrf.mxu0
        %2541 = vdwg.mxu0
        %v2542 = vadd.f32 %v2326, %v2537
        %s2543 = scalar_lea.vmem %s12, 1
        %v2544 = vld [vmem:[%s2543] sm:$0x1]
        %v2546 = vlaneseq
        %v2547 = vshrl.u32 %v2546, 7
        %v2548 = vsub.s32 0, %v2547
        %v2549 = vrot.slane %v2544, %v2548
        %v2551 = vadd.f32 %v2542, %v2549
        %v2552 = vld [vmem:[%s13] sm:$0x1]
        %v2553 = vld [vmem:[%s14] sm:$0x1]
        %vm2554 = vcmask 261127
        %v2555 = vsel %vm2554, %v2551, 0.0
        %2556 = vadd.xlane.f32.xlu0 %v2555
        %v2557 = vpop.xlane.xlu0 %2556
        %v2558 = vmul.f32 %v2557, %v610
        %v2559 = vsub.f32 %v2551, %v2558
        %v2560 = vmul.f32 %v2559, %v2559
        %v2561 = vsel %vm2554, %v2560, 0.0
        %2562 = vadd.xlane.f32.xlu0 %v2561
        %v2563 = vpop.xlane.xlu0 %2562
        %v2564 = vmul.f32 %v2563, %v610
        %v2565 = vadd.f32 %v2564, 1e-05
        %v2566 = vrsqrt.pop %v2565
        %v2567 = vmul.f32 %v2559, %v2566
        %v2569 = vlaneseq
        %v2570 = vshrl.u32 %v2569, 7
        %v2571 = vsub.s32 0, %v2570
        %v2572 = vrot.slane %v2552, %v2571
        %v2574 = vmul.f32 %v2567, %v2572
        %v2576 = vlaneseq
        %v2577 = vshrl.u32 %v2576, 7
        %v2578 = vsub.s32 0, %v2577
        %v2579 = vrot.slane %v2553, %v2578
        %v2581 = vadd.f32 %v2574, %v2579
        %v2582 = vpack.c.bf16 %v2581, %v2581
        %v2583 = vld [vmem:[%s15] sm:$0xf]
        %v2584 = vld [vmem:[%s15 + $0x4] sm:$0xf]
        %v2585 = vld [vmem:[%s15 + $0x8] sm:$0xf]
        %v2586 = vld [vmem:[%s15 + $0xc] sm:$0xf]
        %v2587 = vld [vmem:[%s16] sm:$0x1]
        %v2589 = vshrl.u32 %v2582, 16
        %v2591 = vrot.slane %v2589, 3
        %v2596 = vunpack.c.l.b16 %v2583
        %v2597 = vunpack.c.l.b16 %v2584
        %v2598 = vunpack.c.l.b16 %v2585
        %v2599 = vunpack.c.l.b16 %v2586
        %v2600 = vpack.c.b16 %v2597, %v2596
        %v2601 = vpack.c.b16 %v2599, %v2598
        %v2605 = vsel %vm606, %v2591, 0
        %2607 = vmatprep.subr.bf16.mxu0 0
        %2608 = vmatpush1.bf16.msra.mxu0 0
        %2609 = vmatprep.subr.bf16.mxu0 0
        %2610 = vmatpush1.bf16.msra.mxu0 0
        %2611 = vmatprep.subr.bf16.mxu0 0
        %2612 = vmatpush1.bf16.msra.mxu0 0
        %2613 = vmatprep.subr.bf16.mxu0 0
        %2614 = vmatpush1.bf16.msra.mxu0 0
        %2615 = vmatprep.subr.bf16.mxu0 0
        %2616 = vmatpush1.bf16.msra.mxu0 0
        %2617 = vmatprep.subr.bf16.mxu0 0
        %2618 = vmatpush1.bf16.msra.mxu0 0
        %2619 = vmatprep.subr.bf16.mxu0 0
        %2620 = vmatpush1.bf16.msra.mxu0 %v2601
        %2621 = vmatprep.subr.bf16.mxu0 0
        %2622 = vmatpush1.bf16.msra.mxu0 %v2600
        %2623 = vmatprep.subr.bf16.mxu0 0
        %2624 = vmatpush2.bf16.msra.mxu0 0
        %2625 = vmatprep.subr.bf16.mxu0 0
        %2626 = vmatpush2.bf16.msra.mxu0 0
        %2627 = vmatprep.subr.bf16.mxu0 0
        %2628 = vmatpush2.bf16.msra.mxu0 0
        %2629 = vmatprep.subr.bf16.mxu0 0
        %2630 = vmatpush2.bf16.msra.mxu0 0
        %2631 = vmatprep.subr.bf16.mxu0 0
        %2632 = vmatpush2.bf16.msra.mxu0 0
        %2633 = vmatprep.subr.bf16.mxu0 0
        %2634 = vmatpush2.bf16.msra.mxu0 0
        %2635 = vmatprep.subr.bf16.mxu0 0
        %2636 = vmatpush2.bf16.msra.mxu0 0
        %2637 = vmatprep.subr.bf16.mxu0 0
        %2638 = vmatpush2.bf16.msra.mxu0 0
        %2639 = vmatprep.mubr.bf16.mxu0 0
        %2640 = vmatmul.mubr.bf16.gmra.mxu0 %v2605
        %v2641 = vpop.f32.mrf.mxu0
        %v2642 = vadd.f32 %v2587, %v2641
        %v2643 = vpop.f32.mrf.mxu0
        %v2644 = vpop.f32.mrf.mxu0
        %v2645 = vpop.f32.mrf.mxu0
        %2646 = vdwg.mxu0
        %v2647 = vmax.f32 %v2642, 0.0
        %v2648 = vpack.c.bf16 %v2647, %v2647
        %v2649 = vld [vmem:[%s17] sm:$0xf]
        %v2650 = vld [vmem:[%s17 + $0x4] sm:$0xf]
        %v2651 = vld [vmem:[%s17 + $0x8] sm:$0xf]
        %v2652 = vld [vmem:[%s17 + $0xc] sm:$0xf]
        %v2653 = vld [vmem:[%s17 + $0x10] sm:$0xf]
        %v2654 = vld [vmem:[%s17 + $0x14] sm:$0xf]
        %v2655 = vld [vmem:[%s17 + $0x18] sm:$0xf]
        %v2656 = vld [vmem:[%s17 + $0x1c] sm:$0xf]
        %v2657 = vld [vmem:[%s18] sm:$0x1]
        %v2666 = vunpack.c.l.b16 %v2649
        %v2667 = vunpack.c.l.b16 %v2650
        %v2668 = vunpack.c.l.b16 %v2651
        %v2669 = vunpack.c.l.b16 %v2652
        %v2670 = vunpack.c.l.b16 %v2653
        %v2671 = vunpack.c.l.b16 %v2654
        %v2672 = vunpack.c.l.b16 %v2655
        %v2673 = vunpack.c.l.b16 %v2656
        %v2674 = vpack.c.b16 %v2667, %v2666
        %v2675 = vpack.c.b16 %v2669, %v2668
        %v2676 = vpack.c.b16 %v2671, %v2670
        %v2677 = vpack.c.b16 %v2673, %v2672
        %vm2682 = vcmask 523264
        %v2684 = vsel %vm2682, %v2648, 0
        %2686 = vmatprep.subr.bf16.mxu0 0
        %2687 = vmatpush1.bf16.msra.mxu0 0
        %2688 = vmatprep.subr.bf16.mxu0 0
        %2689 = vmatpush1.bf16.msra.mxu0 0
        %2690 = vmatprep.subr.bf16.mxu0 0
        %2691 = vmatpush1.bf16.msra.mxu0 0
        %2692 = vmatprep.subr.bf16.mxu0 0
        %2693 = vmatpush1.bf16.msra.mxu0 0
        %2694 = vmatprep.subr.bf16.mxu0 0
        %2695 = vmatpush1.bf16.msra.mxu0 %v2677
        %2696 = vmatprep.subr.bf16.mxu0 0
        %2697 = vmatpush1.bf16.msra.mxu0 %v2676
        %2698 = vmatprep.subr.bf16.mxu0 0
        %2699 = vmatpush1.bf16.msra.mxu0 %v2675
        %2700 = vmatprep.subr.bf16.mxu0 0
        %2701 = vmatpush1.bf16.msra.mxu0 %v2674
        %2702 = vmatprep.subr.bf16.mxu0 0
        %2703 = vmatpush2.bf16.msra.mxu0 0
        %2704 = vmatprep.subr.bf16.mxu0 0
        %2705 = vmatpush2.bf16.msra.mxu0 0
        %2706 = vmatprep.subr.bf16.mxu0 0
        %2707 = vmatpush2.bf16.msra.mxu0 0
        %2708 = vmatprep.subr.bf16.mxu0 0
        %2709 = vmatpush2.bf16.msra.mxu0 0
        %2710 = vmatprep.subr.bf16.mxu0 0
        %2711 = vmatpush2.bf16.msra.mxu0 0
        %2712 = vmatprep.subr.bf16.mxu0 0
        %2713 = vmatpush2.bf16.msra.mxu0 0
        %2714 = vmatprep.subr.bf16.mxu0 0
        %2715 = vmatpush2.bf16.msra.mxu0 0
        %2716 = vmatprep.subr.bf16.mxu0 0
        %2717 = vmatpush2.bf16.msra.mxu0 0
        %2718 = vmatprep.mubr.bf16.mxu0 0
        %2719 = vmatmul.mubr.bf16.gmra.mxu0 %v2684
        %v2720 = vpop.f32.mrf.mxu0
        %v2721 = vadd.f32 %v2657, %v2720
        %v2722 = vpop.f32.mrf.mxu0
        %v2723 = vpop.f32.mrf.mxu0
        %v2724 = vpop.f32.mrf.mxu0
        %2725 = vdwg.mxu0
        %vm2726 = vcmask 1040384
        %v2727 = vsel %vm2726, %v2721, -inf
        %2728 = vmax.xlane.f32.xlu0 %v2727
        %v2729 = vpop.xlane.xlu0 %2728
        %v2730 = vsub.f32 %v2721, %v2729
        %v2731 = vmul.f32 %v2730, 1.442695
        %v2732 = vpow.pop %v2731
        %v2733 = vsel %vm2726, %v2732, 0.0
        %2734 = vadd.xlane.f32.xlu0 %v2733
        %v2735 = vpop.xlane.xlu0 %2734
        %v2736 = vlog2.pop %v2735
        %v2737 = vmul.f32 %v2736, 0.6931472
        %v2738 = vsub.f32 %v2730, %v2737
        %2739 = vst [vmem:[%s592] sm:$0x1] %v2738
        %s2740 = sand.u32 %s445, 1
        %s2741 = scalar_lea.sflag [#allocation3], %s2740
        %s2742 = sand.u32 %s445, 1
        %s2743 = scalar_lea.vmem [#allocation2], %s2742
        // Predicated region
        $region97: #{feed_forward_classifier.1} parent=95 // pred_check
          %p2744 = pneg %p455
        $region98: #{feed_forward_classifier.1} parent=95 // pred_check_branch
          %2746 = sbr.rel (%p2744) target = $region100
        $region99: #{feed_forward_classifier.1} parent=95 // pred_region
          %s2748 = ssub.s32 16, 16
          %2749 = vsyncadd %s2741, %s2748
          %s2750 = smul.addr %s33, 16
          %s2751 = scalar_lea.hbm %s19, %s2750
          %s2753 = sshll.u32 %s2743, 4
          %s2754 = int_to_ptr.vmem [resolvable:$true] %s2753
          %2756 = dma.vmem_to_hbm [thread:$0]  %s2754, 16, %s2751, %s2741
        $region100: #{feed_forward_classifier.1} parent=95 // pred_fallthru
          _
      $region96: #{feed_forward_classifier.1} parent=5 // pred_fallthru
        _
      %p2757 = scmp.le.s32.totalorder 2, %s28
      // Predicated region
      $region101: #{feed_forward_classifier.1} parent=5 // pred_check
        %p2758 = pneg %p2757
      $region102: #{feed_forward_classifier.1} parent=5 // pred_check_branch
        %2760 = sbr.rel (%p2758) target = $region104
      $region103: #{feed_forward_classifier.1} parent=5 // pred_region
        %s2761 = ssub.s32 %s28, 2
        // Predicated region
        $region105: #{feed_forward_classifier.1} parent=103 // pred_check
          %p2762 = pneg %p461
        $region106: #{feed_forward_classifier.1} parent=103 // pred_check_branch
          %2764 = sbr.rel (%p2762) target = $region108
        $region107: #{feed_forward_classifier.1} parent=103 // pred_region
          %s2765 = sand.u32 %s446, 1
          %s2766 = scalar_lea.sflag [#allocation3], %s2765
          %s2767 = sand.u32 %s446, 1
          %s2768 = scalar_lea.vmem [#allocation2], %s2767
          %2769 = dma.done %s2766, 16
        $region108: #{feed_forward_classifier.1} parent=103 // pred_fallthru
          _
      $region104: #{feed_forward_classifier.1} parent=5 // pred_fallthru
        _
    $region6: #{feed_forward_classifier.1} parent=1 // loop_footer
      %s32 = sadd.s32 1, %s28
    $region7: #{feed_forward_classifier.1} parent=1 // loop_footer_branch
      %27 = sbr.rel target = $region3
    $region8: #{feed_forward_classifier.1} parent=1 // loop_exit
      _
    %2770 = vsyncpa [#allocation3], 1
    %s2771 = scalar_lea.sflag [#allocation3], 1
    %2772 = vsyncpa %s2771, 1

</llo_original>
